<compile_context>
chip_gen: v6e
topology: v6e:2x2x1
jax: 0.10.0
libtpu: 0.0.40
codegen_flags: <defaults>
</compile_context>

<pallas_src>
import functools

import numpy as np
import jax
import jax.numpy as jnp
from jax import lax
from jax.experimental import pallas as pl
from jax.experimental.pallas import tpu as pltpu

LAMBDA = 0.2
COMPUTE_DTYPE = jnp.bfloat16   # MXU operand dtype
ACC_DTYPE = jnp.float32        # accumulation / epilogue dtype
CIN_PAD = 4                    # RGB padded 3 -> 4 so layer-1 W*Cin = 128 lanes

# Scaled-down VGG16 stack up to relu3_3: (Cin, Cout) of the 7 convs.
_CONV_CFG = [(3, 8), (8, 8), (8, 16), (16, 16), (16, 32), (32, 32), (32, 32)]
# "plain"    : conv + bias + relu
# "tap_pool" : conv + bias + relu + MSE tap + 2x2 maxpool
# "tap_only" : conv + bias + relu + MSE tap             (last layer)
_MODES = ["plain", "tap_pool", "plain", "tap_pool", "plain", "plain", "tap_only"]


def _layer_meta(S):
    metas, H = [], S
    for (cin, cout), mode in zip(_CONV_CFG, _MODES):
        cin_eff = CIN_PAD if cin == 3 else cin
        metas.append(dict(mode=mode, H=H, W=H, Cin=cin_eff, Cout=cout))
        if mode == "tap_pool":
            H //= 2
    return metas


# ---------------------------------------------------------------------------
# The fused kernel.  One program = one (pred, gt) pair.
#   h layout: (2H, W*C) f32, channel fastest in lanes; pred rows [0,H),
#   gt rows [H, 2H).  Weights: (3*W*Cin, W*Cout) bf16, kh-stacked along K.
# ---------------------------------------------------------------------------
def _vgg_fused_kernel(metas, x_ref, *refs):
    nl = len(metas)
    w_refs = refs[:nl]
    b_ref = refs[nl]          # (nl, N) f32 biases, pre-tiled over W
    ssq_ref = refs[nl + 1]    # (1, 3, N) f32 per-tap lane-partial sums

    h = x_ref[...]            # (2*H0, W0*CIN_PAD) f32
    taps = []
    for l, m in enumerate(metas):
        H, W, Cout = m["H"], m["W"], m["Cout"]
        M = 2 * H
        bias = b_ref[l:l + 1, :]                                   # (1, N)

        # ---- 3x3 "same" conv as one banded row-matmul (K = 3*W*Cin) ----
        row = lax.broadcasted_iota(jnp.int32, h.shape, 0) % H      # in-image row
        h_dn = jnp.where(row == 0, 0.0, pltpu.roll(h, shift=1, axis=0))       # x[r-1]
        h_up = jnp.where(row == H - 1, 0.0, pltpu.roll(h, shift=M - 1, axis=0))  # x[r+1]
        xcat = jnp.concatenate([h_dn, h, h_up], axis=1).astype(COMPUTE_DTYPE)
        acc = jnp.dot(xcat, w_refs[l][...], preferred_element_type=ACC_DTYPE)
        feat = jnp.maximum(acc + bias, 0.0)                        # (2H, N) f32

        # ---- fused MSE tap: pred/gt live in the same program ------------
        if m["mode"] != "plain":
            d = feat[:H, :] - feat[H:, :]
            # lane-partial sums (1, N); final tiny reduction done host-side
            taps.append(jnp.sum(d * d, axis=0, keepdims=True))

        # ---- fused 2x2 / stride-2 maxpool --------------------------------
        if m["mode"] == "tap_pool":
            Xh = (W // 2) * Cout
            # even/odd output columns were split into the weight halves:
            # w-direction of the pool is one elementwise max.
            mw = jnp.maximum(feat[:, :Xh], feat[:, Xh:])           # (2H, Xh)
            # h-direction: row r -> max(row r, row r+1) via a roll, then pick
            # even rows with a tiny iota-built selection matmul (vectorized,
            # no per-row masked stores, no sublane-splitting reshapes).
            mh = jnp.maximum(mw, pltpu.roll(mw, shift=M - 1, axis=0))
            ri = lax.broadcasted_iota(jnp.int32, (H, M), 0)
            ci = lax.broadcasted_iota(jnp.int32, (H, M), 1)
            sel = (ci == 2 * ri).astype(ACC_DTYPE)                 # (H, 2H)
            h = jnp.dot(sel, mh, preferred_element_type=ACC_DTYPE)  # (H, Xh)
        elif m["mode"] == "plain":
            h = feat

    ssq_ref[0] = jnp.concatenate(taps, axis=0)                     # (3, N)


def _build_fused_call(metas, B, N):
    S = metas[0]["H"]
    in_specs = [pl.BlockSpec((2 * S, CIN_PAD * S), lambda i: (i, 0))]
    for m in metas:                                     # grid-invariant weights
        K = 3 * m["W"] * m["Cin"]
        in_specs.append(pl.BlockSpec((K, N), lambda i: (0, 0)))
    in_specs.append(pl.BlockSpec((len(metas), N), lambda i: (0, 0)))   # biases

    flops = 2 * B * sum((2 * m["H"]) * (3 * m["W"] * m["Cin"]) * N for m in metas)
    bytes_accessed = (2 * B * S * CIN_PAD * S * 4
                      + sum(3 * m["W"] * m["Cin"] * N * 2 for m in metas)
                      + len(metas) * N * 4 + B * 3 * N * 4)

    return pl.pallas_call(
        functools.partial(_vgg_fused_kernel, metas),
        grid=(B,),
        in_specs=in_specs,
        out_specs=pl.BlockSpec((1, 3, N), lambda i: (i, 0, 0)),
        out_shape=jax.ShapeDtypeStruct((B, 3, N), ACC_DTYPE),
        compiler_params=pltpu.CompilerParams(dimension_semantics=("parallel",)),
        cost_estimate=pl.CostEstimate(flops=int(flops), transcendentals=0,
                                      bytes_accessed=int(bytes_accessed)),
    )


# ---------------------------------------------------------------------------
# Host-side parameter construction + banded packing (numpy, done once).
# ---------------------------------------------------------------------------
def init_vgg_params(key):
    params = []
    for cin, cout in _CONV_CFG:
        key, kw_, kb_ = jax.random.split(key, 3)
        w = jax.random.normal(kw_, (3, 3, cin, cout), jnp.float32)
        w = w * (2.0 / (9 * cin)) ** 0.5                 # deterministic He init
        b = jax.random.normal(kb_, (cout,), jnp.float32) * 0.01
        params.append((w, b))
    return params


def _pack_plain(w_np, W, cin, cout):
    # T[kh, wi*cin+ci, wo*cout+co] = w[kh, kw, ci, co], wi = wo + kw - 1
    # (zero-padding along w baked into the band); kh stacked along K.
    T = np.zeros((3, W * cin, W * cout), np.float32)
    for kh in range(3):
        for wo in range(W):
            for kw in range(3):
                wi = wo + kw - 1
                if 0 <= wi < W:
                    T[kh, wi * cin:(wi + 1) * cin,
                      wo * cout:(wo + 1) * cout] = w_np[kh, kw]
    return T.reshape(3 * W * cin, W * cout)


def _pack_pool(w_np, W, cin, cout):
    # Same band, output columns split by w parity (even | odd) so the 2x2
    # maxpool's w-reduction becomes a single elementwise max in the epilogue.
    Wh = W // 2
    Te = np.zeros((3, W * cin, Wh * cout), np.float32)
    To = np.zeros((3, W * cin, Wh * cout), np.float32)
    for kh in range(3):
        for j in range(Wh):
            for kw in range(3):
                wi = 2 * j + kw - 1                       # even output column 2j
                if 0 <= wi < W:
                    Te[kh, wi * cin:(wi + 1) * cin,
                       j * cout:(j + 1) * cout] = w_np[kh, kw]
                wi = 2 * j + kw                           # odd output column 2j+1
                if 0 <= wi < W:
                    To[kh, wi * cin:(wi + 1) * cin,
                       j * cout:(j + 1) * cout] = w_np[kh, kw]
    Teo = np.concatenate([Te, To], axis=2)                # (3, W*cin, W*cout)
    return Teo.reshape(3 * W * cin, W * cout)


def pack_vgg_params(params, S):
    assert S % 32 == 0, "packing assumes the spatial size is a multiple of 32"
    metas = _layer_meta(S)
    N = metas[0]["W"] * metas[0]["Cout"]
    Ws, bs = [], []
    for m, (w, b) in zip(metas, params):
        w_np = np.asarray(w, np.float32)
        b_np = np.asarray(b, np.float32)
        if w_np.shape[2] < m["Cin"]:                       # RGB -> 4 input chans
            w_np = np.pad(w_np, ((0, 0), (0, 0),
                                 (0, m["Cin"] - w_np.shape[2]), (0, 0)))
        pack = _pack_pool if m["mode"] == "tap_pool" else _pack_plain
        T = pack(w_np, m["W"], m["Cin"], m["Cout"])
        assert T.shape == (3 * m["W"] * m["Cin"], N)
        Ws.append(jnp.asarray(T, COMPUTE_DTYPE))
        bs.append(np.tile(b_np, m["W"]))                   # length N
    return {"w": tuple(Ws), "b": jnp.asarray(np.stack(bs, axis=0), ACC_DTYPE)}


# ---------------------------------------------------------------------------
# Loss wrapper: one fused pallas_call + a handful of scalar JAX ops.
# ---------------------------------------------------------------------------
def vgg_loss(pred_nchw, gt_nchw, packed, lam=LAMBDA):
    B, C, S, S2 = pred_nchw.shape
    assert S == S2 and C == _CONV_CFG[0][0] and S % 32 == 0
    metas = _layer_meta(S)
    N = metas[0]["W"] * metas[0]["Cout"]

    def to_rows(t):  # NCHW -> lane-dense (B, S, S*4) rows, channel fastest
        t = jnp.transpose(t, (0, 2, 3, 1))
        t = jnp.pad(t, ((0, 0), (0, 0), (0, 0), (0, CIN_PAD - C)))
        return t.reshape(B, S, S * CIN_PAD)

    # Interleave pred/gt so each grid program's (2S, 4S) block is one pair.
    x = jnp.stack([to_rows(pred_nchw), to_rows(gt_nchw)], axis=1)
    x = x.reshape(2 * B * S, S * CIN_PAD).astype(jnp.float32)

    ssq = _build_fused_call(metas, B, N)(x, *packed["w"], packed["b"])

    mses, t = [], 0
    for m in metas:
        if m["mode"] == "plain":
            continue
        denom = B * m["Cout"] * m["H"] * m["W"]    # MSELoss mean over the tap
        mses.append(jnp.sum(ssq[:, t, :]) / denom)
        t += 1
    return (lam * (sum(mses) / len(mses))).astype(jnp.float32)


# Pure-JAX (XLA) reference of the same scaled-down VGG loss, f32 throughout.
def vgg_loss_reference(pred, gt, params, lam=LAMBDA):
    def feats(x):
        h = jnp.transpose(x, (0, 2, 3, 1))                 # NHWC
        taps = []
        for (w, b), mode in zip(params, _MODES):
            h = lax.conv_general_dilated(
                h, w, (1, 1), "SAME",
                dimension_numbers=("NHWC", "HWIO", "NHWC"))
            h = jax.nn.relu(h + b)
            if mode != "plain":
                taps.append(h)
            if mode == "tap_pool":
                h = lax.reduce_window(h, -jnp.inf, lax.max,
                                      (1, 2, 2, 1), (1, 2, 2, 1), "VALID")
        return taps
    fp, fg = feats(pred), feats(gt)
    mses = [jnp.mean((a - b) ** 2) for a, b in zip(fp, fg)]
    return lam * (sum(mses) / len(mses))


# ---------------------------------------------------------------------------
if __name__ == "__main__":
    key = jax.random.PRNGKey(0)
    k_pred, k_gt, k_params = jax.random.split(key, 3)

    B, C, S = 2, 3, 32                        # batch=2, RGB, 32x32 images
    pred = jax.random.normal(k_pred, (B, C, S, S), jnp.float32)
    gt = jax.random.normal(k_gt, (B, C, S, S), jnp.float32)

    params = init_vgg_params(k_params)
    packed = pack_vgg_params(params, S)       # host-side banded packing, once

    loss_fn = jax.jit(vgg_loss)
    loss = loss_fn(pred, gt, packed)
    jax.block_until_ready(loss)

    got = float(loss)
    assert loss.shape == () and np.isfinite(got)

    # bf16 MXU operands (f32 accumulate/epilogue) -> expect a few-% deviation
    # from the f32 XLA reference; loose tolerance still catches packing bugs.
    ref = float(jax.block_until_ready(vgg_loss_reference(pred, gt, params)))
    assert abs(got - ref) <= 0.15 * abs(ref) + 1e-6, (got, ref)

    print("KERNEL_OK")
</pallas_src>

<mosaic_0001>
module attributes {stable_mosaic.version = 11 : i64} {
  func.func @_vgg_fused_kernel(%arg0: i32, %arg1: memref<64x128xf32, #tpu.memory_space<vmem>>, %arg2: memref<384x256xbf16, #tpu.memory_space<vmem>>, %arg3: memref<768x256xbf16, #tpu.memory_space<vmem>>, %arg4: memref<384x256xbf16, #tpu.memory_space<vmem>>, %arg5: memref<768x256xbf16, #tpu.memory_space<vmem>>, %arg6: memref<384x256xbf16, #tpu.memory_space<vmem>>, %arg7: memref<768x256xbf16, #tpu.memory_space<vmem>>, %arg8: memref<768x256xbf16, #tpu.memory_space<vmem>>, %arg9: memref<7x256xf32, #tpu.memory_space<vmem>>, %arg10: memref<1x3x256xf32, #tpu.memory_space<vmem>>) attributes {dimension_semantics = [#tpu.dimension_semantics<parallel>], iteration_bounds = array<i64: 2>, scalar_prefetch = 0 : i64, scratch_operands = 0 : i64, tpu.core_type = #tpu.core_type<tc>, window_params = [{transform_indices = @transform_0, window_bounds = array<i64: 64, 128>}, {pipeline_mode = #tpu.pipeline_mode<synchronous>, transform_indices = @transform_1, window_bounds = array<i64: 384, 256>}, {pipeline_mode = #tpu.pipeline_mode<synchronous>, transform_indices = @transform_2, window_bounds = array<i64: 768, 256>}, {pipeline_mode = #tpu.pipeline_mode<synchronous>, transform_indices = @transform_3, window_bounds = array<i64: 384, 256>}, {pipeline_mode = #tpu.pipeline_mode<synchronous>, transform_indices = @transform_4, window_bounds = array<i64: 768, 256>}, {pipeline_mode = #tpu.pipeline_mode<synchronous>, transform_indices = @transform_5, window_bounds = array<i64: 384, 256>}, {pipeline_mode = #tpu.pipeline_mode<synchronous>, transform_indices = @transform_6, window_bounds = array<i64: 768, 256>}, {pipeline_mode = #tpu.pipeline_mode<synchronous>, transform_indices = @transform_7, window_bounds = array<i64: 768, 256>}, {pipeline_mode = #tpu.pipeline_mode<synchronous>, transform_indices = @transform_8, window_bounds = array<i64: 7, 256>}, {transform_indices = @transform_9, window_bounds = array<i64: 1, 3, 256>}]} {
    %c0 = arith.constant 0 : index
    %c0_0 = arith.constant 0 : index
    %0 = vector.load %arg1[%c0, %c0_0] : memref<64x128xf32, #tpu.memory_space<vmem>>, vector<64x128xf32>
    %c0_1 = arith.constant 0 : index
    %c0_2 = arith.constant 0 : index
    %1 = vector.load %arg9[%c0_1, %c0_2] : memref<7x256xf32, #tpu.memory_space<vmem>>, vector<1x256xf32>
    %2 = tpu.iota {dimensions = array<i32: 0>} : vector<64x128xi32>
    %c32_i32 = arith.constant 32 : i32
    %c0_i32 = arith.constant 0 : i32
    %3 = arith.cmpi eq, %c32_i32, %c0_i32 : i32
    %c1_i32 = arith.constant 1 : i32
    %4 = arith.select %3, %c1_i32, %c32_i32 : i32
    %5 = vector.broadcast %4 : i32 to vector<64x128xi32>
    %6 = arith.remsi %2, %5 : vector<64x128xi32>
    %c0_i32_3 = arith.constant 0 : i32
    %7 = vector.broadcast %c0_i32_3 : i32 to vector<64x128xi32>
    %8 = arith.cmpi ne, %6, %7 : vector<64x128xi32>
    %c0_i32_4 = arith.constant 0 : i32
    %9 = vector.broadcast %c0_i32_4 : i32 to vector<64x128xi32>
    %10 = arith.cmpi slt, %6, %9 : vector<64x128xi32>
    %c0_i32_5 = arith.constant 0 : i32
    %11 = arith.cmpi slt, %4, %c0_i32_5 : i32
    %12 = vector.broadcast %11 : i1 to vector<64x128xi1>
    %13 = vector.broadcast %12 : vector<64x128xi1> to vector<64x128xi1>
    %14 = arith.xori %10, %13 : vector<64x128xi1>
    %15 = arith.andi %14, %8 : vector<64x128xi1>
    %16 = vector.broadcast %4 : i32 to vector<64x128xi32>
    %17 = arith.addi %6, %16 : vector<64x128xi32>
    %18 = arith.select %15, %17, %6 : vector<64x128xi1>, vector<64x128xi32>
    %c0_i32_6 = arith.constant 0 : i32
    %19 = vector.broadcast %c0_i32_6 : i32 to vector<64x128xi32>
    %20 = arith.cmpi eq, %18, %19 : vector<64x128xi32>
    %c1_i32_7 = arith.constant 1 : i32
    %21 = tpu.dynamic_rotate %0 by %c1_i32_7 dim 0 : vector<64x128xf32>, i32 -> vector<64x128xf32>
    %cst = arith.constant 0.000000e+00 : f32
    %22 = vector.broadcast %cst : f32 to vector<64x128xf32>
    %23 = arith.select %20, %22, %21 : vector<64x128xi1>, vector<64x128xf32>
    %c31_i32 = arith.constant 31 : i32
    %24 = vector.broadcast %c31_i32 : i32 to vector<64x128xi32>
    %25 = arith.cmpi eq, %18, %24 : vector<64x128xi32>
    %c63_i32 = arith.constant 63 : i32
    %26 = tpu.dynamic_rotate %0 by %c63_i32 dim 0 : vector<64x128xf32>, i32 -> vector<64x128xf32>
    %cst_8 = arith.constant 0.000000e+00 : f32
    %27 = vector.broadcast %cst_8 : f32 to vector<64x128xf32>
    %28 = arith.select %25, %27, %26 : vector<64x128xi1>, vector<64x128xf32>
    %29 = tpu.concatenate %23, %0, %28 in 1 : vector<64x128xf32>, vector<64x128xf32>, vector<64x128xf32> -> vector<64x384xf32>
    %30 = arith.truncf %29 : vector<64x384xf32> to vector<64x384xbf16>
    %c0_9 = arith.constant 0 : index
    %c0_10 = arith.constant 0 : index
    %31 = vector.load %arg2[%c0_9, %c0_10] : memref<384x256xbf16, #tpu.memory_space<vmem>>, vector<384x256xbf16>
    %cst_11 = arith.constant dense<0.000000e+00> : vector<64x256xf32>
    %32 = tpu.matmul %30, %31, %cst_11 {dimension_numbers = #tpu.dot_dimension_numbers<[1], [0], [0], [1], [0, 0, 1, 1], [], []>} : vector<64x384xbf16>, vector<384x256xbf16>, vector<64x256xf32> -> vector<64x256xf32>
    %33 = vector.broadcast %1 : vector<1x256xf32> to vector<64x256xf32>
    %34 = arith.addf %32, %33 : vector<64x256xf32>
    %cst_12 = arith.constant 0.000000e+00 : f32
    %35 = vector.broadcast %cst_12 : f32 to vector<64x256xf32>
    %36 = arith.maximumf %34, %35 : vector<64x256xf32>
    %c1 = arith.constant 1 : index
    %c0_13 = arith.constant 0 : index
    %37 = vector.load %arg9[%c1, %c0_13] : memref<7x256xf32, #tpu.memory_space<vmem>>, vector<1x256xf32>
    %38 = tpu.iota {dimensions = array<i32: 0>} : vector<64x256xi32>
    %c32_i32_14 = arith.constant 32 : i32
    %c0_i32_15 = arith.constant 0 : i32
    %39 = arith.cmpi eq, %c32_i32_14, %c0_i32_15 : i32
    %c1_i32_16 = arith.constant 1 : i32
    %40 = arith.select %39, %c1_i32_16, %c32_i32_14 : i32
    %41 = vector.broadcast %40 : i32 to vector<64x256xi32>
    %42 = arith.remsi %38, %41 : vector<64x256xi32>
    %c0_i32_17 = arith.constant 0 : i32
    %43 = vector.broadcast %c0_i32_17 : i32 to vector<64x256xi32>
    %44 = arith.cmpi ne, %42, %43 : vector<64x256xi32>
    %c0_i32_18 = arith.constant 0 : i32
    %45 = vector.broadcast %c0_i32_18 : i32 to vector<64x256xi32>
    %46 = arith.cmpi slt, %42, %45 : vector<64x256xi32>
    %c0_i32_19 = arith.constant 0 : i32
    %47 = arith.cmpi slt, %40, %c0_i32_19 : i32
    %48 = vector.broadcast %47 : i1 to vector<64x256xi1>
    %49 = vector.broadcast %48 : vector<64x256xi1> to vector<64x256xi1>
    %50 = arith.xori %46, %49 : vector<64x256xi1>
    %51 = arith.andi %50, %44 : vector<64x256xi1>
    %52 = vector.broadcast %40 : i32 to vector<64x256xi32>
    %53 = arith.addi %42, %52 : vector<64x256xi32>
    %54 = arith.select %51, %53, %42 : vector<64x256xi1>, vector<64x256xi32>
    %c0_i32_20 = arith.constant 0 : i32
    %55 = vector.broadcast %c0_i32_20 : i32 to vector<64x256xi32>
    %56 = arith.cmpi eq, %54, %55 : vector<64x256xi32>
    %c1_i32_21 = arith.constant 1 : i32
    %57 = tpu.dynamic_rotate %36 by %c1_i32_21 dim 0 : vector<64x256xf32>, i32 -> vector<64x256xf32>
    %cst_22 = arith.constant 0.000000e+00 : f32
    %58 = vector.broadcast %cst_22 : f32 to vector<64x256xf32>
    %59 = arith.select %56, %58, %57 : vector<64x256xi1>, vector<64x256xf32>
    %c31_i32_23 = arith.constant 31 : i32
    %60 = vector.broadcast %c31_i32_23 : i32 to vector<64x256xi32>
    %61 = arith.cmpi eq, %54, %60 : vector<64x256xi32>
    %c63_i32_24 = arith.constant 63 : i32
    %62 = tpu.dynamic_rotate %36 by %c63_i32_24 dim 0 : vector<64x256xf32>, i32 -> vector<64x256xf32>
    %cst_25 = arith.constant 0.000000e+00 : f32
    %63 = vector.broadcast %cst_25 : f32 to vector<64x256xf32>
    %64 = arith.select %61, %63, %62 : vector<64x256xi1>, vector<64x256xf32>
    %65 = tpu.concatenate %59, %36, %64 in 1 : vector<64x256xf32>, vector<64x256xf32>, vector<64x256xf32> -> vector<64x768xf32>
    %66 = arith.truncf %65 : vector<64x768xf32> to vector<64x768xbf16>
    %c0_26 = arith.constant 0 : index
    %c0_27 = arith.constant 0 : index
    %67 = vector.load %arg3[%c0_26, %c0_27] : memref<768x256xbf16, #tpu.memory_space<vmem>>, vector<768x256xbf16>
    %cst_28 = arith.constant dense<0.000000e+00> : vector<64x256xf32>
    %68 = tpu.matmul %66, %67, %cst_28 {dimension_numbers = #tpu.dot_dimension_numbers<[1], [0], [0], [1], [0, 0, 1, 1], [], []>} : vector<64x768xbf16>, vector<768x256xbf16>, vector<64x256xf32> -> vector<64x256xf32>
    %69 = vector.broadcast %37 : vector<1x256xf32> to vector<64x256xf32>
    %70 = arith.addf %68, %69 : vector<64x256xf32>
    %cst_29 = arith.constant 0.000000e+00 : f32
    %71 = vector.broadcast %cst_29 : f32 to vector<64x256xf32>
    %72 = arith.maximumf %70, %71 : vector<64x256xf32>
    %73 = vector.extract_strided_slice %72 {offsets = [0, 0], sizes = [32, 256], strides = [1, 1]} : vector<64x256xf32> to vector<32x256xf32>
    %74 = vector.extract_strided_slice %72 {offsets = [32, 0], sizes = [32, 256], strides = [1, 1]} : vector<64x256xf32> to vector<32x256xf32>
    %75 = arith.subf %73, %74 : vector<32x256xf32>
    %76 = arith.mulf %75, %75 : vector<32x256xf32>
    %cst_30 = arith.constant dense<0.000000e+00> : vector<256xf32>
    %77 = vector.multi_reduction <add>, %76, %cst_30 [0] : vector<32x256xf32> to vector<256xf32>
    %78 = vector.shape_cast %77 : vector<256xf32> to vector<1x256xf32>
    %79 = vector.extract_strided_slice %72 {offsets = [0, 0], sizes = [64, 128], strides = [1, 1]} : vector<64x256xf32> to vector<64x128xf32>
    %80 = vector.extract_strided_slice %72 {offsets = [0, 128], sizes = [64, 128], strides = [1, 1]} : vector<64x256xf32> to vector<64x128xf32>
    %81 = arith.maximumf %79, %80 : vector<64x128xf32>
    %c63_i32_31 = arith.constant 63 : i32
    %82 = tpu.dynamic_rotate %81 by %c63_i32_31 dim 0 : vector<64x128xf32>, i32 -> vector<64x128xf32>
    %83 = arith.maximumf %81, %82 : vector<64x128xf32>
    %84 = tpu.iota {dimensions = array<i32: 0>} : vector<32x64xi32>
    %85 = tpu.iota {dimensions = array<i32: 1>} : vector<32x64xi32>
    %c2_i32 = arith.constant 2 : i32
    %86 = vector.broadcast %c2_i32 : i32 to vector<32x64xi32>
    %87 = arith.muli %86, %84 : vector<32x64xi32>
    %88 = arith.cmpi eq, %85, %87 : vector<32x64xi32>
    %89 = arith.extui %88 : vector<32x64xi1> to vector<32x64xi32>
    %90 = arith.sitofp %89 : vector<32x64xi32> to vector<32x64xf32>
    %cst_32 = arith.constant dense<0.000000e+00> : vector<32x128xf32>
    %91 = tpu.matmul %90, %83, %cst_32 {dimension_numbers = #tpu.dot_dimension_numbers<[1], [0], [0], [1], [0, 0, 1, 1], [], []>} : vector<32x64xf32>, vector<64x128xf32>, vector<32x128xf32> -> vector<32x128xf32>
    %c2 = arith.constant 2 : index
    %c0_33 = arith.constant 0 : index
    %92 = vector.load %arg9[%c2, %c0_33] : memref<7x256xf32, #tpu.memory_space<vmem>>, vector<1x256xf32>
    %93 = tpu.iota {dimensions = array<i32: 0>} : vector<32x128xi32>
    %c16_i32 = arith.constant 16 : i32
    %c0_i32_34 = arith.constant 0 : i32
    %94 = arith.cmpi eq, %c16_i32, %c0_i32_34 : i32
    %c1_i32_35 = arith.constant 1 : i32
    %95 = arith.select %94, %c1_i32_35, %c16_i32 : i32
    %96 = vector.broadcast %95 : i32 to vector<32x128xi32>
    %97 = arith.remsi %93, %96 : vector<32x128xi32>
    %c0_i32_36 = arith.constant 0 : i32
    %98 = vector.broadcast %c0_i32_36 : i32 to vector<32x128xi32>
    %99 = arith.cmpi ne, %97, %98 : vector<32x128xi32>
    %c0_i32_37 = arith.constant 0 : i32
    %100 = vector.broadcast %c0_i32_37 : i32 to vector<32x128xi32>
    %101 = arith.cmpi slt, %97, %100 : vector<32x128xi32>
    %c0_i32_38 = arith.constant 0 : i32
    %102 = arith.cmpi slt, %95, %c0_i32_38 : i32
    %103 = vector.broadcast %102 : i1 to vector<32x128xi1>
    %104 = vector.broadcast %103 : vector<32x128xi1> to vector<32x128xi1>
    %105 = arith.xori %101, %104 : vector<32x128xi1>
    %106 = arith.andi %105, %99 : vector<32x128xi1>
    %107 = vector.broadcast %95 : i32 to vector<32x128xi32>
    %108 = arith.addi %97, %107 : vector<32x128xi32>
    %109 = arith.select %106, %108, %97 : vector<32x128xi1>, vector<32x128xi32>
    %c0_i32_39 = arith.constant 0 : i32
    %110 = vector.broadcast %c0_i32_39 : i32 to vector<32x128xi32>
    %111 = arith.cmpi eq, %109, %110 : vector<32x128xi32>
    %c1_i32_40 = arith.constant 1 : i32
    %112 = tpu.dynamic_rotate %91 by %c1_i32_40 dim 0 : vector<32x128xf32>, i32 -> vector<32x128xf32>
    %cst_41 = arith.constant 0.000000e+00 : f32
    %113 = vector.broadcast %cst_41 : f32 to vector<32x128xf32>
    %114 = arith.select %111, %113, %112 : vector<32x128xi1>, vector<32x128xf32>
    %c15_i32 = arith.constant 15 : i32
    %115 = vector.broadcast %c15_i32 : i32 to vector<32x128xi32>
    %116 = arith.cmpi eq, %109, %115 : vector<32x128xi32>
    %c31_i32_42 = arith.constant 31 : i32
    %117 = tpu.dynamic_rotate %91 by %c31_i32_42 dim 0 : vector<32x128xf32>, i32 -> vector<32x128xf32>
    %cst_43 = arith.constant 0.000000e+00 : f32
    %118 = vector.broadcast %cst_43 : f32 to vector<32x128xf32>
    %119 = arith.select %116, %118, %117 : vector<32x128xi1>, vector<32x128xf32>
    %120 = tpu.concatenate %114, %91, %119 in 1 : vector<32x128xf32>, vector<32x128xf32>, vector<32x128xf32> -> vector<32x384xf32>
    %121 = arith.truncf %120 : vector<32x384xf32> to vector<32x384xbf16>
    %c0_44 = arith.constant 0 : index
    %c0_45 = arith.constant 0 : index
    %122 = vector.load %arg4[%c0_44, %c0_45] : memref<384x256xbf16, #tpu.memory_space<vmem>>, vector<384x256xbf16>
    %cst_46 = arith.constant dense<0.000000e+00> : vector<32x256xf32>
    %123 = tpu.matmul %121, %122, %cst_46 {dimension_numbers = #tpu.dot_dimension_numbers<[1], [0], [0], [1], [0, 0, 1, 1], [], []>} : vector<32x384xbf16>, vector<384x256xbf16>, vector<32x256xf32> -> vector<32x256xf32>
    %124 = vector.broadcast %92 : vector<1x256xf32> to vector<32x256xf32>
    %125 = arith.addf %123, %124 : vector<32x256xf32>
    %cst_47 = arith.constant 0.000000e+00 : f32
    %126 = vector.broadcast %cst_47 : f32 to vector<32x256xf32>
    %127 = arith.maximumf %125, %126 : vector<32x256xf32>
    %c3 = arith.constant 3 : index
    %c0_48 = arith.constant 0 : index
    %128 = vector.load %arg9[%c3, %c0_48] : memref<7x256xf32, #tpu.memory_space<vmem>>, vector<1x256xf32>
    %129 = tpu.iota {dimensions = array<i32: 0>} : vector<32x256xi32>
    %c16_i32_49 = arith.constant 16 : i32
    %c0_i32_50 = arith.constant 0 : i32
    %130 = arith.cmpi eq, %c16_i32_49, %c0_i32_50 : i32
    %c1_i32_51 = arith.constant 1 : i32
    %131 = arith.select %130, %c1_i32_51, %c16_i32_49 : i32
    %132 = vector.broadcast %131 : i32 to vector<32x256xi32>
    %133 = arith.remsi %129, %132 : vector<32x256xi32>
    %c0_i32_52 = arith.constant 0 : i32
    %134 = vector.broadcast %c0_i32_52 : i32 to vector<32x256xi32>
    %135 = arith.cmpi ne, %133, %134 : vector<32x256xi32>
    %c0_i32_53 = arith.constant 0 : i32
    %136 = vector.broadcast %c0_i32_53 : i32 to vector<32x256xi32>
    %137 = arith.cmpi slt, %133, %136 : vector<32x256xi32>
    %c0_i32_54 = arith.constant 0 : i32
    %138 = arith.cmpi slt, %131, %c0_i32_54 : i32
    %139 = vector.broadcast %138 : i1 to vector<32x256xi1>
    %140 = vector.broadcast %139 : vector<32x256xi1> to vector<32x256xi1>
    %141 = arith.xori %137, %140 : vector<32x256xi1>
    %142 = arith.andi %141, %135 : vector<32x256xi1>
    %143 = vector.broadcast %131 : i32 to vector<32x256xi32>
    %144 = arith.addi %133, %143 : vector<32x256xi32>
    %145 = arith.select %142, %144, %133 : vector<32x256xi1>, vector<32x256xi32>
    %c0_i32_55 = arith.constant 0 : i32
    %146 = vector.broadcast %c0_i32_55 : i32 to vector<32x256xi32>
    %147 = arith.cmpi eq, %145, %146 : vector<32x256xi32>
    %c1_i32_56 = arith.constant 1 : i32
    %148 = tpu.dynamic_rotate %127 by %c1_i32_56 dim 0 : vector<32x256xf32>, i32 -> vector<32x256xf32>
    %cst_57 = arith.constant 0.000000e+00 : f32
    %149 = vector.broadcast %cst_57 : f32 to vector<32x256xf32>
    %150 = arith.select %147, %149, %148 : vector<32x256xi1>, vector<32x256xf32>
    %c15_i32_58 = arith.constant 15 : i32
    %151 = vector.broadcast %c15_i32_58 : i32 to vector<32x256xi32>
    %152 = arith.cmpi eq, %145, %151 : vector<32x256xi32>
    %c31_i32_59 = arith.constant 31 : i32
    %153 = tpu.dynamic_rotate %127 by %c31_i32_59 dim 0 : vector<32x256xf32>, i32 -> vector<32x256xf32>
    %cst_60 = arith.constant 0.000000e+00 : f32
    %154 = vector.broadcast %cst_60 : f32 to vector<32x256xf32>
    %155 = arith.select %152, %154, %153 : vector<32x256xi1>, vector<32x256xf32>
    %156 = tpu.concatenate %150, %127, %155 in 1 : vector<32x256xf32>, vector<32x256xf32>, vector<32x256xf32> -> vector<32x768xf32>
    %157 = arith.truncf %156 : vector<32x768xf32> to vector<32x768xbf16>
    %c0_61 = arith.constant 0 : index
    %c0_62 = arith.constant 0 : index
    %158 = vector.load %arg5[%c0_61, %c0_62] : memref<768x256xbf16, #tpu.memory_space<vmem>>, vector<768x256xbf16>
    %cst_63 = arith.constant dense<0.000000e+00> : vector<32x256xf32>
    %159 = tpu.matmul %157, %158, %cst_63 {dimension_numbers = #tpu.dot_dimension_numbers<[1], [0], [0], [1], [0, 0, 1, 1], [], []>} : vector<32x768xbf16>, vector<768x256xbf16>, vector<32x256xf32> -> vector<32x256xf32>
    %160 = vector.broadcast %128 : vector<1x256xf32> to vector<32x256xf32>
    %161 = arith.addf %159, %160 : vector<32x256xf32>
    %cst_64 = arith.constant 0.000000e+00 : f32
    %162 = vector.broadcast %cst_64 : f32 to vector<32x256xf32>
    %163 = arith.maximumf %161, %162 : vector<32x256xf32>
    %164 = vector.extract_strided_slice %163 {offsets = [0, 0], sizes = [16, 256], strides = [1, 1]} : vector<32x256xf32> to vector<16x256xf32>
    %165 = vector.extract_strided_slice %163 {offsets = [16, 0], sizes = [16, 256], strides = [1, 1]} : vector<32x256xf32> to vector<16x256xf32>
    %166 = arith.subf %164, %165 : vector<16x256xf32>
    %167 = arith.mulf %166, %166 : vector<16x256xf32>
    %cst_65 = arith.constant dense<0.000000e+00> : vector<256xf32>
    %168 = vector.multi_reduction <add>, %167, %cst_65 [0] : vector<16x256xf32> to vector<256xf32>
    %169 = vector.shape_cast %168 : vector<256xf32> to vector<1x256xf32>
    %170 = vector.extract_strided_slice %163 {offsets = [0, 0], sizes = [32, 128], strides = [1, 1]} : vector<32x256xf32> to vector<32x128xf32>
    %171 = vector.extract_strided_slice %163 {offsets = [0, 128], sizes = [32, 128], strides = [1, 1]} : vector<32x256xf32> to vector<32x128xf32>
    %172 = arith.maximumf %170, %171 : vector<32x128xf32>
    %c31_i32_66 = arith.constant 31 : i32
    %173 = tpu.dynamic_rotate %172 by %c31_i32_66 dim 0 : vector<32x128xf32>, i32 -> vector<32x128xf32>
    %174 = arith.maximumf %172, %173 : vector<32x128xf32>
    %175 = tpu.iota {dimensions = array<i32: 0>} : vector<16x32xi32>
    %176 = tpu.iota {dimensions = array<i32: 1>} : vector<16x32xi32>
    %c2_i32_67 = arith.constant 2 : i32
    %177 = vector.broadcast %c2_i32_67 : i32 to vector<16x32xi32>
    %178 = arith.muli %177, %175 : vector<16x32xi32>
    %179 = arith.cmpi eq, %176, %178 : vector<16x32xi32>
    %180 = arith.extui %179 : vector<16x32xi1> to vector<16x32xi32>
    %181 = arith.sitofp %180 : vector<16x32xi32> to vector<16x32xf32>
    %cst_68 = arith.constant dense<0.000000e+00> : vector<16x128xf32>
    %182 = tpu.matmul %181, %174, %cst_68 {dimension_numbers = #tpu.dot_dimension_numbers<[1], [0], [0], [1], [0, 0, 1, 1], [], []>} : vector<16x32xf32>, vector<32x128xf32>, vector<16x128xf32> -> vector<16x128xf32>
    %c4 = arith.constant 4 : index
    %c0_69 = arith.constant 0 : index
    %183 = vector.load %arg9[%c4, %c0_69] : memref<7x256xf32, #tpu.memory_space<vmem>>, vector<1x256xf32>
    %184 = tpu.iota {dimensions = array<i32: 0>} : vector<16x128xi32>
    %c8_i32 = arith.constant 8 : i32
    %c0_i32_70 = arith.constant 0 : i32
    %185 = arith.cmpi eq, %c8_i32, %c0_i32_70 : i32
    %c1_i32_71 = arith.constant 1 : i32
    %186 = arith.select %185, %c1_i32_71, %c8_i32 : i32
    %187 = vector.broadcast %186 : i32 to vector<16x128xi32>
    %188 = arith.remsi %184, %187 : vector<16x128xi32>
    %c0_i32_72 = arith.constant 0 : i32
    %189 = vector.broadcast %c0_i32_72 : i32 to vector<16x128xi32>
    %190 = arith.cmpi ne, %188, %189 : vector<16x128xi32>
    %c0_i32_73 = arith.constant 0 : i32
    %191 = vector.broadcast %c0_i32_73 : i32 to vector<16x128xi32>
    %192 = arith.cmpi slt, %188, %191 : vector<16x128xi32>
    %c0_i32_74 = arith.constant 0 : i32
    %193 = arith.cmpi slt, %186, %c0_i32_74 : i32
    %194 = vector.broadcast %193 : i1 to vector<16x128xi1>
    %195 = vector.broadcast %194 : vector<16x128xi1> to vector<16x128xi1>
    %196 = arith.xori %192, %195 : vector<16x128xi1>
    %197 = arith.andi %196, %190 : vector<16x128xi1>
    %198 = vector.broadcast %186 : i32 to vector<16x128xi32>
    %199 = arith.addi %188, %198 : vector<16x128xi32>
    %200 = arith.select %197, %199, %188 : vector<16x128xi1>, vector<16x128xi32>
    %c0_i32_75 = arith.constant 0 : i32
    %201 = vector.broadcast %c0_i32_75 : i32 to vector<16x128xi32>
    %202 = arith.cmpi eq, %200, %201 : vector<16x128xi32>
    %c1_i32_76 = arith.constant 1 : i32
    %203 = tpu.dynamic_rotate %182 by %c1_i32_76 dim 0 : vector<16x128xf32>, i32 -> vector<16x128xf32>
    %cst_77 = arith.constant 0.000000e+00 : f32
    %204 = vector.broadcast %cst_77 : f32 to vector<16x128xf32>
    %205 = arith.select %202, %204, %203 : vector<16x128xi1>, vector<16x128xf32>
    %c7_i32 = arith.constant 7 : i32
    %206 = vector.broadcast %c7_i32 : i32 to vector<16x128xi32>
    %207 = arith.cmpi eq, %200, %206 : vector<16x128xi32>
    %c15_i32_78 = arith.constant 15 : i32
    %208 = tpu.dynamic_rotate %182 by %c15_i32_78 dim 0 : vector<16x128xf32>, i32 -> vector<16x128xf32>
    %cst_79 = arith.constant 0.000000e+00 : f32
    %209 = vector.broadcast %cst_79 : f32 to vector<16x128xf32>
    %210 = arith.select %207, %209, %208 : vector<16x128xi1>, vector<16x128xf32>
    %211 = tpu.concatenate %205, %182, %210 in 1 : vector<16x128xf32>, vector<16x128xf32>, vector<16x128xf32> -> vector<16x384xf32>
    %212 = arith.truncf %211 : vector<16x384xf32> to vector<16x384xbf16>
    %c0_80 = arith.constant 0 : index
    %c0_81 = arith.constant 0 : index
    %213 = vector.load %arg6[%c0_80, %c0_81] : memref<384x256xbf16, #tpu.memory_space<vmem>>, vector<384x256xbf16>
    %cst_82 = arith.constant dense<0.000000e+00> : vector<16x256xf32>
    %214 = tpu.matmul %212, %213, %cst_82 {dimension_numbers = #tpu.dot_dimension_numbers<[1], [0], [0], [1], [0, 0, 1, 1], [], []>} : vector<16x384xbf16>, vector<384x256xbf16>, vector<16x256xf32> -> vector<16x256xf32>
    %215 = vector.broadcast %183 : vector<1x256xf32> to vector<16x256xf32>
    %216 = arith.addf %214, %215 : vector<16x256xf32>
    %cst_83 = arith.constant 0.000000e+00 : f32
    %217 = vector.broadcast %cst_83 : f32 to vector<16x256xf32>
    %218 = arith.maximumf %216, %217 : vector<16x256xf32>
    %c5 = arith.constant 5 : index
    %c0_84 = arith.constant 0 : index
    %219 = vector.load %arg9[%c5, %c0_84] : memref<7x256xf32, #tpu.memory_space<vmem>>, vector<1x256xf32>
    %220 = tpu.iota {dimensions = array<i32: 0>} : vector<16x256xi32>
    %c8_i32_85 = arith.constant 8 : i32
    %c0_i32_86 = arith.constant 0 : i32
    %221 = arith.cmpi eq, %c8_i32_85, %c0_i32_86 : i32
    %c1_i32_87 = arith.constant 1 : i32
    %222 = arith.select %221, %c1_i32_87, %c8_i32_85 : i32
    %223 = vector.broadcast %222 : i32 to vector<16x256xi32>
    %224 = arith.remsi %220, %223 : vector<16x256xi32>
    %c0_i32_88 = arith.constant 0 : i32
    %225 = vector.broadcast %c0_i32_88 : i32 to vector<16x256xi32>
    %226 = arith.cmpi ne, %224, %225 : vector<16x256xi32>
    %c0_i32_89 = arith.constant 0 : i32
    %227 = vector.broadcast %c0_i32_89 : i32 to vector<16x256xi32>
    %228 = arith.cmpi slt, %224, %227 : vector<16x256xi32>
    %c0_i32_90 = arith.constant 0 : i32
    %229 = arith.cmpi slt, %222, %c0_i32_90 : i32
    %230 = vector.broadcast %229 : i1 to vector<16x256xi1>
    %231 = vector.broadcast %230 : vector<16x256xi1> to vector<16x256xi1>
    %232 = arith.xori %228, %231 : vector<16x256xi1>
    %233 = arith.andi %232, %226 : vector<16x256xi1>
    %234 = vector.broadcast %222 : i32 to vector<16x256xi32>
    %235 = arith.addi %224, %234 : vector<16x256xi32>
    %236 = arith.select %233, %235, %224 : vector<16x256xi1>, vector<16x256xi32>
    %c0_i32_91 = arith.constant 0 : i32
    %237 = vector.broadcast %c0_i32_91 : i32 to vector<16x256xi32>
    %238 = arith.cmpi eq, %236, %237 : vector<16x256xi32>
    %c1_i32_92 = arith.constant 1 : i32
    %239 = tpu.dynamic_rotate %218 by %c1_i32_92 dim 0 : vector<16x256xf32>, i32 -> vector<16x256xf32>
    %cst_93 = arith.constant 0.000000e+00 : f32
    %240 = vector.broadcast %cst_93 : f32 to vector<16x256xf32>
    %241 = arith.select %238, %240, %239 : vector<16x256xi1>, vector<16x256xf32>
    %c7_i32_94 = arith.constant 7 : i32
    %242 = vector.broadcast %c7_i32_94 : i32 to vector<16x256xi32>
    %243 = arith.cmpi eq, %236, %242 : vector<16x256xi32>
    %c15_i32_95 = arith.constant 15 : i32
    %244 = tpu.dynamic_rotate %218 by %c15_i32_95 dim 0 : vector<16x256xf32>, i32 -> vector<16x256xf32>
    %cst_96 = arith.constant 0.000000e+00 : f32
    %245 = vector.broadcast %cst_96 : f32 to vector<16x256xf32>
    %246 = arith.select %243, %245, %244 : vector<16x256xi1>, vector<16x256xf32>
    %247 = tpu.concatenate %241, %218, %246 in 1 : vector<16x256xf32>, vector<16x256xf32>, vector<16x256xf32> -> vector<16x768xf32>
    %248 = arith.truncf %247 : vector<16x768xf32> to vector<16x768xbf16>
    %c0_97 = arith.constant 0 : index
    %c0_98 = arith.constant 0 : index
    %249 = vector.load %arg7[%c0_97, %c0_98] : memref<768x256xbf16, #tpu.memory_space<vmem>>, vector<768x256xbf16>
    %cst_99 = arith.constant dense<0.000000e+00> : vector<16x256xf32>
    %250 = tpu.matmul %248, %249, %cst_99 {dimension_numbers = #tpu.dot_dimension_numbers<[1], [0], [0], [1], [0, 0, 1, 1], [], []>} : vector<16x768xbf16>, vector<768x256xbf16>, vector<16x256xf32> -> vector<16x256xf32>
    %251 = vector.broadcast %219 : vector<1x256xf32> to vector<16x256xf32>
    %252 = arith.addf %250, %251 : vector<16x256xf32>
    %cst_100 = arith.constant 0.000000e+00 : f32
    %253 = vector.broadcast %cst_100 : f32 to vector<16x256xf32>
    %254 = arith.maximumf %252, %253 : vector<16x256xf32>
    %c6 = arith.constant 6 : index
    %c0_101 = arith.constant 0 : index
    %255 = vector.load %arg9[%c6, %c0_101] : memref<7x256xf32, #tpu.memory_space<vmem>>, vector<1x256xf32>
    %256 = tpu.iota {dimensions = array<i32: 0>} : vector<16x256xi32>
    %c8_i32_102 = arith.constant 8 : i32
    %c0_i32_103 = arith.constant 0 : i32
    %257 = arith.cmpi eq, %c8_i32_102, %c0_i32_103 : i32
    %c1_i32_104 = arith.constant 1 : i32
    %258 = arith.select %257, %c1_i32_104, %c8_i32_102 : i32
    %259 = vector.broadcast %258 : i32 to vector<16x256xi32>
    %260 = arith.remsi %256, %259 : vector<16x256xi32>
    %c0_i32_105 = arith.constant 0 : i32
    %261 = vector.broadcast %c0_i32_105 : i32 to vector<16x256xi32>
    %262 = arith.cmpi ne, %260, %261 : vector<16x256xi32>
    %c0_i32_106 = arith.constant 0 : i32
    %263 = vector.broadcast %c0_i32_106 : i32 to vector<16x256xi32>
    %264 = arith.cmpi slt, %260, %263 : vector<16x256xi32>
    %c0_i32_107 = arith.constant 0 : i32
    %265 = arith.cmpi slt, %258, %c0_i32_107 : i32
    %266 = vector.broadcast %265 : i1 to vector<16x256xi1>
    %267 = vector.broadcast %266 : vector<16x256xi1> to vector<16x256xi1>
    %268 = arith.xori %264, %267 : vector<16x256xi1>
    %269 = arith.andi %268, %262 : vector<16x256xi1>
    %270 = vector.broadcast %258 : i32 to vector<16x256xi32>
    %271 = arith.addi %260, %270 : vector<16x256xi32>
    %272 = arith.select %269, %271, %260 : vector<16x256xi1>, vector<16x256xi32>
    %c0_i32_108 = arith.constant 0 : i32
    %273 = vector.broadcast %c0_i32_108 : i32 to vector<16x256xi32>
    %274 = arith.cmpi eq, %272, %273 : vector<16x256xi32>
    %c1_i32_109 = arith.constant 1 : i32
    %275 = tpu.dynamic_rotate %254 by %c1_i32_109 dim 0 : vector<16x256xf32>, i32 -> vector<16x256xf32>
    %cst_110 = arith.constant 0.000000e+00 : f32
    %276 = vector.broadcast %cst_110 : f32 to vector<16x256xf32>
    %277 = arith.select %274, %276, %275 : vector<16x256xi1>, vector<16x256xf32>
    %c7_i32_111 = arith.constant 7 : i32
    %278 = vector.broadcast %c7_i32_111 : i32 to vector<16x256xi32>
    %279 = arith.cmpi eq, %272, %278 : vector<16x256xi32>
    %c15_i32_112 = arith.constant 15 : i32
    %280 = tpu.dynamic_rotate %254 by %c15_i32_112 dim 0 : vector<16x256xf32>, i32 -> vector<16x256xf32>
    %cst_113 = arith.constant 0.000000e+00 : f32
    %281 = vector.broadcast %cst_113 : f32 to vector<16x256xf32>
    %282 = arith.select %279, %281, %280 : vector<16x256xi1>, vector<16x256xf32>
    %283 = tpu.concatenate %277, %254, %282 in 1 : vector<16x256xf32>, vector<16x256xf32>, vector<16x256xf32> -> vector<16x768xf32>
    %284 = arith.truncf %283 : vector<16x768xf32> to vector<16x768xbf16>
    %c0_114 = arith.constant 0 : index
    %c0_115 = arith.constant 0 : index
    %285 = vector.load %arg8[%c0_114, %c0_115] : memref<768x256xbf16, #tpu.memory_space<vmem>>, vector<768x256xbf16>
    %cst_116 = arith.constant dense<0.000000e+00> : vector<16x256xf32>
    %286 = tpu.matmul %284, %285, %cst_116 {dimension_numbers = #tpu.dot_dimension_numbers<[1], [0], [0], [1], [0, 0, 1, 1], [], []>} : vector<16x768xbf16>, vector<768x256xbf16>, vector<16x256xf32> -> vector<16x256xf32>
    %287 = vector.broadcast %255 : vector<1x256xf32> to vector<16x256xf32>
    %288 = arith.addf %286, %287 : vector<16x256xf32>
    %cst_117 = arith.constant 0.000000e+00 : f32
    %289 = vector.broadcast %cst_117 : f32 to vector<16x256xf32>
    %290 = arith.maximumf %288, %289 : vector<16x256xf32>
    %291 = vector.extract_strided_slice %290 {offsets = [0, 0], sizes = [8, 256], strides = [1, 1]} : vector<16x256xf32> to vector<8x256xf32>
    %292 = vector.extract_strided_slice %290 {offsets = [8, 0], sizes = [8, 256], strides = [1, 1]} : vector<16x256xf32> to vector<8x256xf32>
    %293 = arith.subf %291, %292 : vector<8x256xf32>
    %294 = arith.mulf %293, %293 : vector<8x256xf32>
    %cst_118 = arith.constant dense<0.000000e+00> : vector<256xf32>
    %295 = vector.multi_reduction <add>, %294, %cst_118 [0] : vector<8x256xf32> to vector<256xf32>
    %296 = vector.shape_cast %295 : vector<256xf32> to vector<1x256xf32>
    %297 = tpu.concatenate %78, %169, %296 in 0 : vector<1x256xf32>, vector<1x256xf32>, vector<1x256xf32> -> vector<3x256xf32>
    %c0_119 = arith.constant 0 : index
    %c0_120 = arith.constant 0 : index
    %c0_121 = arith.constant 0 : index
    %298 = vector.load %arg10[%c0_119, %c0_120, %c0_121] : memref<1x3x256xf32, #tpu.memory_space<vmem>>, vector<1x3x256xf32>
    %299 = vector.shape_cast %298 : vector<1x3x256xf32> to vector<3x256xf32>
    %300 = vector.shape_cast %297 : vector<3x256xf32> to vector<1x3x256xf32>
    tpu.vector_store %arg10[%c0_119, %c0_120, %c0_121], %300 {strides = array<i32>} : memref<1x3x256xf32, #tpu.memory_space<vmem>>, vector<1x3x256xf32>,
    return
  }
  func.func @transform_0(%arg0: i32) -> (i32, i32) {
    %c0_i32 = arith.constant 0 : i32
    %c0_i32_0 = arith.constant 0 : i32
    return %arg0, %c0_i32 : i32, i32
  }
  func.func @transform_1(%arg0: i32) -> (i32, i32) {
    %c0_i32 = arith.constant 0 : i32
    %c0_i32_0 = arith.constant 0 : i32
    %c0_i32_1 = arith.constant 0 : i32
    return %c0_i32, %c0_i32_0 : i32, i32
  }
  func.func @transform_2(%arg0: i32) -> (i32, i32) {
    %c0_i32 = arith.constant 0 : i32
    %c0_i32_0 = arith.constant 0 : i32
    %c0_i32_1 = arith.constant 0 : i32
    return %c0_i32, %c0_i32_0 : i32, i32
  }
  func.func @transform_3(%arg0: i32) -> (i32, i32) {
    %c0_i32 = arith.constant 0 : i32
    %c0_i32_0 = arith.constant 0 : i32
    %c0_i32_1 = arith.constant 0 : i32
    return %c0_i32, %c0_i32_0 : i32, i32
  }
  func.func @transform_4(%arg0: i32) -> (i32, i32) {
    %c0_i32 = arith.constant 0 : i32
    %c0_i32_0 = arith.constant 0 : i32
    %c0_i32_1 = arith.constant 0 : i32
    return %c0_i32, %c0_i32_0 : i32, i32
  }
  func.func @transform_5(%arg0: i32) -> (i32, i32) {
    %c0_i32 = arith.constant 0 : i32
    %c0_i32_0 = arith.constant 0 : i32
    %c0_i32_1 = arith.constant 0 : i32
    return %c0_i32, %c0_i32_0 : i32, i32
  }
  func.func @transform_6(%arg0: i32) -> (i32, i32) {
    %c0_i32 = arith.constant 0 : i32
    %c0_i32_0 = arith.constant 0 : i32
    %c0_i32_1 = arith.constant 0 : i32
    return %c0_i32, %c0_i32_0 : i32, i32
  }
  func.func @transform_7(%arg0: i32) -> (i32, i32) {
    %c0_i32 = arith.constant 0 : i32
    %c0_i32_0 = arith.constant 0 : i32
    %c0_i32_1 = arith.constant 0 : i32
    return %c0_i32, %c0_i32_0 : i32, i32
  }
  func.func @transform_8(%arg0: i32) -> (i32, i32) {
    %c0_i32 = arith.constant 0 : i32
    %c0_i32_0 = arith.constant 0 : i32
    %c0_i32_1 = arith.constant 0 : i32
    return %c0_i32, %c0_i32_0 : i32, i32
  }
  func.func @transform_9(%arg0: i32) -> (i32, i32, i32) {
    %c0_i32 = arith.constant 0 : i32
    %c0_i32_0 = arith.constant 0 : i32
    %c0_i32_1 = arith.constant 0 : i32
    return %arg0, %c0_i32, %c0_i32_0 : i32, i32, i32
  }
}

</mosaic_0001>

<llo_original>
// kernel: vgg_loss.1
$region0: #{vgg_loss.1}
  #allocation0 [shape = 'u32[]', space=smem, size = 0x4, offset = 0x4, fixed_abs, tag = 'smem constant byte address 0x4 - core index']
  #allocation1 [shape = 'u32[144,128]{1,0:T(1,128)}', space=vmem, size = 0x12000, scoped, tag = 'internal scratch']
  %s0 = inlined_call_operand.vmem [shape: f32[128,128], index: 0, kind: input, shape index: {}]
  %s1 = inlined_call_operand.vmem [shape: bf16[384,256], index: 1, kind: input, shape index: {}]
  %s2 = inlined_call_operand.vmem [shape: bf16[768,256], index: 2, kind: input, shape index: {}]
  %s3 = inlined_call_operand.hbm [shape: bf16[384,256], index: 3, kind: input, shape index: {}]
  %s4 = inlined_call_operand.vmem [shape: bf16[768,256], index: 4, kind: input, shape index: {}]
  %s5 = inlined_call_operand.hbm [shape: bf16[384,256], index: 5, kind: input, shape index: {}]
  %s6 = inlined_call_operand.vmem [shape: bf16[768,256], index: 6, kind: input, shape index: {}]
  %s7 = inlined_call_operand.hbm [shape: bf16[768,256], index: 7, kind: input, shape index: {}]
  %s8 = inlined_call_operand.vmem [shape: f32[7,256], index: 8, kind: input, shape index: {}]
  %s9 = inlined_call_operand.vmem [shape: f32[2,3,256], index: 9, kind: output, shape index: {}]
  %s10 = sld [smem:[#allocation0]]
  $region81: #{vgg_loss.1} parent=0
    _
  %s12 = ssub.s32 1, %s10
  %s13 = scalar_select 0, %s12, %s10
  $region1: #{vgg_loss.1} parent=0
    #allocation2 [shape = 'u8[196608]{0}', space=vmem, size = 0x30000, scoped, tag = 'input window, operand 3, single buffered']
    #allocation3 [shape = 's32[2]{0}', space=sflag, size = 0x8, scoped, tag = 'scoped memory for vgg_loss.1']
    #allocation4 [shape = 'u8[196608]{0}', space=vmem, size = 0x30000, scoped, tag = 'input window, operand 5, single buffered']
    #allocation5 [shape = 's32[1]{0}', space=sflag, size = 0x4, scoped, tag = 'scoped memory for vgg_loss.1']
    #allocation6 [shape = 'u8[393216]{0}', space=vmem, size = 0x60000, scoped, tag = 'input window, operand 7, single buffered']
    %14 = vsyncpa [#allocation3], 0
    %15 = vsyncpa [#allocation5], 0
    loop: start=0, step=1, limit=4
    $region2: #{vgg_loss.1} parent=1 // loop_pre_header
      _
    $region3: #{vgg_loss.1} parent=1 // loop_header
      %s17 = sphi 0, %s21
      %p18 = scmp.ge.s32.totalorder %s17, 4
      %s27 = sphi 0, %s29
      %s30 = sphi 0, %s27
      %s31 = sphi 0, %s30
      %s47 = sphi 0, %s31
      %s51 = sphi 0, %s51
      %s53 = sphi 0, %s51
      %s54 = sphi 0, %s53
      %s68 = sphi 0, %s54
      %s72 = sphi 0, %s72
      %s74 = sphi 0, %s72
      %s75 = sphi 0, %s74
      %s89 = sphi 0, %s75
      %s93 = sphi 0, %s93
      %s95 = sphi 0, %s93
      %s96 = sphi 0, %s95
      %s110 = sphi 0, %s96
      %s114 = sphi 0, %s114
      %s116 = sphi 0, %s114
      %s117 = sphi 0, %s116
      %s131 = sphi 0, %s117
      %s135 = sphi 0, %s135
      %s137 = sphi 0, %s135
      %s138 = sphi 0, %s137
      %s152 = sphi 0, %s138
      %s156 = sphi 0, %s156
      %s158 = sphi 0, %s156
      %s159 = sphi 0, %s158
      %s173 = sphi 0, %s159
      %s177 = sphi 0, %s177
      %s179 = sphi 0, %s177
      %s180 = sphi 0, %s179
      %s194 = sphi 0, %s180
      %s198 = sphi 0, %s198
      %s200 = sphi 0, %s198
      %s201 = sphi 0, %s200
      %s215 = sphi 0, %s201
      %s221 = sphi 0, %s223
      %s224 = sphi 0, %s221
      %s225 = sphi 0, %s224
      %s241 = sphi 0, %s225
    $region4: #{vgg_loss.1} parent=1 // loop_header_branch
      %20 = sbr.rel (%p18) target = $region8
    $region5: #{vgg_loss.1} parent=1 // loop_body
      %s22 = ssub.s32 %s17, 1
      %s23 = ssub.s32 %s17, 2
      %s24 = sadd.s32 %s17, 1
      %s25 = ssub.s32 %s17, %s24
      %p26 = scmp.eq.s32.totalorder %s25, 0
      %s28 = sadd.s32 %s27, 1
      %s29 = scalar_select %p26, %s27, %s28
      %p32 = pneg %p26
      %p33 = scmp.eq.s32.totalorder %s17, 1
      %p34 = por %p32, %p33
      %p35 = scmp.ne.s32.totalorder %s27, %s30
      %p36 = scmp.eq.s32.totalorder %s17, 0
      %p37 = por %p35, %p36
      %p38 = scmp.ne.s32.totalorder %s27, %s30
      %p39 = scmp.eq.s32.totalorder %s22, 1
      %p40 = por %p38, %p39
      %p41 = scmp.ne.s32.totalorder %s30, %s31
      %p42 = scmp.eq.s32.totalorder %s22, 0
      %p43 = por %p41, %p42
      %p44 = scmp.ne.s32.totalorder %s30, %s31
      %p45 = scmp.eq.s32.totalorder %s23, 1
      %p46 = por %p44, %p45
      %p48 = scmp.ne.s32.totalorder %s31, %s47
      %p49 = scmp.eq.s32.totalorder %s23, 0
      %p50 = por %p48, %p49
      %s52 = sadd.s32 %s51, 1
      %p55 = scmp.eq.s32.totalorder %s17, 1
      %p56 = scmp.ne.s32.totalorder %s51, %s53
      %p57 = scmp.eq.s32.totalorder %s17, 0
      %p58 = por %p56, %p57
      %p59 = scmp.ne.s32.totalorder %s51, %s53
      %p60 = scmp.eq.s32.totalorder %s22, 1
      %p61 = por %p59, %p60
      %p62 = scmp.ne.s32.totalorder %s53, %s54
      %p63 = scmp.eq.s32.totalorder %s22, 0
      %p64 = por %p62, %p63
      %p65 = scmp.ne.s32.totalorder %s53, %s54
      %p66 = scmp.eq.s32.totalorder %s23, 1
      %p67 = por %p65, %p66
      %p69 = scmp.ne.s32.totalorder %s54, %s68
      %p70 = scmp.eq.s32.totalorder %s23, 0
      %p71 = por %p69, %p70
      %s73 = sadd.s32 %s72, 1
      %p76 = scmp.eq.s32.totalorder %s17, 1
      %p77 = scmp.ne.s32.totalorder %s72, %s74
      %p78 = scmp.eq.s32.totalorder %s17, 0
      %p79 = por %p77, %p78
      %p80 = scmp.ne.s32.totalorder %s72, %s74
      %p81 = scmp.eq.s32.totalorder %s22, 1
      %p82 = por %p80, %p81
      %p83 = scmp.ne.s32.totalorder %s74, %s75
      %p84 = scmp.eq.s32.totalorder %s22, 0
      %p85 = por %p83, %p84
      %p86 = scmp.ne.s32.totalorder %s74, %s75
      %p87 = scmp.eq.s32.totalorder %s23, 1
      %p88 = por %p86, %p87
      %p90 = scmp.ne.s32.totalorder %s75, %s89
      %p91 = scmp.eq.s32.totalorder %s23, 0
      %p92 = por %p90, %p91
      %s94 = sadd.s32 %s93, 1
      %p97 = scmp.eq.s32.totalorder %s17, 1
      %p98 = scmp.ne.s32.totalorder %s93, %s95
      %p99 = scmp.eq.s32.totalorder %s17, 0
      %p100 = por %p98, %p99
      %p101 = scmp.ne.s32.totalorder %s93, %s95
      %p102 = scmp.eq.s32.totalorder %s22, 1
      %p103 = por %p101, %p102
      %p104 = scmp.ne.s32.totalorder %s95, %s96
      %p105 = scmp.eq.s32.totalorder %s22, 0
      %p106 = por %p104, %p105
      %p107 = scmp.ne.s32.totalorder %s95, %s96
      %p108 = scmp.eq.s32.totalorder %s23, 1
      %p109 = por %p107, %p108
      %p111 = scmp.ne.s32.totalorder %s96, %s110
      %p112 = scmp.eq.s32.totalorder %s23, 0
      %p113 = por %p111, %p112
      %s115 = sadd.s32 %s114, 1
      %p118 = scmp.eq.s32.totalorder %s17, 1
      %p119 = scmp.ne.s32.totalorder %s114, %s116
      %p120 = scmp.eq.s32.totalorder %s17, 0
      %p121 = por %p119, %p120
      %p122 = scmp.ne.s32.totalorder %s114, %s116
      %p123 = scmp.eq.s32.totalorder %s22, 1
      %p124 = por %p122, %p123
      %p125 = scmp.ne.s32.totalorder %s116, %s117
      %p126 = scmp.eq.s32.totalorder %s22, 0
      %p127 = por %p125, %p126
      %p128 = scmp.ne.s32.totalorder %s116, %s117
      %p129 = scmp.eq.s32.totalorder %s23, 1
      %p130 = por %p128, %p129
      %p132 = scmp.ne.s32.totalorder %s117, %s131
      %p133 = scmp.eq.s32.totalorder %s23, 0
      %p134 = por %p132, %p133
      %s136 = sadd.s32 %s135, 1
      %p139 = scmp.eq.s32.totalorder %s17, 1
      %p140 = scmp.ne.s32.totalorder %s135, %s137
      %p141 = scmp.eq.s32.totalorder %s17, 0
      %p142 = por %p140, %p141
      %p143 = scmp.ne.s32.totalorder %s135, %s137
      %p144 = scmp.eq.s32.totalorder %s22, 1
      %p145 = por %p143, %p144
      %p146 = scmp.ne.s32.totalorder %s137, %s138
      %p147 = scmp.eq.s32.totalorder %s22, 0
      %p148 = por %p146, %p147
      %p149 = scmp.ne.s32.totalorder %s137, %s138
      %p150 = scmp.eq.s32.totalorder %s23, 1
      %p151 = por %p149, %p150
      %p153 = scmp.ne.s32.totalorder %s138, %s152
      %p154 = scmp.eq.s32.totalorder %s23, 0
      %p155 = por %p153, %p154
      %s157 = sadd.s32 %s156, 1
      %p160 = scmp.eq.s32.totalorder %s17, 1
      %p161 = scmp.ne.s32.totalorder %s156, %s158
      %p162 = scmp.eq.s32.totalorder %s17, 0
      %p163 = por %p161, %p162
      %p164 = scmp.ne.s32.totalorder %s156, %s158
      %p165 = scmp.eq.s32.totalorder %s22, 1
      %p166 = por %p164, %p165
      %p167 = scmp.ne.s32.totalorder %s158, %s159
      %p168 = scmp.eq.s32.totalorder %s22, 0
      %p169 = por %p167, %p168
      %p170 = scmp.ne.s32.totalorder %s158, %s159
      %p171 = scmp.eq.s32.totalorder %s23, 1
      %p172 = por %p170, %p171
      %p174 = scmp.ne.s32.totalorder %s159, %s173
      %p175 = scmp.eq.s32.totalorder %s23, 0
      %p176 = por %p174, %p175
      %s178 = sadd.s32 %s177, 1
      %p181 = scmp.eq.s32.totalorder %s17, 1
      %p182 = scmp.ne.s32.totalorder %s177, %s179
      %p183 = scmp.eq.s32.totalorder %s17, 0
      %p184 = por %p182, %p183
      %p185 = scmp.ne.s32.totalorder %s177, %s179
      %p186 = scmp.eq.s32.totalorder %s22, 1
      %p187 = por %p185, %p186
      %p188 = scmp.ne.s32.totalorder %s179, %s180
      %p189 = scmp.eq.s32.totalorder %s22, 0
      %p190 = por %p188, %p189
      %p191 = scmp.ne.s32.totalorder %s179, %s180
      %p192 = scmp.eq.s32.totalorder %s23, 1
      %p193 = por %p191, %p192
      %p195 = scmp.ne.s32.totalorder %s180, %s194
      %p196 = scmp.eq.s32.totalorder %s23, 0
      %p197 = por %p195, %p196
      %s199 = sadd.s32 %s198, 1
      %p202 = scmp.eq.s32.totalorder %s17, 1
      %p203 = scmp.ne.s32.totalorder %s198, %s200
      %p204 = scmp.eq.s32.totalorder %s17, 0
      %p205 = por %p203, %p204
      %p206 = scmp.ne.s32.totalorder %s198, %s200
      %p207 = scmp.eq.s32.totalorder %s22, 1
      %p208 = por %p206, %p207
      %p209 = scmp.ne.s32.totalorder %s200, %s201
      %p210 = scmp.eq.s32.totalorder %s22, 0
      %p211 = por %p209, %p210
      %p212 = scmp.ne.s32.totalorder %s200, %s201
      %p213 = scmp.eq.s32.totalorder %s23, 1
      %p214 = por %p212, %p213
      %p216 = scmp.ne.s32.totalorder %s201, %s215
      %p217 = scmp.eq.s32.totalorder %s23, 0
      %p218 = por %p216, %p217
      %s219 = ssub.s32 %s17, %s24
      %p220 = scmp.eq.s32.totalorder %s219, 0
      %s222 = sadd.s32 %s221, 1
      %s223 = scalar_select %p220, %s221, %s222
      %p226 = pneg %p220
      %p227 = scmp.eq.s32.totalorder %s17, 1
      %p228 = por %p226, %p227
      %p229 = scmp.ne.s32.totalorder %s221, %s224
      %p230 = scmp.eq.s32.totalorder %s17, 0
      %p231 = por %p229, %p230
      %p232 = scmp.ne.s32.totalorder %s221, %s224
      %p233 = scmp.eq.s32.totalorder %s22, 1
      %p234 = por %p232, %p233
      %p235 = scmp.ne.s32.totalorder %s224, %s225
      %p236 = scmp.eq.s32.totalorder %s22, 0
      %p237 = por %p235, %p236
      %p238 = scmp.ne.s32.totalorder %s224, %s225
      %p239 = scmp.eq.s32.totalorder %s23, 1
      %p240 = por %p238, %p239
      %p242 = scmp.ne.s32.totalorder %s225, %s241
      %p243 = scmp.eq.s32.totalorder %s23, 0
      %p244 = por %p242, %p243
      %p245 = scmp.le.s32.totalorder 1, %s17
      %p246 = scmp.lt.s32.totalorder %s17, 3
      %p247 = pnand %p245, %p246
      %p248 = pneg %p247
      // Predicated region
      $region9: #{vgg_loss.1} parent=5 // pred_check
        _
      $region10: #{vgg_loss.1} parent=5 // pred_check_branch
        %250 = sbr.rel (%p247) target = $region12
      $region11: #{vgg_loss.1} parent=5 // pred_region
        %s251 = ssub.s32 %s17, 1
        // Predicated region
        $region13: #{vgg_loss.1} parent=11 // pred_check
          %p252 = pneg %p64
        $region14: #{vgg_loss.1} parent=11 // pred_check_branch
          %254 = sbr.rel (%p252) target = $region16
        $region15: #{vgg_loss.1} parent=11 // pred_region
          _
        $region16: #{vgg_loss.1} parent=11 // pred_fallthru
          _
        // Predicated region
        $region17: #{vgg_loss.1} parent=11 // pred_check
          %p255 = pneg %p85
        $region18: #{vgg_loss.1} parent=11 // pred_check_branch
          %257 = sbr.rel (%p255) target = $region20
        $region19: #{vgg_loss.1} parent=11 // pred_region
          _
        $region20: #{vgg_loss.1} parent=11 // pred_fallthru
          _
        // Predicated region
        $region21: #{vgg_loss.1} parent=11 // pred_check
          %p258 = pneg %p106
        $region22: #{vgg_loss.1} parent=11 // pred_check_branch
          %260 = sbr.rel (%p258) target = $region24
        $region23: #{vgg_loss.1} parent=11 // pred_region
          %s262 = ssub.s32 6144, 6144
          %263 = vsyncadd [#allocation3], %s262
          %s264 = sshll.u32 [#allocation2], 4
          %s265 = int_to_ptr.vmem [resolvable:$true] %s264
          %270 = dma.hbm_to_vmem [thread:$0]  %s3, 6144, %s265, [#allocation3], 128, 128, 8
        $region24: #{vgg_loss.1} parent=11 // pred_fallthru
          _
        // Predicated region
        $region25: #{vgg_loss.1} parent=11 // pred_check
          %p271 = pneg %p127
        $region26: #{vgg_loss.1} parent=11 // pred_check_branch
          %273 = sbr.rel (%p271) target = $region28
        $region27: #{vgg_loss.1} parent=11 // pred_region
          _
        $region28: #{vgg_loss.1} parent=11 // pred_fallthru
          _
        // Predicated region
        $region29: #{vgg_loss.1} parent=11 // pred_check
          %p274 = pneg %p148
        $region30: #{vgg_loss.1} parent=11 // pred_check_branch
          %276 = sbr.rel (%p274) target = $region32
        $region31: #{vgg_loss.1} parent=11 // pred_region
          %s278 = ssub.s32 6144, 6144
          %279 = vsyncadd [#allocation5], %s278
          %s280 = sshll.u32 [#allocation4], 4
          %s281 = int_to_ptr.vmem [resolvable:$true] %s280
          %286 = dma.hbm_to_vmem [thread:$0]  %s5, 6144, %s281, [#allocation5], 128, 128, 8
        $region32: #{vgg_loss.1} parent=11 // pred_fallthru
          _
        // Predicated region
        $region33: #{vgg_loss.1} parent=11 // pred_check
          %p287 = pneg %p169
        $region34: #{vgg_loss.1} parent=11 // pred_check_branch
          %289 = sbr.rel (%p287) target = $region36
        $region35: #{vgg_loss.1} parent=11 // pred_region
          _
        $region36: #{vgg_loss.1} parent=11 // pred_fallthru
          _
        // Predicated region
        $region37: #{vgg_loss.1} parent=11 // pred_check
          %p290 = pneg %p190
        $region38: #{vgg_loss.1} parent=11 // pred_check_branch
          %292 = sbr.rel (%p290) target = $region40
        $region39: #{vgg_loss.1} parent=11 // pred_region
          %s294 = ssub.s32 12288, 12288
          %295 = vsyncadd [#allocation5], %s294
          %s296 = sshll.u32 [#allocation6], 4
          %s297 = int_to_ptr.vmem [resolvable:$true] %s296
          %302 = dma.hbm_to_vmem [thread:$0]  %s7, 12288, %s297, [#allocation5], 128, 128, 8
        $region40: #{vgg_loss.1} parent=11 // pred_fallthru
          _
        // Predicated region
        $region41: #{vgg_loss.1} parent=11 // pred_check
          %p303 = pneg %p211
        $region42: #{vgg_loss.1} parent=11 // pred_check_branch
          %305 = sbr.rel (%p303) target = $region44
        $region43: #{vgg_loss.1} parent=11 // pred_region
          _
        $region44: #{vgg_loss.1} parent=11 // pred_fallthru
          _
      $region12: #{vgg_loss.1} parent=5 // pred_fallthru
        _
      %p306 = scmp.lt.s32.totalorder %s17, 2
      // Predicated region
      $region45: #{vgg_loss.1} parent=5 // pred_check
        %p307 = pneg %p306
      $region46: #{vgg_loss.1} parent=5 // pred_check_branch
        %309 = sbr.rel (%p307) target = $region48
      $region47: #{vgg_loss.1} parent=5 // pred_region
        // Predicated region
        $region49: #{vgg_loss.1} parent=47 // pred_check
          %p310 = pneg %p37
        $region50: #{vgg_loss.1} parent=47 // pred_check_branch
          %312 = sbr.rel (%p310) target = $region52
        $region51: #{vgg_loss.1} parent=47 // pred_region
          %s313 = smul.u32 8, %s17
          %p314 = scmp.lt.s32.totalorder %s313, 15
          %s315 = scalar_select %p314, %s313, 15
          %s316 = smul.addr %s315, 8
          %s317 = scalar_lea.vmem %s0, %s316
          %s318 = smul.u32 8, %s17
        $region52: #{vgg_loss.1} parent=47 // pred_fallthru
          _
      $region48: #{vgg_loss.1} parent=5 // pred_fallthru
        _
      %p319 = scmp.le.s32.totalorder 1, %s17
      %p320 = scmp.lt.s32.totalorder %s17, 3
      %p321 = pnand %p319, %p320
      %p322 = pneg %p321
      // Predicated region
      $region53: #{vgg_loss.1} parent=5 // pred_check
        _
      $region54: #{vgg_loss.1} parent=5 // pred_check_branch
        %324 = sbr.rel (%p321) target = $region56
      $region55: #{vgg_loss.1} parent=5 // pred_region
        %s325 = ssub.s32 %s17, 1
        // Predicated region
        $region57: #{vgg_loss.1} parent=55 // pred_check
          %p326 = pneg %p106
        $region58: #{vgg_loss.1} parent=55 // pred_check_branch
          %328 = sbr.rel (%p326) target = $region60
        $region59: #{vgg_loss.1} parent=55 // pred_region
          %329 = dma.done [#allocation3], 6144
        $region60: #{vgg_loss.1} parent=55 // pred_fallthru
          _
        // Predicated region
        $region61: #{vgg_loss.1} parent=55 // pred_check
          %p330 = pneg %p148
        $region62: #{vgg_loss.1} parent=55 // pred_check_branch
          %332 = sbr.rel (%p330) target = $region64
        $region63: #{vgg_loss.1} parent=55 // pred_region
          %333 = dma.done [#allocation5], 6144
        $region64: #{vgg_loss.1} parent=55 // pred_fallthru
          _
        // Predicated region
        $region65: #{vgg_loss.1} parent=55 // pred_check
          %p334 = pneg %p190
        $region66: #{vgg_loss.1} parent=55 // pred_check_branch
          %336 = sbr.rel (%p334) target = $region68
        $region67: #{vgg_loss.1} parent=55 // pred_region
          %337 = dma.done [#allocation5], 12288
        $region68: #{vgg_loss.1} parent=55 // pred_fallthru
          _
        %s338 = smul.u32 8, %s22
        %p339 = scmp.lt.s32.totalorder %s338, 15
        %s340 = scalar_select %p339, %s338, 15
        %s341 = smul.addr %s340, 8
        %s342 = scalar_lea.vmem %s0, %s341
        %p343 = pneg %p43
        %p344 = pneg %p40
        %p345 = pneg %p64
        %p346 = pneg %p61
        %p347 = pneg %p85
        %p348 = pneg %p82
        %p349 = pneg %p106
        %p350 = pneg %p103
        %p351 = pneg %p127
        %p352 = pneg %p124
        %p353 = pneg %p148
        %p354 = pneg %p145
        %p355 = pneg %p169
        %p356 = pneg %p166
        %p357 = pneg %p190
        %p358 = pneg %p187
        %p359 = pneg %p211
        %p360 = pneg %p208
        %p361 = pneg %p237
        %p362 = pneg %p234
        %p363 = scmp.lt.s32.totalorder %s22, 1
        %s364 = scalar_select %p363, %s22, 1
        %s365 = smul.addr %s364, 2
        %s366 = smul.addr %s365, 4
        %s367 = scalar_lea.vmem %s9, %s366
        %s368 = smul.u32 8, %s22
        %p369 = scmp.lt.s32.totalorder %s368, 15
        %s370 = scalar_select %p369, %s368, 15
        %s371 = smul.addr %s370, 8
        %s372 = scalar_lea.vmem %s0, %s371
        %s373 = smul.u32 8, %s22
        %p374 = scmp.lt.s32.totalorder %s22, 1
        %s375 = scalar_select %p374, %s22, 1
        %s376 = smul.addr %s375, 2
        %s377 = smul.addr %s376, 4
        %s378 = scalar_lea.vmem %s9, %s377
        %v380 = vld [vmem:[%s372] sm:$0xff]
        %v381 = vld [vmem:[%s372 + $0x8] sm:$0xff]
        %v382 = vld [vmem:[%s372 + $0x10] sm:$0xff]
        %v383 = vld [vmem:[%s372 + $0x18] sm:$0xff]
        %v384 = vld [vmem:[%s372 + $0x20] sm:$0xff]
        %v385 = vld [vmem:[%s372 + $0x28] sm:$0xff]
        %v386 = vld [vmem:[%s372 + $0x30] sm:$0xff]
        %v387 = vld [vmem:[%s372 + $0x38] sm:$0xff]
        %v388 = vld [vmem:[%s8] ss:$8 sm:$0x3]
        %v389 = vlaneseq
        %v390 = vshrl.u32 %v389, 7
        %v391 = vadd.s32 %v390, 8
        %v392 = vadd.s32 %v390, 16
        %v393 = vadd.s32 %v390, 24
        %v394 = vadd.s32 %v390, 32
        %v395 = vadd.s32 %v390, 40
        %v396 = vadd.s32 %v390, 48
        %v397 = vadd.s32 %v390, 56
        %vm398 = vcmp.lt.s32.totalorder %v390, 0
        %v399 = vsub.s32 0, %v390
        %v400 = vsel %vm398, %v399, %v390
        %v401 = vshrl.u32 %v400, 5
        %v402 = vand.u32 %v400, 31
        %v403 = vsub.s32 0, %v402
        %v404 = vsel %vm398, %v403, %v402
        %vm405 = vcmp.lt.s32.totalorder %v391, 0
        %v406 = vsub.s32 0, %v391
        %v407 = vsel %vm405, %v406, %v391
        %v408 = vshrl.u32 %v407, 5
        %v409 = vand.u32 %v407, 31
        %v410 = vsub.s32 0, %v409
        %v411 = vsel %vm405, %v410, %v409
        %vm412 = vcmp.lt.s32.totalorder %v392, 0
        %v413 = vsub.s32 0, %v392
        %v414 = vsel %vm412, %v413, %v392
        %v415 = vshrl.u32 %v414, 5
        %v416 = vand.u32 %v414, 31
        %v417 = vsub.s32 0, %v416
        %v418 = vsel %vm412, %v417, %v416
        %vm419 = vcmp.lt.s32.totalorder %v393, 0
        %v420 = vsub.s32 0, %v393
        %v421 = vsel %vm419, %v420, %v393
        %v422 = vshrl.u32 %v421, 5
        %v423 = vand.u32 %v421, 31
        %v424 = vsub.s32 0, %v423
        %v425 = vsel %vm419, %v424, %v423
        %vm426 = vcmp.lt.s32.totalorder %v394, 0
        %v427 = vsub.s32 0, %v394
        %v428 = vsel %vm426, %v427, %v394
        %v429 = vshrl.u32 %v428, 5
        %v430 = vand.u32 %v428, 31
        %v431 = vsub.s32 0, %v430
        %v432 = vsel %vm426, %v431, %v430
        %vm433 = vcmp.lt.s32.totalorder %v395, 0
        %v434 = vsub.s32 0, %v395
        %v435 = vsel %vm433, %v434, %v395
        %v436 = vshrl.u32 %v435, 5
        %v437 = vand.u32 %v435, 31
        %v438 = vsub.s32 0, %v437
        %v439 = vsel %vm433, %v438, %v437
        %vm440 = vcmp.lt.s32.totalorder %v396, 0
        %v441 = vsub.s32 0, %v396
        %v442 = vsel %vm440, %v441, %v396
        %v443 = vshrl.u32 %v442, 5
        %v444 = vand.u32 %v442, 31
        %v445 = vsub.s32 0, %v444
        %v446 = vsel %vm440, %v445, %v444
        %vm447 = vcmp.lt.s32.totalorder %v397, 0
        %v448 = vsub.s32 0, %v397
        %v449 = vsel %vm447, %v448, %v397
        %v450 = vshrl.u32 %v449, 5
        %v451 = vand.u32 %v449, 31
        %v452 = vsub.s32 0, %v451
        %v453 = vsel %vm447, %v452, %v451
        %vm454 = vcmp.ne.s32.totalorder %v404, 0
        %vm455 = vcmp.ne.s32.totalorder %v411, 0
        %vm456 = vcmp.ne.s32.totalorder %v418, 0
        %vm457 = vcmp.ne.s32.totalorder %v425, 0
        %vm458 = vcmp.ne.s32.totalorder %v432, 0
        %vm459 = vcmp.ne.s32.totalorder %v439, 0
        %vm460 = vcmp.ne.s32.totalorder %v446, 0
        %vm461 = vcmp.ne.s32.totalorder %v453, 0
        %vm462 = vcmp.lt.s32.totalorder %v404, 0
        %vm463 = vcmp.lt.s32.totalorder %v411, 0
        %vm464 = vcmp.lt.s32.totalorder %v418, 0
        %vm465 = vcmp.lt.s32.totalorder %v425, 0
        %vm466 = vcmp.lt.s32.totalorder %v432, 0
        %vm467 = vcmp.lt.s32.totalorder %v439, 0
        %vm468 = vcmp.lt.s32.totalorder %v446, 0
        %vm469 = vcmp.lt.s32.totalorder %v453, 0
        %vm470 = vmand %vm462, %vm454
        %vm471 = vmand %vm463, %vm455
        %vm472 = vmand %vm464, %vm456
        %vm473 = vmand %vm465, %vm457
        %vm474 = vmand %vm466, %vm458
        %vm475 = vmand %vm467, %vm459
        %vm476 = vmand %vm468, %vm460
        %vm477 = vmand %vm469, %vm461
        %v478 = vadd.s32 %v404, 32
        %v479 = vadd.s32 %v411, 32
        %v480 = vadd.s32 %v418, 32
        %v481 = vadd.s32 %v425, 32
        %v482 = vadd.s32 %v432, 32
        %v483 = vadd.s32 %v439, 32
        %v484 = vadd.s32 %v446, 32
        %v485 = vadd.s32 %v453, 32
        %v486 = vsel %vm470, %v478, %v404
        %v487 = vsel %vm471, %v479, %v411
        %v488 = vsel %vm472, %v480, %v418
        %v489 = vsel %vm473, %v481, %v425
        %v490 = vsel %vm474, %v482, %v432
        %v491 = vsel %vm475, %v483, %v439
        %v492 = vsel %vm476, %v484, %v446
        %v493 = vsel %vm477, %v485, %v453
        %vm494 = vcmp.eq.s32.totalorder %v486, 0
        %vm495 = vcmp.eq.s32.totalorder %v487, 0
        %vm496 = vcmp.eq.s32.totalorder %v488, 0
        %vm497 = vcmp.eq.s32.totalorder %v489, 0
        %vm498 = vcmp.eq.s32.totalorder %v490, 0
        %vm499 = vcmp.eq.s32.totalorder %v491, 0
        %vm500 = vcmp.eq.s32.totalorder %v492, 0
        %vm501 = vcmp.eq.s32.totalorder %v493, 0
        %v502 = vrot.slane %v380, 7
        %v503 = vrot.slane %v381, 7
        %v504 = vrot.slane %v382, 7
        %v505 = vrot.slane %v383, 7
        %v506 = vrot.slane %v384, 7
        %v507 = vrot.slane %v385, 7
        %v508 = vrot.slane %v386, 7
        %v509 = vrot.slane %v387, 7
        %vm510 = vcmp.lt.s32.totalorder %v390, 1
        %v511 = vsel %vm510, %v508, %v509
        %v512 = vsel %vm510, %v507, %v508
        %v513 = vsel %vm510, %v506, %v507
        %v514 = vsel %vm510, %v505, %v506
        %v515 = vsel %vm510, %v504, %v505
        %v516 = vsel %vm510, %v503, %v504
        %v517 = vsel %vm510, %v502, %v503
        %v518 = vsel %vm510, %v509, %v502
        %v519 = vsel %vm494, 0.0, %v518
        %v520 = vsel %vm495, 0.0, %v517
        %v521 = vsel %vm496, 0.0, %v516
        %v522 = vsel %vm497, 0.0, %v515
        %v523 = vsel %vm498, 0.0, %v514
        %v524 = vsel %vm499, 0.0, %v513
        %v525 = vsel %vm500, 0.0, %v512
        %v526 = vsel %vm501, 0.0, %v511
        %vm527 = vcmp.eq.s32.totalorder %v486, 31
        %vm528 = vcmp.eq.s32.totalorder %v487, 31
        %vm529 = vcmp.eq.s32.totalorder %v488, 31
        %vm530 = vcmp.eq.s32.totalorder %v489, 31
        %vm531 = vcmp.eq.s32.totalorder %v490, 31
        %vm532 = vcmp.eq.s32.totalorder %v491, 31
        %vm533 = vcmp.eq.s32.totalorder %v492, 31
        %vm534 = vcmp.eq.s32.totalorder %v493, 31
        %v535 = vrot.slane %v380, 1
        %v536 = vrot.slane %v381, 1
        %v537 = vrot.slane %v382, 1
        %v538 = vrot.slane %v383, 1
        %v539 = vrot.slane %v384, 1
        %v540 = vrot.slane %v385, 1
        %v541 = vrot.slane %v386, 1
        %v542 = vrot.slane %v387, 1
        %vm543 = vcmp.lt.s32.totalorder %v390, 7
        %v544 = vsel %vm543, %v541, %v542
        %v545 = vsel %vm543, %v540, %v541
        %v546 = vsel %vm543, %v539, %v540
        %v547 = vsel %vm543, %v538, %v539
        %v548 = vsel %vm543, %v537, %v538
        %v549 = vsel %vm543, %v536, %v537
        %v550 = vsel %vm543, %v535, %v536
        %v551 = vsel %vm543, %v542, %v535
        %v552 = vsel %vm527, 0.0, %v550
        %v553 = vsel %vm528, 0.0, %v549
        %v554 = vsel %vm529, 0.0, %v548
        %v555 = vsel %vm530, 0.0, %v547
        %v556 = vsel %vm531, 0.0, %v546
        %v557 = vsel %vm532, 0.0, %v545
        %v558 = vsel %vm533, 0.0, %v544
        %v559 = vsel %vm534, 0.0, %v551
        %v560 = vpack.c.bf16 %v520, %v519
        %v561 = vpack.c.bf16 %v381, %v380
        %v562 = vpack.c.bf16 %v553, %v552
        %v563 = vpack.c.bf16 %v522, %v521
        %v564 = vpack.c.bf16 %v383, %v382
        %v565 = vpack.c.bf16 %v555, %v554
        %v566 = vpack.c.bf16 %v524, %v523
        %v567 = vpack.c.bf16 %v385, %v384
        %v568 = vpack.c.bf16 %v557, %v556
        %v569 = vpack.c.bf16 %v526, %v525
        %v570 = vpack.c.bf16 %v387, %v386
        %v571 = vpack.c.bf16 %v559, %v558
        %v572 = vld [vmem:[%s1] sm:$0xff]
        %v573 = vld [vmem:[%s1 + $0x8] sm:$0xff]
        %v574 = vld [vmem:[%s1 + $0x10] sm:$0xff]
        %v575 = vld [vmem:[%s1 + $0x18] sm:$0xff]
        %v576 = vld [vmem:[%s1 + $0x20] sm:$0xff]
        %v577 = vld [vmem:[%s1 + $0x28] sm:$0xff]
        %v578 = vld [vmem:[%s1 + $0x30] sm:$0xff]
        %v579 = vld [vmem:[%s1 + $0x38] sm:$0xff]
        %v580 = vld [vmem:[%s1 + $0x40] sm:$0xff]
        %v581 = vld [vmem:[%s1 + $0x48] sm:$0xff]
        %v582 = vld [vmem:[%s1 + $0x50] sm:$0xff]
        %v583 = vld [vmem:[%s1 + $0x58] sm:$0xff]
        %v584 = vld [vmem:[%s1 + $0x60] sm:$0xff]
        %v585 = vld [vmem:[%s1 + $0x68] sm:$0xff]
        %v586 = vld [vmem:[%s1 + $0x70] sm:$0xff]
        %v587 = vld [vmem:[%s1 + $0x78] sm:$0xff]
        %v588 = vld [vmem:[%s1 + $0x80] sm:$0xff]
        %v589 = vld [vmem:[%s1 + $0x88] sm:$0xff]
        %v590 = vld [vmem:[%s1 + $0x90] sm:$0xff]
        %v591 = vld [vmem:[%s1 + $0x98] sm:$0xff]
        %v592 = vld [vmem:[%s1 + $0xa0] sm:$0xff]
        %v593 = vld [vmem:[%s1 + $0xa8] sm:$0xff]
        %v594 = vld [vmem:[%s1 + $0xb0] sm:$0xff]
        %v595 = vld [vmem:[%s1 + $0xb8] sm:$0xff]
        %v596 = vld [vmem:[%s1 + $0xc0] sm:$0xff]
        %v597 = vld [vmem:[%s1 + $0xc8] sm:$0xff]
        %v598 = vld [vmem:[%s1 + $0xd0] sm:$0xff]
        %v599 = vld [vmem:[%s1 + $0xd8] sm:$0xff]
        %v600 = vld [vmem:[%s1 + $0xe0] sm:$0xff]
        %v601 = vld [vmem:[%s1 + $0xe8] sm:$0xff]
        %v602 = vld [vmem:[%s1 + $0xf0] sm:$0xff]
        %v603 = vld [vmem:[%s1 + $0xf8] sm:$0xff]
        %v604 = vld [vmem:[%s1 + $0x100] sm:$0xff]
        %v605 = vld [vmem:[%s1 + $0x108] sm:$0xff]
        %v606 = vld [vmem:[%s1 + $0x110] sm:$0xff]
        %v607 = vld [vmem:[%s1 + $0x118] sm:$0xff]
        %v608 = vld [vmem:[%s1 + $0x120] sm:$0xff]
        %v609 = vld [vmem:[%s1 + $0x128] sm:$0xff]
        %v610 = vld [vmem:[%s1 + $0x130] sm:$0xff]
        %v611 = vld [vmem:[%s1 + $0x138] sm:$0xff]
        %v612 = vld [vmem:[%s1 + $0x140] sm:$0xff]
        %v613 = vld [vmem:[%s1 + $0x148] sm:$0xff]
        %v614 = vld [vmem:[%s1 + $0x150] sm:$0xff]
        %v615 = vld [vmem:[%s1 + $0x158] sm:$0xff]
        %v616 = vld [vmem:[%s1 + $0x160] sm:$0xff]
        %v617 = vld [vmem:[%s1 + $0x168] sm:$0xff]
        %v618 = vld [vmem:[%s1 + $0x170] sm:$0xff]
        %v619 = vld [vmem:[%s1 + $0x178] sm:$0xff]
        %v621 = vlaneseq
        %v622 = vshrl.u32 %v621, 7
        %v623 = vsub.s32 0, %v622
        %v624 = vrot.slane %v388, %v623
        %v625 = vlaneseq
        %v626 = vshrl.u32 %v625, 7
        %v627 = vsub.s32 1, %v626
        %v628 = vrot.slane %v388, %v627
        %v679 = vunpack.c.l.b16 %v572
        %v680 = vunpack.c.h.b16 %v572
        %v681 = vunpack.c.l.b16 %v573
        %v682 = vunpack.c.h.b16 %v573
        %v683 = vunpack.c.l.b16 %v574
        %v684 = vunpack.c.h.b16 %v574
        %v685 = vunpack.c.l.b16 %v575
        %v686 = vunpack.c.h.b16 %v575
        %v687 = vunpack.c.l.b16 %v576
        %v688 = vunpack.c.h.b16 %v576
        %v689 = vunpack.c.l.b16 %v577
        %v690 = vunpack.c.h.b16 %v577
        %v691 = vunpack.c.l.b16 %v578
        %v692 = vunpack.c.h.b16 %v578
        %v693 = vunpack.c.l.b16 %v579
        %v694 = vunpack.c.h.b16 %v579
        %v695 = vunpack.c.l.b16 %v580
        %v696 = vunpack.c.h.b16 %v580
        %v697 = vunpack.c.l.b16 %v581
        %v698 = vunpack.c.h.b16 %v581
        %v699 = vunpack.c.l.b16 %v582
        %v700 = vunpack.c.h.b16 %v582
        %v701 = vunpack.c.l.b16 %v583
        %v702 = vunpack.c.h.b16 %v583
        %v703 = vunpack.c.l.b16 %v584
        %v704 = vunpack.c.h.b16 %v584
        %v705 = vunpack.c.l.b16 %v585
        %v706 = vunpack.c.h.b16 %v585
        %v707 = vunpack.c.l.b16 %v586
        %v708 = vunpack.c.h.b16 %v586
        %v709 = vunpack.c.l.b16 %v587
        %v710 = vunpack.c.h.b16 %v587
        %v711 = vunpack.c.l.b16 %v588
        %v712 = vunpack.c.h.b16 %v588
        %v713 = vunpack.c.l.b16 %v589
        %v714 = vunpack.c.h.b16 %v589
        %v715 = vunpack.c.l.b16 %v590
        %v716 = vunpack.c.h.b16 %v590
        %v717 = vunpack.c.l.b16 %v591
        %v718 = vunpack.c.h.b16 %v591
        %v719 = vunpack.c.l.b16 %v592
        %v720 = vunpack.c.h.b16 %v592
        %v721 = vunpack.c.l.b16 %v593
        %v722 = vunpack.c.h.b16 %v593
        %v723 = vunpack.c.l.b16 %v594
        %v724 = vunpack.c.h.b16 %v594
        %v725 = vunpack.c.l.b16 %v595
        %v726 = vunpack.c.h.b16 %v595
        %v727 = vunpack.c.l.b16 %v596
        %v728 = vunpack.c.h.b16 %v596
        %v729 = vunpack.c.l.b16 %v597
        %v730 = vunpack.c.h.b16 %v597
        %v731 = vunpack.c.l.b16 %v598
        %v732 = vunpack.c.h.b16 %v598
        %v733 = vunpack.c.l.b16 %v599
        %v734 = vunpack.c.h.b16 %v599
        %v735 = vunpack.c.l.b16 %v600
        %v736 = vunpack.c.h.b16 %v600
        %v737 = vunpack.c.l.b16 %v601
        %v738 = vunpack.c.h.b16 %v601
        %v739 = vunpack.c.l.b16 %v602
        %v740 = vunpack.c.h.b16 %v602
        %v741 = vunpack.c.l.b16 %v603
        %v742 = vunpack.c.h.b16 %v603
        %v743 = vunpack.c.l.b16 %v604
        %v744 = vunpack.c.h.b16 %v604
        %v745 = vunpack.c.l.b16 %v605
        %v746 = vunpack.c.h.b16 %v605
        %v747 = vunpack.c.l.b16 %v606
        %v748 = vunpack.c.h.b16 %v606
        %v749 = vunpack.c.l.b16 %v607
        %v750 = vunpack.c.h.b16 %v607
        %v751 = vunpack.c.l.b16 %v608
        %v752 = vunpack.c.h.b16 %v608
        %v753 = vunpack.c.l.b16 %v609
        %v754 = vunpack.c.h.b16 %v609
        %v755 = vunpack.c.l.b16 %v610
        %v756 = vunpack.c.h.b16 %v610
        %v757 = vunpack.c.l.b16 %v611
        %v758 = vunpack.c.h.b16 %v611
        %v759 = vunpack.c.l.b16 %v612
        %v760 = vunpack.c.h.b16 %v612
        %v761 = vunpack.c.l.b16 %v613
        %v762 = vunpack.c.h.b16 %v613
        %v763 = vunpack.c.l.b16 %v614
        %v764 = vunpack.c.h.b16 %v614
        %v765 = vunpack.c.l.b16 %v615
        %v766 = vunpack.c.h.b16 %v615
        %v767 = vunpack.c.l.b16 %v616
        %v768 = vunpack.c.h.b16 %v616
        %v769 = vunpack.c.l.b16 %v617
        %v770 = vunpack.c.h.b16 %v617
        %v771 = vunpack.c.l.b16 %v618
        %v772 = vunpack.c.h.b16 %v618
        %v773 = vunpack.c.l.b16 %v619
        %v774 = vunpack.c.h.b16 %v619
        %v775 = vpack.c.b16 %v681, %v679
        %v776 = vpack.c.b16 %v682, %v680
        %v777 = vpack.c.b16 %v685, %v683
        %v778 = vpack.c.b16 %v686, %v684
        %v779 = vpack.c.b16 %v689, %v687
        %v780 = vpack.c.b16 %v690, %v688
        %v781 = vpack.c.b16 %v693, %v691
        %v782 = vpack.c.b16 %v694, %v692
        %v783 = vpack.c.b16 %v697, %v695
        %v784 = vpack.c.b16 %v698, %v696
        %v785 = vpack.c.b16 %v701, %v699
        %v786 = vpack.c.b16 %v702, %v700
        %v787 = vpack.c.b16 %v705, %v703
        %v788 = vpack.c.b16 %v706, %v704
        %v789 = vpack.c.b16 %v709, %v707
        %v790 = vpack.c.b16 %v710, %v708
        %v791 = vpack.c.b16 %v713, %v711
        %v792 = vpack.c.b16 %v714, %v712
        %v793 = vpack.c.b16 %v717, %v715
        %v794 = vpack.c.b16 %v718, %v716
        %v795 = vpack.c.b16 %v721, %v719
        %v796 = vpack.c.b16 %v722, %v720
        %v797 = vpack.c.b16 %v725, %v723
        %v798 = vpack.c.b16 %v726, %v724
        %v799 = vpack.c.b16 %v729, %v727
        %v800 = vpack.c.b16 %v730, %v728
        %v801 = vpack.c.b16 %v733, %v731
        %v802 = vpack.c.b16 %v734, %v732
        %v803 = vpack.c.b16 %v737, %v735
        %v804 = vpack.c.b16 %v738, %v736
        %v805 = vpack.c.b16 %v741, %v739
        %v806 = vpack.c.b16 %v742, %v740
        %v807 = vpack.c.b16 %v745, %v743
        %v808 = vpack.c.b16 %v746, %v744
        %v809 = vpack.c.b16 %v749, %v747
        %v810 = vpack.c.b16 %v750, %v748
        %v811 = vpack.c.b16 %v753, %v751
        %v812 = vpack.c.b16 %v754, %v752
        %v813 = vpack.c.b16 %v757, %v755
        %v814 = vpack.c.b16 %v758, %v756
        %v815 = vpack.c.b16 %v761, %v759
        %v816 = vpack.c.b16 %v762, %v760
        %v817 = vpack.c.b16 %v765, %v763
        %v818 = vpack.c.b16 %v766, %v764
        %v819 = vpack.c.b16 %v769, %v767
        %v820 = vpack.c.b16 %v770, %v768
        %v821 = vpack.c.b16 %v773, %v771
        %v822 = vpack.c.b16 %v774, %v772
        %871 = vmatprep.subr.bf16.mxu0 %v790
        %872 = vmatpush1.bf16.msra.mxu0 %v789
        %873 = vmatprep.subr.bf16.mxu0 %v788
        %874 = vmatpush1.bf16.msra.mxu0 %v787
        %875 = vmatprep.subr.bf16.mxu0 %v786
        %876 = vmatpush1.bf16.msra.mxu0 %v785
        %877 = vmatprep.subr.bf16.mxu0 %v784
        %878 = vmatpush1.bf16.msra.mxu0 %v783
        %879 = vmatprep.subr.bf16.mxu0 %v782
        %880 = vmatpush1.bf16.msra.mxu0 %v781
        %881 = vmatprep.subr.bf16.mxu0 %v780
        %882 = vmatpush1.bf16.msra.mxu0 %v779
        %883 = vmatprep.subr.bf16.mxu0 %v778
        %884 = vmatpush1.bf16.msra.mxu0 %v777
        %885 = vmatprep.subr.bf16.mxu0 %v776
        %886 = vmatpush1.bf16.msra.mxu0 %v775
        %887 = vmatprep.subr.bf16.mxu0 %v806
        %888 = vmatpush2.bf16.msra.mxu0 %v805
        %889 = vmatprep.subr.bf16.mxu0 %v804
        %890 = vmatpush2.bf16.msra.mxu0 %v803
        %891 = vmatprep.subr.bf16.mxu0 %v802
        %892 = vmatpush2.bf16.msra.mxu0 %v801
        %893 = vmatprep.subr.bf16.mxu0 %v800
        %894 = vmatpush2.bf16.msra.mxu0 %v799
        %895 = vmatprep.subr.bf16.mxu0 %v798
        %896 = vmatpush2.bf16.msra.mxu0 %v797
        %897 = vmatprep.subr.bf16.mxu0 %v796
        %898 = vmatpush2.bf16.msra.mxu0 %v795
        %899 = vmatprep.subr.bf16.mxu0 %v794
        %900 = vmatpush2.bf16.msra.mxu0 %v793
        %901 = vmatprep.subr.bf16.mxu0 %v792
        %902 = vmatpush2.bf16.msra.mxu0 %v791
        %903 = vmatprep.mubr.bf16.mxu0 %v561
        %904 = vmatmul.mubr.bf16.gmra.mxu0 %v560
        %v905 = vpop.f32.mrf.mxu0
        %v906 = vadd.f32 %v624, %v905
        %v907 = vpop.f32.mrf.mxu0
        %v908 = vadd.f32 %v628, %v907
        %v909 = vpop.f32.mrf.mxu0
        %v910 = vadd.f32 %v624, %v909
        %v911 = vpop.f32.mrf.mxu0
        %v912 = vadd.f32 %v628, %v911
        %913 = vmatprep.mubr.bf16.mxu0 %v564
        %914 = vmatmul.mubr.bf16.gmra.mxu0 %v563
        %v915 = vpop.f32.mrf.mxu0
        %v916 = vadd.f32 %v624, %v915
        %v917 = vpop.f32.mrf.mxu0
        %v918 = vadd.f32 %v628, %v917
        %v919 = vpop.f32.mrf.mxu0
        %v920 = vadd.f32 %v624, %v919
        %v921 = vpop.f32.mrf.mxu0
        %v922 = vadd.f32 %v628, %v921
        %923 = vmatprep.mubr.bf16.mxu0 %v567
        %924 = vmatmul.mubr.bf16.gmra.mxu0 %v566
        %v925 = vpop.f32.mrf.mxu0
        %v926 = vadd.f32 %v624, %v925
        %v927 = vpop.f32.mrf.mxu0
        %v928 = vadd.f32 %v628, %v927
        %v929 = vpop.f32.mrf.mxu0
        %v930 = vadd.f32 %v624, %v929
        %v931 = vpop.f32.mrf.mxu0
        %v932 = vadd.f32 %v628, %v931
        %933 = vmatprep.mubr.bf16.mxu0 %v570
        %934 = vmatmul.mubr.bf16.gmra.mxu0 %v569
        %v935 = vpop.f32.mrf.mxu0
        %v936 = vadd.f32 %v624, %v935
        %v937 = vpop.f32.mrf.mxu0
        %v938 = vadd.f32 %v628, %v937
        %v939 = vpop.f32.mrf.mxu0
        %v940 = vadd.f32 %v624, %v939
        %v941 = vpop.f32.mrf.mxu0
        %v942 = vadd.f32 %v628, %v941
        %943 = vdwg.mxu0
        %944 = vmatprep.subr.bf16.mxu0 %v822
        %945 = vmatpush1.bf16.msra.mxu0 %v821
        %946 = vmatprep.subr.bf16.mxu0 %v820
        %947 = vmatpush1.bf16.msra.mxu0 %v819
        %948 = vmatprep.subr.bf16.mxu0 %v818
        %949 = vmatpush1.bf16.msra.mxu0 %v817
        %950 = vmatprep.subr.bf16.mxu0 %v816
        %951 = vmatpush1.bf16.msra.mxu0 %v815
        %952 = vmatprep.subr.bf16.mxu0 %v814
        %953 = vmatpush1.bf16.msra.mxu0 %v813
        %954 = vmatprep.subr.bf16.mxu0 %v812
        %955 = vmatpush1.bf16.msra.mxu0 %v811
        %956 = vmatprep.subr.bf16.mxu0 %v810
        %957 = vmatpush1.bf16.msra.mxu0 %v809
        %958 = vmatprep.subr.bf16.mxu0 %v808
        %959 = vmatpush1.bf16.msra.mxu0 %v807
        %960 = vmatprep.subr.bf16.mxu0 0
        %961 = vmatpush2.bf16.msra.mxu0 0
        %962 = vmatprep.subr.bf16.mxu0 0
        %963 = vmatpush2.bf16.msra.mxu0 0
        %964 = vmatprep.subr.bf16.mxu0 0
        %965 = vmatpush2.bf16.msra.mxu0 0
        %966 = vmatprep.subr.bf16.mxu0 0
        %967 = vmatpush2.bf16.msra.mxu0 0
        %968 = vmatprep.subr.bf16.mxu0 0
        %969 = vmatpush2.bf16.msra.mxu0 0
        %970 = vmatprep.subr.bf16.mxu0 0
        %971 = vmatpush2.bf16.msra.mxu0 0
        %972 = vmatprep.subr.bf16.mxu0 0
        %973 = vmatpush2.bf16.msra.mxu0 0
        %974 = vmatprep.subr.bf16.mxu0 0
        %975 = vmatpush2.bf16.msra.mxu0 0
        %976 = vmatprep.mubr.bf16.mxu0 0
        %977 = vmatmul.mubr.bf16.gmra.mxu0 %v562
        %v978 = vpop.f32.mrf.mxu0
        %v979 = vadd.f32 %v906, %v978
        %v980 = vpop.f32.mrf.mxu0
        %v981 = vadd.f32 %v908, %v980
        %v982 = vpop.f32.mrf.mxu0
        %v983 = vadd.f32 %v910, %v982
        %v984 = vpop.f32.mrf.mxu0
        %v985 = vadd.f32 %v912, %v984
        %986 = vmatprep.mubr.bf16.mxu0 0
        %987 = vmatmul.mubr.bf16.gmra.mxu0 %v565
        %v988 = vpop.f32.mrf.mxu0
        %v989 = vadd.f32 %v916, %v988
        %v990 = vpop.f32.mrf.mxu0
        %v991 = vadd.f32 %v918, %v990
        %v992 = vpop.f32.mrf.mxu0
        %v993 = vadd.f32 %v920, %v992
        %v994 = vpop.f32.mrf.mxu0
        %v995 = vadd.f32 %v922, %v994
        %996 = vmatprep.mubr.bf16.mxu0 0
        %997 = vmatmul.mubr.bf16.gmra.mxu0 %v568
        %v998 = vpop.f32.mrf.mxu0
        %v999 = vadd.f32 %v926, %v998
        %v1000 = vpop.f32.mrf.mxu0
        %v1001 = vadd.f32 %v928, %v1000
        %v1002 = vpop.f32.mrf.mxu0
        %v1003 = vadd.f32 %v930, %v1002
        %v1004 = vpop.f32.mrf.mxu0
        %v1005 = vadd.f32 %v932, %v1004
        %1006 = vmatprep.mubr.bf16.mxu0 0
        %1007 = vmatmul.mubr.bf16.gmra.mxu0 %v571
        %v1008 = vpop.f32.mrf.mxu0
        %v1009 = vadd.f32 %v936, %v1008
        %v1010 = vpop.f32.mrf.mxu0
        %v1011 = vadd.f32 %v938, %v1010
        %v1012 = vpop.f32.mrf.mxu0
        %v1013 = vadd.f32 %v940, %v1012
        %v1014 = vpop.f32.mrf.mxu0
        %v1015 = vadd.f32 %v942, %v1014
        %1016 = vdwg.mxu0
        %v1017 = vmax.f32 %v979, 0.0
        %v1018 = vmax.f32 %v981, 0.0
        %v1019 = vmax.f32 %v983, 0.0
        %v1020 = vmax.f32 %v985, 0.0
        %v1021 = vmax.f32 %v989, 0.0
        %v1022 = vmax.f32 %v991, 0.0
        %v1023 = vmax.f32 %v993, 0.0
        %v1024 = vmax.f32 %v995, 0.0
        %v1025 = vmax.f32 %v999, 0.0
        %v1026 = vmax.f32 %v1001, 0.0
        %v1027 = vmax.f32 %v1003, 0.0
        %v1028 = vmax.f32 %v1005, 0.0
        %v1029 = vmax.f32 %v1009, 0.0
        %v1030 = vmax.f32 %v1011, 0.0
        %v1031 = vmax.f32 %v1013, 0.0
        %v1032 = vmax.f32 %v1015, 0.0
        %s1033 = scalar_lea.vmem %s8, 1
        %v1034 = vld [vmem:[%s1033] ss:$8 sm:$0x3]
        %v1035 = vrot.slane %v1017, 7
        %v1036 = vrot.slane %v1018, 7
        %v1037 = vrot.slane %v1019, 7
        %v1038 = vrot.slane %v1020, 7
        %v1039 = vrot.slane %v1021, 7
        %v1040 = vrot.slane %v1022, 7
        %v1041 = vrot.slane %v1023, 7
        %v1042 = vrot.slane %v1024, 7
        %v1043 = vrot.slane %v1025, 7
        %v1044 = vrot.slane %v1026, 7
        %v1045 = vrot.slane %v1027, 7
        %v1046 = vrot.slane %v1028, 7
        %v1047 = vrot.slane %v1029, 7
        %v1048 = vrot.slane %v1030, 7
        %v1049 = vrot.slane %v1031, 7
        %v1050 = vrot.slane %v1032, 7
        %v1051 = vsel %vm510, %v1047, %v1049
        %v1052 = vsel %vm510, %v1048, %v1050
        %v1053 = vsel %vm510, %v1045, %v1047
        %v1054 = vsel %vm510, %v1046, %v1048
        %v1055 = vsel %vm510, %v1043, %v1045
        %v1056 = vsel %vm510, %v1044, %v1046
        %v1057 = vsel %vm510, %v1041, %v1043
        %v1058 = vsel %vm510, %v1042, %v1044
        %v1059 = vsel %vm510, %v1039, %v1041
        %v1060 = vsel %vm510, %v1040, %v1042
        %v1061 = vsel %vm510, %v1037, %v1039
        %v1062 = vsel %vm510, %v1038, %v1040
        %v1063 = vsel %vm510, %v1035, %v1037
        %v1064 = vsel %vm510, %v1036, %v1038
        %v1065 = vsel %vm510, %v1049, %v1035
        %v1066 = vsel %vm510, %v1050, %v1036
        %v1067 = vsel %vm494, 0.0, %v1065
        %v1068 = vsel %vm494, 0.0, %v1066
        %v1069 = vsel %vm495, 0.0, %v1063
        %v1070 = vsel %vm495, 0.0, %v1064
        %v1071 = vsel %vm496, 0.0, %v1061
        %v1072 = vsel %vm496, 0.0, %v1062
        %v1073 = vsel %vm497, 0.0, %v1059
        %v1074 = vsel %vm497, 0.0, %v1060
        %v1075 = vsel %vm498, 0.0, %v1057
        %v1076 = vsel %vm498, 0.0, %v1058
        %v1077 = vsel %vm499, 0.0, %v1055
        %v1078 = vsel %vm499, 0.0, %v1056
        %v1079 = vsel %vm500, 0.0, %v1053
        %v1080 = vsel %vm500, 0.0, %v1054
        %v1081 = vsel %vm501, 0.0, %v1051
        %v1082 = vsel %vm501, 0.0, %v1052
        %v1083 = vrot.slane %v1017, 1
        %v1084 = vrot.slane %v1018, 1
        %v1085 = vrot.slane %v1019, 1
        %v1086 = vrot.slane %v1020, 1
        %v1087 = vrot.slane %v1021, 1
        %v1088 = vrot.slane %v1022, 1
        %v1089 = vrot.slane %v1023, 1
        %v1090 = vrot.slane %v1024, 1
        %v1091 = vrot.slane %v1025, 1
        %v1092 = vrot.slane %v1026, 1
        %v1093 = vrot.slane %v1027, 1
        %v1094 = vrot.slane %v1028, 1
        %v1095 = vrot.slane %v1029, 1
        %v1096 = vrot.slane %v1030, 1
        %v1097 = vrot.slane %v1031, 1
        %v1098 = vrot.slane %v1032, 1
        %v1099 = vsel %vm543, %v1095, %v1097
        %v1100 = vsel %vm543, %v1096, %v1098
        %v1101 = vsel %vm543, %v1093, %v1095
        %v1102 = vsel %vm543, %v1094, %v1096
        %v1103 = vsel %vm543, %v1091, %v1093
        %v1104 = vsel %vm543, %v1092, %v1094
        %v1105 = vsel %vm543, %v1089, %v1091
        %v1106 = vsel %vm543, %v1090, %v1092
        %v1107 = vsel %vm543, %v1087, %v1089
        %v1108 = vsel %vm543, %v1088, %v1090
        %v1109 = vsel %vm543, %v1085, %v1087
        %v1110 = vsel %vm543, %v1086, %v1088
        %v1111 = vsel %vm543, %v1083, %v1085
        %v1112 = vsel %vm543, %v1084, %v1086
        %v1113 = vsel %vm543, %v1097, %v1083
        %v1114 = vsel %vm543, %v1098, %v1084
        %v1115 = vsel %vm527, 0.0, %v1111
        %v1116 = vsel %vm527, 0.0, %v1112
        %v1117 = vsel %vm528, 0.0, %v1109
        %v1118 = vsel %vm528, 0.0, %v1110
        %v1119 = vsel %vm529, 0.0, %v1107
        %v1120 = vsel %vm529, 0.0, %v1108
        %v1121 = vsel %vm530, 0.0, %v1105
        %v1122 = vsel %vm530, 0.0, %v1106
        %v1123 = vsel %vm531, 0.0, %v1103
        %v1124 = vsel %vm531, 0.0, %v1104
        %v1125 = vsel %vm532, 0.0, %v1101
        %v1126 = vsel %vm532, 0.0, %v1102
        %v1127 = vsel %vm533, 0.0, %v1099
        %v1128 = vsel %vm533, 0.0, %v1100
        %v1129 = vsel %vm534, 0.0, %v1113
        %v1130 = vsel %vm534, 0.0, %v1114
        %v1131 = vpack.c.bf16 %v1069, %v1067
        %v1132 = vpack.c.bf16 %v1070, %v1068
        %v1133 = vpack.c.bf16 %v1019, %v1017
        %v1134 = vpack.c.bf16 %v1020, %v1018
        %v1135 = vpack.c.bf16 %v1117, %v1115
        %v1136 = vpack.c.bf16 %v1118, %v1116
        %v1137 = vpack.c.bf16 %v1073, %v1071
        %v1138 = vpack.c.bf16 %v1074, %v1072
        %v1139 = vpack.c.bf16 %v1023, %v1021
        %v1140 = vpack.c.bf16 %v1024, %v1022
        %v1141 = vpack.c.bf16 %v1121, %v1119
        %v1142 = vpack.c.bf16 %v1122, %v1120
        %v1143 = vpack.c.bf16 %v1077, %v1075
        %v1144 = vpack.c.bf16 %v1078, %v1076
        %v1145 = vpack.c.bf16 %v1027, %v1025
        %v1146 = vpack.c.bf16 %v1028, %v1026
        %v1147 = vpack.c.bf16 %v1125, %v1123
        %v1148 = vpack.c.bf16 %v1126, %v1124
        %v1149 = vpack.c.bf16 %v1081, %v1079
        %v1150 = vpack.c.bf16 %v1082, %v1080
        %v1151 = vpack.c.bf16 %v1031, %v1029
        %v1152 = vpack.c.bf16 %v1032, %v1030
        %v1153 = vpack.c.bf16 %v1129, %v1127
        %v1154 = vpack.c.bf16 %v1130, %v1128
        %v1155 = vld [vmem:[%s2] sm:$0xff]
        %v1156 = vld [vmem:[%s2 + $0x8] sm:$0xff]
        %v1157 = vld [vmem:[%s2 + $0x10] sm:$0xff]
        %v1158 = vld [vmem:[%s2 + $0x18] sm:$0xff]
        %v1159 = vld [vmem:[%s2 + $0x20] sm:$0xff]
        %v1160 = vld [vmem:[%s2 + $0x28] sm:$0xff]
        %v1161 = vld [vmem:[%s2 + $0x30] sm:$0xff]
        %v1162 = vld [vmem:[%s2 + $0x38] sm:$0xff]
        %v1163 = vld [vmem:[%s2 + $0x40] sm:$0xff]
        %v1164 = vld [vmem:[%s2 + $0x48] sm:$0xff]
        %v1165 = vld [vmem:[%s2 + $0x50] sm:$0xff]
        %v1166 = vld [vmem:[%s2 + $0x58] sm:$0xff]
        %v1167 = vld [vmem:[%s2 + $0x60] sm:$0xff]
        %v1168 = vld [vmem:[%s2 + $0x68] sm:$0xff]
        %v1169 = vld [vmem:[%s2 + $0x70] sm:$0xff]
        %v1170 = vld [vmem:[%s2 + $0x78] sm:$0xff]
        %v1171 = vld [vmem:[%s2 + $0x80] sm:$0xff]
        %v1172 = vld [vmem:[%s2 + $0x88] sm:$0xff]
        %v1173 = vld [vmem:[%s2 + $0x90] sm:$0xff]
        %v1174 = vld [vmem:[%s2 + $0x98] sm:$0xff]
        %v1175 = vld [vmem:[%s2 + $0xa0] sm:$0xff]
        %v1176 = vld [vmem:[%s2 + $0xa8] sm:$0xff]
        %v1177 = vld [vmem:[%s2 + $0xb0] sm:$0xff]
        %v1178 = vld [vmem:[%s2 + $0xb8] sm:$0xff]
        %v1179 = vld [vmem:[%s2 + $0xc0] sm:$0xff]
        %v1180 = vld [vmem:[%s2 + $0xc8] sm:$0xff]
        %v1181 = vld [vmem:[%s2 + $0xd0] sm:$0xff]
        %v1182 = vld [vmem:[%s2 + $0xd8] sm:$0xff]
        %v1183 = vld [vmem:[%s2 + $0xe0] sm:$0xff]
        %v1184 = vld [vmem:[%s2 + $0xe8] sm:$0xff]
        %v1185 = vld [vmem:[%s2 + $0xf0] sm:$0xff]
        %v1186 = vld [vmem:[%s2 + $0xf8] sm:$0xff]
        %v1187 = vld [vmem:[%s2 + $0x100] sm:$0xff]
        %v1188 = vld [vmem:[%s2 + $0x108] sm:$0xff]
        %v1189 = vld [vmem:[%s2 + $0x110] sm:$0xff]
        %v1190 = vld [vmem:[%s2 + $0x118] sm:$0xff]
        %v1191 = vld [vmem:[%s2 + $0x120] sm:$0xff]
        %v1192 = vld [vmem:[%s2 + $0x128] sm:$0xff]
        %v1193 = vld [vmem:[%s2 + $0x130] sm:$0xff]
        %v1194 = vld [vmem:[%s2 + $0x138] sm:$0xff]
        %v1195 = vld [vmem:[%s2 + $0x140] sm:$0xff]
        %v1196 = vld [vmem:[%s2 + $0x148] sm:$0xff]
        %v1197 = vld [vmem:[%s2 + $0x150] sm:$0xff]
        %v1198 = vld [vmem:[%s2 + $0x158] sm:$0xff]
        %v1199 = vld [vmem:[%s2 + $0x160] sm:$0xff]
        %v1200 = vld [vmem:[%s2 + $0x168] sm:$0xff]
        %v1201 = vld [vmem:[%s2 + $0x170] sm:$0xff]
        %v1202 = vld [vmem:[%s2 + $0x178] sm:$0xff]
        %v1203 = vld [vmem:[%s2 + $0x180] sm:$0xff]
        %v1204 = vld [vmem:[%s2 + $0x188] sm:$0xff]
        %v1205 = vld [vmem:[%s2 + $0x190] sm:$0xff]
        %v1206 = vld [vmem:[%s2 + $0x198] sm:$0xff]
        %v1207 = vld [vmem:[%s2 + $0x1a0] sm:$0xff]
        %v1208 = vld [vmem:[%s2 + $0x1a8] sm:$0xff]
        %v1209 = vld [vmem:[%s2 + $0x1b0] sm:$0xff]
        %v1210 = vld [vmem:[%s2 + $0x1b8] sm:$0xff]
        %v1211 = vld [vmem:[%s2 + $0x1c0] sm:$0xff]
        %v1212 = vld [vmem:[%s2 + $0x1c8] sm:$0xff]
        %v1213 = vld [vmem:[%s2 + $0x1d0] sm:$0xff]
        %v1214 = vld [vmem:[%s2 + $0x1d8] sm:$0xff]
        %v1215 = vld [vmem:[%s2 + $0x1e0] sm:$0xff]
        %v1216 = vld [vmem:[%s2 + $0x1e8] sm:$0xff]
        %v1217 = vld [vmem:[%s2 + $0x1f0] sm:$0xff]
        %v1218 = vld [vmem:[%s2 + $0x1f8] sm:$0xff]
        %v1219 = vld [vmem:[%s2 + $0x200] sm:$0xff]
        %v1220 = vld [vmem:[%s2 + $0x208] sm:$0xff]
        %v1221 = vld [vmem:[%s2 + $0x210] sm:$0xff]
        %v1222 = vld [vmem:[%s2 + $0x218] sm:$0xff]
        %v1223 = vld [vmem:[%s2 + $0x220] sm:$0xff]
        %v1224 = vld [vmem:[%s2 + $0x228] sm:$0xff]
        %v1225 = vld [vmem:[%s2 + $0x230] sm:$0xff]
        %v1226 = vld [vmem:[%s2 + $0x238] sm:$0xff]
        %v1227 = vld [vmem:[%s2 + $0x240] sm:$0xff]
        %v1228 = vld [vmem:[%s2 + $0x248] sm:$0xff]
        %v1229 = vld [vmem:[%s2 + $0x250] sm:$0xff]
        %v1230 = vld [vmem:[%s2 + $0x258] sm:$0xff]
        %v1231 = vld [vmem:[%s2 + $0x260] sm:$0xff]
        %v1232 = vld [vmem:[%s2 + $0x268] sm:$0xff]
        %v1233 = vld [vmem:[%s2 + $0x270] sm:$0xff]
        %v1234 = vld [vmem:[%s2 + $0x278] sm:$0xff]
        %v1235 = vld [vmem:[%s2 + $0x280] sm:$0xff]
        %v1236 = vld [vmem:[%s2 + $0x288] sm:$0xff]
        %v1237 = vld [vmem:[%s2 + $0x290] sm:$0xff]
        %v1238 = vld [vmem:[%s2 + $0x298] sm:$0xff]
        %v1239 = vld [vmem:[%s2 + $0x2a0] sm:$0xff]
        %v1240 = vld [vmem:[%s2 + $0x2a8] sm:$0xff]
        %v1241 = vld [vmem:[%s2 + $0x2b0] sm:$0xff]
        %v1242 = vld [vmem:[%s2 + $0x2b8] sm:$0xff]
        %v1243 = vld [vmem:[%s2 + $0x2c0] sm:$0xff]
        %v1244 = vld [vmem:[%s2 + $0x2c8] sm:$0xff]
        %v1245 = vld [vmem:[%s2 + $0x2d0] sm:$0xff]
        %v1246 = vld [vmem:[%s2 + $0x2d8] sm:$0xff]
        %v1247 = vld [vmem:[%s2 + $0x2e0] sm:$0xff]
        %v1248 = vld [vmem:[%s2 + $0x2e8] sm:$0xff]
        %v1249 = vld [vmem:[%s2 + $0x2f0] sm:$0xff]
        %v1250 = vld [vmem:[%s2 + $0x2f8] sm:$0xff]
        %v1252 = vlaneseq
        %v1253 = vshrl.u32 %v1252, 7
        %v1254 = vsub.s32 0, %v1253
        %v1255 = vrot.slane %v1034, %v1254
        %v1256 = vlaneseq
        %v1257 = vshrl.u32 %v1256, 7
        %v1258 = vsub.s32 1, %v1257
        %v1259 = vrot.slane %v1034, %v1258
        %v1358 = vunpack.c.l.b16 %v1155
        %v1359 = vunpack.c.h.b16 %v1155
        %v1360 = vunpack.c.l.b16 %v1156
        %v1361 = vunpack.c.h.b16 %v1156
        %v1362 = vunpack.c.l.b16 %v1157
        %v1363 = vunpack.c.h.b16 %v1157
        %v1364 = vunpack.c.l.b16 %v1158
        %v1365 = vunpack.c.h.b16 %v1158
        %v1366 = vunpack.c.l.b16 %v1159
        %v1367 = vunpack.c.h.b16 %v1159
        %v1368 = vunpack.c.l.b16 %v1160
        %v1369 = vunpack.c.h.b16 %v1160
        %v1370 = vunpack.c.l.b16 %v1161
        %v1371 = vunpack.c.h.b16 %v1161
        %v1372 = vunpack.c.l.b16 %v1162
        %v1373 = vunpack.c.h.b16 %v1162
        %v1374 = vunpack.c.l.b16 %v1163
        %v1375 = vunpack.c.h.b16 %v1163
        %v1376 = vunpack.c.l.b16 %v1164
        %v1377 = vunpack.c.h.b16 %v1164
        %v1378 = vunpack.c.l.b16 %v1165
        %v1379 = vunpack.c.h.b16 %v1165
        %v1380 = vunpack.c.l.b16 %v1166
        %v1381 = vunpack.c.h.b16 %v1166
        %v1382 = vunpack.c.l.b16 %v1167
        %v1383 = vunpack.c.h.b16 %v1167
        %v1384 = vunpack.c.l.b16 %v1168
        %v1385 = vunpack.c.h.b16 %v1168
        %v1386 = vunpack.c.l.b16 %v1169
        %v1387 = vunpack.c.h.b16 %v1169
        %v1388 = vunpack.c.l.b16 %v1170
        %v1389 = vunpack.c.h.b16 %v1170
        %v1390 = vunpack.c.l.b16 %v1171
        %v1391 = vunpack.c.h.b16 %v1171
        %v1392 = vunpack.c.l.b16 %v1172
        %v1393 = vunpack.c.h.b16 %v1172
        %v1394 = vunpack.c.l.b16 %v1173
        %v1395 = vunpack.c.h.b16 %v1173
        %v1396 = vunpack.c.l.b16 %v1174
        %v1397 = vunpack.c.h.b16 %v1174
        %v1398 = vunpack.c.l.b16 %v1175
        %v1399 = vunpack.c.h.b16 %v1175
        %v1400 = vunpack.c.l.b16 %v1176
        %v1401 = vunpack.c.h.b16 %v1176
        %v1402 = vunpack.c.l.b16 %v1177
        %v1403 = vunpack.c.h.b16 %v1177
        %v1404 = vunpack.c.l.b16 %v1178
        %v1405 = vunpack.c.h.b16 %v1178
        %v1406 = vunpack.c.l.b16 %v1179
        %v1407 = vunpack.c.h.b16 %v1179
        %v1408 = vunpack.c.l.b16 %v1180
        %v1409 = vunpack.c.h.b16 %v1180
        %v1410 = vunpack.c.l.b16 %v1181
        %v1411 = vunpack.c.h.b16 %v1181
        %v1412 = vunpack.c.l.b16 %v1182
        %v1413 = vunpack.c.h.b16 %v1182
        %v1414 = vunpack.c.l.b16 %v1183
        %v1415 = vunpack.c.h.b16 %v1183
        %v1416 = vunpack.c.l.b16 %v1184
        %v1417 = vunpack.c.h.b16 %v1184
        %v1418 = vunpack.c.l.b16 %v1185
        %v1419 = vunpack.c.h.b16 %v1185
        %v1420 = vunpack.c.l.b16 %v1186
        %v1421 = vunpack.c.h.b16 %v1186
        %v1422 = vunpack.c.l.b16 %v1187
        %v1423 = vunpack.c.h.b16 %v1187
        %v1424 = vunpack.c.l.b16 %v1188
        %v1425 = vunpack.c.h.b16 %v1188
        %v1426 = vunpack.c.l.b16 %v1189
        %v1427 = vunpack.c.h.b16 %v1189
        %v1428 = vunpack.c.l.b16 %v1190
        %v1429 = vunpack.c.h.b16 %v1190
        %v1430 = vunpack.c.l.b16 %v1191
        %v1431 = vunpack.c.h.b16 %v1191
        %v1432 = vunpack.c.l.b16 %v1192
        %v1433 = vunpack.c.h.b16 %v1192
        %v1434 = vunpack.c.l.b16 %v1193
        %v1435 = vunpack.c.h.b16 %v1193
        %v1436 = vunpack.c.l.b16 %v1194
        %v1437 = vunpack.c.h.b16 %v1194
        %v1438 = vunpack.c.l.b16 %v1195
        %v1439 = vunpack.c.h.b16 %v1195
        %v1440 = vunpack.c.l.b16 %v1196
        %v1441 = vunpack.c.h.b16 %v1196
        %v1442 = vunpack.c.l.b16 %v1197
        %v1443 = vunpack.c.h.b16 %v1197
        %v1444 = vunpack.c.l.b16 %v1198
        %v1445 = vunpack.c.h.b16 %v1198
        %v1446 = vunpack.c.l.b16 %v1199
        %v1447 = vunpack.c.h.b16 %v1199
        %v1448 = vunpack.c.l.b16 %v1200
        %v1449 = vunpack.c.h.b16 %v1200
        %v1450 = vunpack.c.l.b16 %v1201
        %v1451 = vunpack.c.h.b16 %v1201
        %v1452 = vunpack.c.l.b16 %v1202
        %v1453 = vunpack.c.h.b16 %v1202
        %v1454 = vunpack.c.l.b16 %v1203
        %v1455 = vunpack.c.h.b16 %v1203
        %v1456 = vunpack.c.l.b16 %v1204
        %v1457 = vunpack.c.h.b16 %v1204
        %v1458 = vunpack.c.l.b16 %v1205
        %v1459 = vunpack.c.h.b16 %v1205
        %v1460 = vunpack.c.l.b16 %v1206
        %v1461 = vunpack.c.h.b16 %v1206
        %v1462 = vunpack.c.l.b16 %v1207
        %v1463 = vunpack.c.h.b16 %v1207
        %v1464 = vunpack.c.l.b16 %v1208
        %v1465 = vunpack.c.h.b16 %v1208
        %v1466 = vunpack.c.l.b16 %v1209
        %v1467 = vunpack.c.h.b16 %v1209
        %v1468 = vunpack.c.l.b16 %v1210
        %v1469 = vunpack.c.h.b16 %v1210
        %v1470 = vunpack.c.l.b16 %v1211
        %v1471 = vunpack.c.h.b16 %v1211
        %v1472 = vunpack.c.l.b16 %v1212
        %v1473 = vunpack.c.h.b16 %v1212
        %v1474 = vunpack.c.l.b16 %v1213
        %v1475 = vunpack.c.h.b16 %v1213
        %v1476 = vunpack.c.l.b16 %v1214
        %v1477 = vunpack.c.h.b16 %v1214
        %v1478 = vunpack.c.l.b16 %v1215
        %v1479 = vunpack.c.h.b16 %v1215
        %v1480 = vunpack.c.l.b16 %v1216
        %v1481 = vunpack.c.h.b16 %v1216
        %v1482 = vunpack.c.l.b16 %v1217
        %v1483 = vunpack.c.h.b16 %v1217
        %v1484 = vunpack.c.l.b16 %v1218
        %v1485 = vunpack.c.h.b16 %v1218
        %v1486 = vunpack.c.l.b16 %v1219
        %v1487 = vunpack.c.h.b16 %v1219
        %v1488 = vunpack.c.l.b16 %v1220
        %v1489 = vunpack.c.h.b16 %v1220
        %v1490 = vunpack.c.l.b16 %v1221
        %v1491 = vunpack.c.h.b16 %v1221
        %v1492 = vunpack.c.l.b16 %v1222
        %v1493 = vunpack.c.h.b16 %v1222
        %v1494 = vunpack.c.l.b16 %v1223
        %v1495 = vunpack.c.h.b16 %v1223
        %v1496 = vunpack.c.l.b16 %v1224
        %v1497 = vunpack.c.h.b16 %v1224
        %v1498 = vunpack.c.l.b16 %v1225
        %v1499 = vunpack.c.h.b16 %v1225
        %v1500 = vunpack.c.l.b16 %v1226
        %v1501 = vunpack.c.h.b16 %v1226
        %v1502 = vunpack.c.l.b16 %v1227
        %v1503 = vunpack.c.h.b16 %v1227
        %v1504 = vunpack.c.l.b16 %v1228
        %v1505 = vunpack.c.h.b16 %v1228
        %v1506 = vunpack.c.l.b16 %v1229
        %v1507 = vunpack.c.h.b16 %v1229
        %v1508 = vunpack.c.l.b16 %v1230
        %v1509 = vunpack.c.h.b16 %v1230
        %v1510 = vunpack.c.l.b16 %v1231
        %v1511 = vunpack.c.h.b16 %v1231
        %v1512 = vunpack.c.l.b16 %v1232
        %v1513 = vunpack.c.h.b16 %v1232
        %v1514 = vunpack.c.l.b16 %v1233
        %v1515 = vunpack.c.h.b16 %v1233
        %v1516 = vunpack.c.l.b16 %v1234
        %v1517 = vunpack.c.h.b16 %v1234
        %v1518 = vunpack.c.l.b16 %v1235
        %v1519 = vunpack.c.h.b16 %v1235
        %v1520 = vunpack.c.l.b16 %v1236
        %v1521 = vunpack.c.h.b16 %v1236
        %v1522 = vunpack.c.l.b16 %v1237
        %v1523 = vunpack.c.h.b16 %v1237
        %v1524 = vunpack.c.l.b16 %v1238
        %v1525 = vunpack.c.h.b16 %v1238
        %v1526 = vunpack.c.l.b16 %v1239
        %v1527 = vunpack.c.h.b16 %v1239
        %v1528 = vunpack.c.l.b16 %v1240
        %v1529 = vunpack.c.h.b16 %v1240
        %v1530 = vunpack.c.l.b16 %v1241
        %v1531 = vunpack.c.h.b16 %v1241
        %v1532 = vunpack.c.l.b16 %v1242
        %v1533 = vunpack.c.h.b16 %v1242
        %v1534 = vunpack.c.l.b16 %v1243
        %v1535 = vunpack.c.h.b16 %v1243
        %v1536 = vunpack.c.l.b16 %v1244
        %v1537 = vunpack.c.h.b16 %v1244
        %v1538 = vunpack.c.l.b16 %v1245
        %v1539 = vunpack.c.h.b16 %v1245
        %v1540 = vunpack.c.l.b16 %v1246
        %v1541 = vunpack.c.h.b16 %v1246
        %v1542 = vunpack.c.l.b16 %v1247
        %v1543 = vunpack.c.h.b16 %v1247
        %v1544 = vunpack.c.l.b16 %v1248
        %v1545 = vunpack.c.h.b16 %v1248
        %v1546 = vunpack.c.l.b16 %v1249
        %v1547 = vunpack.c.h.b16 %v1249
        %v1548 = vunpack.c.l.b16 %v1250
        %v1549 = vunpack.c.h.b16 %v1250
        %v1550 = vpack.c.b16 %v1360, %v1358
        %v1551 = vpack.c.b16 %v1361, %v1359
        %v1552 = vpack.c.b16 %v1364, %v1362
        %v1553 = vpack.c.b16 %v1365, %v1363
        %v1554 = vpack.c.b16 %v1368, %v1366
        %v1555 = vpack.c.b16 %v1369, %v1367
        %v1556 = vpack.c.b16 %v1372, %v1370
        %v1557 = vpack.c.b16 %v1373, %v1371
        %v1558 = vpack.c.b16 %v1376, %v1374
        %v1559 = vpack.c.b16 %v1377, %v1375
        %v1560 = vpack.c.b16 %v1380, %v1378
        %v1561 = vpack.c.b16 %v1381, %v1379
        %v1562 = vpack.c.b16 %v1384, %v1382
        %v1563 = vpack.c.b16 %v1385, %v1383
        %v1564 = vpack.c.b16 %v1388, %v1386
        %v1565 = vpack.c.b16 %v1389, %v1387
        %v1566 = vpack.c.b16 %v1392, %v1390
        %v1567 = vpack.c.b16 %v1393, %v1391
        %v1568 = vpack.c.b16 %v1396, %v1394
        %v1569 = vpack.c.b16 %v1397, %v1395
        %v1570 = vpack.c.b16 %v1400, %v1398
        %v1571 = vpack.c.b16 %v1401, %v1399
        %v1572 = vpack.c.b16 %v1404, %v1402
        %v1573 = vpack.c.b16 %v1405, %v1403
        %v1574 = vpack.c.b16 %v1408, %v1406
        %v1575 = vpack.c.b16 %v1409, %v1407
        %v1576 = vpack.c.b16 %v1412, %v1410
        %v1577 = vpack.c.b16 %v1413, %v1411
        %v1578 = vpack.c.b16 %v1416, %v1414
        %v1579 = vpack.c.b16 %v1417, %v1415
        %v1580 = vpack.c.b16 %v1420, %v1418
        %v1581 = vpack.c.b16 %v1421, %v1419
        %v1582 = vpack.c.b16 %v1424, %v1422
        %v1583 = vpack.c.b16 %v1425, %v1423
        %v1584 = vpack.c.b16 %v1428, %v1426
        %v1585 = vpack.c.b16 %v1429, %v1427
        %v1586 = vpack.c.b16 %v1432, %v1430
        %v1587 = vpack.c.b16 %v1433, %v1431
        %v1588 = vpack.c.b16 %v1436, %v1434
        %v1589 = vpack.c.b16 %v1437, %v1435
        %v1590 = vpack.c.b16 %v1440, %v1438
        %v1591 = vpack.c.b16 %v1441, %v1439
        %v1592 = vpack.c.b16 %v1444, %v1442
        %v1593 = vpack.c.b16 %v1445, %v1443
        %v1594 = vpack.c.b16 %v1448, %v1446
        %v1595 = vpack.c.b16 %v1449, %v1447
        %v1596 = vpack.c.b16 %v1452, %v1450
        %v1597 = vpack.c.b16 %v1453, %v1451
        %v1598 = vpack.c.b16 %v1456, %v1454
        %v1599 = vpack.c.b16 %v1457, %v1455
        %v1600 = vpack.c.b16 %v1460, %v1458
        %v1601 = vpack.c.b16 %v1461, %v1459
        %v1602 = vpack.c.b16 %v1464, %v1462
        %v1603 = vpack.c.b16 %v1465, %v1463
        %v1604 = vpack.c.b16 %v1468, %v1466
        %v1605 = vpack.c.b16 %v1469, %v1467
        %v1606 = vpack.c.b16 %v1472, %v1470
        %v1607 = vpack.c.b16 %v1473, %v1471
        %v1608 = vpack.c.b16 %v1476, %v1474
        %v1609 = vpack.c.b16 %v1477, %v1475
        %v1610 = vpack.c.b16 %v1480, %v1478
        %v1611 = vpack.c.b16 %v1481, %v1479
        %v1612 = vpack.c.b16 %v1484, %v1482
        %v1613 = vpack.c.b16 %v1485, %v1483
        %v1614 = vpack.c.b16 %v1488, %v1486
        %v1615 = vpack.c.b16 %v1489, %v1487
        %v1616 = vpack.c.b16 %v1492, %v1490
        %v1617 = vpack.c.b16 %v1493, %v1491
        %v1618 = vpack.c.b16 %v1496, %v1494
        %v1619 = vpack.c.b16 %v1497, %v1495
        %v1620 = vpack.c.b16 %v1500, %v1498
        %v1621 = vpack.c.b16 %v1501, %v1499
        %v1622 = vpack.c.b16 %v1504, %v1502
        %v1623 = vpack.c.b16 %v1505, %v1503
        %v1624 = vpack.c.b16 %v1508, %v1506
        %v1625 = vpack.c.b16 %v1509, %v1507
        %v1626 = vpack.c.b16 %v1512, %v1510
        %v1627 = vpack.c.b16 %v1513, %v1511
        %v1628 = vpack.c.b16 %v1516, %v1514
        %v1629 = vpack.c.b16 %v1517, %v1515
        %v1630 = vpack.c.b16 %v1520, %v1518
        %v1631 = vpack.c.b16 %v1521, %v1519
        %v1632 = vpack.c.b16 %v1524, %v1522
        %v1633 = vpack.c.b16 %v1525, %v1523
        %v1634 = vpack.c.b16 %v1528, %v1526
        %v1635 = vpack.c.b16 %v1529, %v1527
        %v1636 = vpack.c.b16 %v1532, %v1530
        %v1637 = vpack.c.b16 %v1533, %v1531
        %v1638 = vpack.c.b16 %v1536, %v1534
        %v1639 = vpack.c.b16 %v1537, %v1535
        %v1640 = vpack.c.b16 %v1540, %v1538
        %v1641 = vpack.c.b16 %v1541, %v1539
        %v1642 = vpack.c.b16 %v1544, %v1542
        %v1643 = vpack.c.b16 %v1545, %v1543
        %v1644 = vpack.c.b16 %v1548, %v1546
        %v1645 = vpack.c.b16 %v1549, %v1547
        %1742 = vmatprep.subr.bf16.mxu0 %v1565
        %1743 = vmatpush1.bf16.msra.mxu0 %v1564
        %1744 = vmatprep.subr.bf16.mxu0 %v1563
        %1745 = vmatpush1.bf16.msra.mxu0 %v1562
        %1746 = vmatprep.subr.bf16.mxu0 %v1561
        %1747 = vmatpush1.bf16.msra.mxu0 %v1560
        %1748 = vmatprep.subr.bf16.mxu0 %v1559
        %1749 = vmatpush1.bf16.msra.mxu0 %v1558
        %1750 = vmatprep.subr.bf16.mxu0 %v1557
        %1751 = vmatpush1.bf16.msra.mxu0 %v1556
        %1752 = vmatprep.subr.bf16.mxu0 %v1555
        %1753 = vmatpush1.bf16.msra.mxu0 %v1554
        %1754 = vmatprep.subr.bf16.mxu0 %v1553
        %1755 = vmatpush1.bf16.msra.mxu0 %v1552
        %1756 = vmatprep.subr.bf16.mxu0 %v1551
        %1757 = vmatpush1.bf16.msra.mxu0 %v1550
        %1758 = vmatprep.subr.bf16.mxu0 %v1581
        %1759 = vmatpush2.bf16.msra.mxu0 %v1580
        %1760 = vmatprep.subr.bf16.mxu0 %v1579
        %1761 = vmatpush2.bf16.msra.mxu0 %v1578
        %1762 = vmatprep.subr.bf16.mxu0 %v1577
        %1763 = vmatpush2.bf16.msra.mxu0 %v1576
        %1764 = vmatprep.subr.bf16.mxu0 %v1575
        %1765 = vmatpush2.bf16.msra.mxu0 %v1574
        %1766 = vmatprep.subr.bf16.mxu0 %v1573
        %1767 = vmatpush2.bf16.msra.mxu0 %v1572
        %1768 = vmatprep.subr.bf16.mxu0 %v1571
        %1769 = vmatpush2.bf16.msra.mxu0 %v1570
        %1770 = vmatprep.subr.bf16.mxu0 %v1569
        %1771 = vmatpush2.bf16.msra.mxu0 %v1568
        %1772 = vmatprep.subr.bf16.mxu0 %v1567
        %1773 = vmatpush2.bf16.msra.mxu0 %v1566
        %1774 = vmatprep.mubr.bf16.mxu0 %v1132
        %1775 = vmatmul.mubr.bf16.gmra.mxu0 %v1131
        %v1776 = vpop.f32.mrf.mxu0
        %v1777 = vadd.f32 %v1255, %v1776
        %v1778 = vpop.f32.mrf.mxu0
        %v1779 = vadd.f32 %v1259, %v1778
        %v1780 = vpop.f32.mrf.mxu0
        %v1781 = vadd.f32 %v1255, %v1780
        %v1782 = vpop.f32.mrf.mxu0
        %v1783 = vadd.f32 %v1259, %v1782
        %1784 = vmatprep.mubr.bf16.mxu0 %v1138
        %1785 = vmatmul.mubr.bf16.gmra.mxu0 %v1137
        %v1786 = vpop.f32.mrf.mxu0
        %v1787 = vadd.f32 %v1255, %v1786
        %v1788 = vpop.f32.mrf.mxu0
        %v1789 = vadd.f32 %v1259, %v1788
        %v1790 = vpop.f32.mrf.mxu0
        %v1791 = vadd.f32 %v1255, %v1790
        %v1792 = vpop.f32.mrf.mxu0
        %v1793 = vadd.f32 %v1259, %v1792
        %1794 = vmatprep.mubr.bf16.mxu0 %v1144
        %1795 = vmatmul.mubr.bf16.gmra.mxu0 %v1143
        %v1796 = vpop.f32.mrf.mxu0
        %v1797 = vadd.f32 %v1255, %v1796
        %v1798 = vpop.f32.mrf.mxu0
        %v1799 = vadd.f32 %v1259, %v1798
        %v1800 = vpop.f32.mrf.mxu0
        %v1801 = vadd.f32 %v1255, %v1800
        %v1802 = vpop.f32.mrf.mxu0
        %v1803 = vadd.f32 %v1259, %v1802
        %1804 = vmatprep.mubr.bf16.mxu0 %v1150
        %1805 = vmatmul.mubr.bf16.gmra.mxu0 %v1149
        %v1806 = vpop.f32.mrf.mxu0
        %v1807 = vadd.f32 %v1255, %v1806
        %v1808 = vpop.f32.mrf.mxu0
        %v1809 = vadd.f32 %v1259, %v1808
        %v1810 = vpop.f32.mrf.mxu0
        %v1811 = vadd.f32 %v1255, %v1810
        %v1812 = vpop.f32.mrf.mxu0
        %v1813 = vadd.f32 %v1259, %v1812
        %1814 = vdwg.mxu0
        %1815 = vmatprep.subr.bf16.mxu0 %v1597
        %1816 = vmatpush1.bf16.msra.mxu0 %v1596
        %1817 = vmatprep.subr.bf16.mxu0 %v1595
        %1818 = vmatpush1.bf16.msra.mxu0 %v1594
        %1819 = vmatprep.subr.bf16.mxu0 %v1593
        %1820 = vmatpush1.bf16.msra.mxu0 %v1592
        %1821 = vmatprep.subr.bf16.mxu0 %v1591
        %1822 = vmatpush1.bf16.msra.mxu0 %v1590
        %1823 = vmatprep.subr.bf16.mxu0 %v1589
        %1824 = vmatpush1.bf16.msra.mxu0 %v1588
        %1825 = vmatprep.subr.bf16.mxu0 %v1587
        %1826 = vmatpush1.bf16.msra.mxu0 %v1586
        %1827 = vmatprep.subr.bf16.mxu0 %v1585
        %1828 = vmatpush1.bf16.msra.mxu0 %v1584
        %1829 = vmatprep.subr.bf16.mxu0 %v1583
        %1830 = vmatpush1.bf16.msra.mxu0 %v1582
        %1831 = vmatprep.subr.bf16.mxu0 %v1613
        %1832 = vmatpush2.bf16.msra.mxu0 %v1612
        %1833 = vmatprep.subr.bf16.mxu0 %v1611
        %1834 = vmatpush2.bf16.msra.mxu0 %v1610
        %1835 = vmatprep.subr.bf16.mxu0 %v1609
        %1836 = vmatpush2.bf16.msra.mxu0 %v1608
        %1837 = vmatprep.subr.bf16.mxu0 %v1607
        %1838 = vmatpush2.bf16.msra.mxu0 %v1606
        %1839 = vmatprep.subr.bf16.mxu0 %v1605
        %1840 = vmatpush2.bf16.msra.mxu0 %v1604
        %1841 = vmatprep.subr.bf16.mxu0 %v1603
        %1842 = vmatpush2.bf16.msra.mxu0 %v1602
        %1843 = vmatprep.subr.bf16.mxu0 %v1601
        %1844 = vmatpush2.bf16.msra.mxu0 %v1600
        %1845 = vmatprep.subr.bf16.mxu0 %v1599
        %1846 = vmatpush2.bf16.msra.mxu0 %v1598
        %1847 = vmatprep.mubr.bf16.mxu0 %v1134
        %1848 = vmatmul.mubr.bf16.gmra.mxu0 %v1133
        %v1849 = vpop.f32.mrf.mxu0
        %v1850 = vadd.f32 %v1777, %v1849
        %v1851 = vpop.f32.mrf.mxu0
        %v1852 = vadd.f32 %v1779, %v1851
        %v1853 = vpop.f32.mrf.mxu0
        %v1854 = vadd.f32 %v1781, %v1853
        %v1855 = vpop.f32.mrf.mxu0
        %v1856 = vadd.f32 %v1783, %v1855
        %1857 = vmatprep.mubr.bf16.mxu0 %v1140
        %1858 = vmatmul.mubr.bf16.gmra.mxu0 %v1139
        %v1859 = vpop.f32.mrf.mxu0
        %v1860 = vadd.f32 %v1787, %v1859
        %v1861 = vpop.f32.mrf.mxu0
        %v1862 = vadd.f32 %v1789, %v1861
        %v1863 = vpop.f32.mrf.mxu0
        %v1864 = vadd.f32 %v1791, %v1863
        %v1865 = vpop.f32.mrf.mxu0
        %v1866 = vadd.f32 %v1793, %v1865
        %1867 = vmatprep.mubr.bf16.mxu0 %v1146
        %1868 = vmatmul.mubr.bf16.gmra.mxu0 %v1145
        %v1869 = vpop.f32.mrf.mxu0
        %v1870 = vadd.f32 %v1797, %v1869
        %v1871 = vpop.f32.mrf.mxu0
        %v1872 = vadd.f32 %v1799, %v1871
        %v1873 = vpop.f32.mrf.mxu0
        %v1874 = vadd.f32 %v1801, %v1873
        %v1875 = vpop.f32.mrf.mxu0
        %v1876 = vadd.f32 %v1803, %v1875
        %1877 = vmatprep.mubr.bf16.mxu0 %v1152
        %1878 = vmatmul.mubr.bf16.gmra.mxu0 %v1151
        %v1879 = vpop.f32.mrf.mxu0
        %v1880 = vadd.f32 %v1807, %v1879
        %v1881 = vpop.f32.mrf.mxu0
        %v1882 = vadd.f32 %v1809, %v1881
        %v1883 = vpop.f32.mrf.mxu0
        %v1884 = vadd.f32 %v1811, %v1883
        %v1885 = vpop.f32.mrf.mxu0
        %v1886 = vadd.f32 %v1813, %v1885
        %1887 = vdwg.mxu0
        %1888 = vmatprep.subr.bf16.mxu0 %v1629
        %1889 = vmatpush1.bf16.msra.mxu0 %v1628
        %1890 = vmatprep.subr.bf16.mxu0 %v1627
        %1891 = vmatpush1.bf16.msra.mxu0 %v1626
        %1892 = vmatprep.subr.bf16.mxu0 %v1625
        %1893 = vmatpush1.bf16.msra.mxu0 %v1624
        %1894 = vmatprep.subr.bf16.mxu0 %v1623
        %1895 = vmatpush1.bf16.msra.mxu0 %v1622
        %1896 = vmatprep.subr.bf16.mxu0 %v1621
        %1897 = vmatpush1.bf16.msra.mxu0 %v1620
        %1898 = vmatprep.subr.bf16.mxu0 %v1619
        %1899 = vmatpush1.bf16.msra.mxu0 %v1618
        %1900 = vmatprep.subr.bf16.mxu0 %v1617
        %1901 = vmatpush1.bf16.msra.mxu0 %v1616
        %1902 = vmatprep.subr.bf16.mxu0 %v1615
        %1903 = vmatpush1.bf16.msra.mxu0 %v1614
        %1904 = vmatprep.subr.bf16.mxu0 %v1645
        %1905 = vmatpush2.bf16.msra.mxu0 %v1644
        %1906 = vmatprep.subr.bf16.mxu0 %v1643
        %1907 = vmatpush2.bf16.msra.mxu0 %v1642
        %1908 = vmatprep.subr.bf16.mxu0 %v1641
        %1909 = vmatpush2.bf16.msra.mxu0 %v1640
        %1910 = vmatprep.subr.bf16.mxu0 %v1639
        %1911 = vmatpush2.bf16.msra.mxu0 %v1638
        %1912 = vmatprep.subr.bf16.mxu0 %v1637
        %1913 = vmatpush2.bf16.msra.mxu0 %v1636
        %1914 = vmatprep.subr.bf16.mxu0 %v1635
        %1915 = vmatpush2.bf16.msra.mxu0 %v1634
        %1916 = vmatprep.subr.bf16.mxu0 %v1633
        %1917 = vmatpush2.bf16.msra.mxu0 %v1632
        %1918 = vmatprep.subr.bf16.mxu0 %v1631
        %1919 = vmatpush2.bf16.msra.mxu0 %v1630
        %1920 = vmatprep.mubr.bf16.mxu0 %v1136
        %1921 = vmatmul.mubr.bf16.gmra.mxu0 %v1135
        %v1922 = vpop.f32.mrf.mxu0
        %v1923 = vadd.f32 %v1850, %v1922
        %v1924 = vpop.f32.mrf.mxu0
        %v1925 = vadd.f32 %v1852, %v1924
        %v1926 = vpop.f32.mrf.mxu0
        %v1927 = vadd.f32 %v1854, %v1926
        %v1928 = vpop.f32.mrf.mxu0
        %v1929 = vadd.f32 %v1856, %v1928
        %1930 = vmatprep.mubr.bf16.mxu0 %v1142
        %1931 = vmatmul.mubr.bf16.gmra.mxu0 %v1141
        %v1932 = vpop.f32.mrf.mxu0
        %v1933 = vadd.f32 %v1860, %v1932
        %v1934 = vpop.f32.mrf.mxu0
        %v1935 = vadd.f32 %v1862, %v1934
        %v1936 = vpop.f32.mrf.mxu0
        %v1937 = vadd.f32 %v1864, %v1936
        %v1938 = vpop.f32.mrf.mxu0
        %v1939 = vadd.f32 %v1866, %v1938
        %1940 = vmatprep.mubr.bf16.mxu0 %v1148
        %1941 = vmatmul.mubr.bf16.gmra.mxu0 %v1147
        %v1942 = vpop.f32.mrf.mxu0
        %v1943 = vadd.f32 %v1870, %v1942
        %v1944 = vpop.f32.mrf.mxu0
        %v1945 = vadd.f32 %v1872, %v1944
        %v1946 = vpop.f32.mrf.mxu0
        %v1947 = vadd.f32 %v1874, %v1946
        %v1948 = vpop.f32.mrf.mxu0
        %v1949 = vadd.f32 %v1876, %v1948
        %1950 = vmatprep.mubr.bf16.mxu0 %v1154
        %1951 = vmatmul.mubr.bf16.gmra.mxu0 %v1153
        %v1952 = vpop.f32.mrf.mxu0
        %v1953 = vadd.f32 %v1880, %v1952
        %v1954 = vpop.f32.mrf.mxu0
        %v1955 = vadd.f32 %v1882, %v1954
        %v1956 = vpop.f32.mrf.mxu0
        %v1957 = vadd.f32 %v1884, %v1956
        %v1958 = vpop.f32.mrf.mxu0
        %v1959 = vadd.f32 %v1886, %v1958
        %1960 = vdwg.mxu0
        %v1961 = vmax.f32 %v1923, 0.0
        %v1962 = vmax.f32 %v1925, 0.0
        %v1963 = vmax.f32 %v1927, 0.0
        %v1964 = vmax.f32 %v1929, 0.0
        %v1965 = vmax.f32 %v1933, 0.0
        %v1966 = vmax.f32 %v1935, 0.0
        %v1967 = vmax.f32 %v1937, 0.0
        %v1968 = vmax.f32 %v1939, 0.0
        %v1969 = vmax.f32 %v1943, 0.0
        %v1970 = vmax.f32 %v1945, 0.0
        %v1971 = vmax.f32 %v1947, 0.0
        %v1972 = vmax.f32 %v1949, 0.0
        %v1973 = vmax.f32 %v1953, 0.0
        %v1974 = vmax.f32 %v1955, 0.0
        %v1975 = vmax.f32 %v1957, 0.0
        %v1976 = vmax.f32 %v1959, 0.0
        %v1977 = vsub.f32 %v1961, %v1969
        %v1978 = vsub.f32 %v1962, %v1970
        %v1979 = vsub.f32 %v1963, %v1971
        %v1980 = vsub.f32 %v1964, %v1972
        %v1981 = vsub.f32 %v1965, %v1973
        %v1982 = vsub.f32 %v1966, %v1974
        %v1983 = vsub.f32 %v1967, %v1975
        %v1984 = vsub.f32 %v1968, %v1976
        %v1985 = vmul.f32 %v1977, %v1977
        %v1986 = vmul.f32 %v1978, %v1978
        %v1987 = vmul.f32 %v1979, %v1979
        %v1988 = vmul.f32 %v1980, %v1980
        %v1989 = vmul.f32 %v1981, %v1981
        %v1990 = vmul.f32 %v1982, %v1982
        %v1991 = vmul.f32 %v1983, %v1983
        %v1992 = vmul.f32 %v1984, %v1984
        %v1993 = vadd.f32 %v1985, %v1987
        %v1994 = vadd.f32 %v1993, %v1989
        %v1995 = vadd.f32 %v1994, %v1991
        %v1996 = vrot.slane %v1995, 4
        %v1997 = vadd.f32 %v1995, %v1996
        %v1998 = vrot.slane %v1997, 2
        %v1999 = vadd.f32 %v1997, %v1998
        %v2000 = vrot.slane %v1999, 1
        %v2001 = vadd.f32 %v1999, %v2000
        %v2002 = vadd.f32 %v1986, %v1988
        %v2003 = vadd.f32 %v2002, %v1990
        %v2004 = vadd.f32 %v2003, %v1992
        %v2005 = vrot.slane %v2004, 4
        %v2006 = vadd.f32 %v2004, %v2005
        %v2007 = vrot.slane %v2006, 2
        %v2008 = vadd.f32 %v2006, %v2007
        %v2009 = vrot.slane %v2008, 1
        %v2010 = vadd.f32 %v2008, %v2009
        %v2011 = vmax.f32 %v1961, %v1962
        %v2012 = vmax.f32 %v1963, %v1964
        %v2013 = vmax.f32 %v1965, %v1966
        %v2014 = vmax.f32 %v1967, %v1968
        %v2015 = vmax.f32 %v1969, %v1970
        %v2016 = vmax.f32 %v1971, %v1972
        %v2017 = vmax.f32 %v1973, %v1974
        %v2018 = vmax.f32 %v1975, %v1976
        %v2019 = vrot.slane %v2011, 1
        %v2020 = vrot.slane %v2012, 1
        %v2021 = vrot.slane %v2013, 1
        %v2022 = vrot.slane %v2014, 1
        %v2023 = vrot.slane %v2015, 1
        %v2024 = vrot.slane %v2016, 1
        %v2025 = vrot.slane %v2017, 1
        %v2026 = vrot.slane %v2018, 1
        %v2027 = vsel %vm543, %v2025, %v2026
        %v2028 = vsel %vm543, %v2024, %v2025
        %v2029 = vsel %vm543, %v2023, %v2024
        %v2030 = vsel %vm543, %v2022, %v2023
        %v2031 = vsel %vm543, %v2021, %v2022
        %v2032 = vsel %vm543, %v2020, %v2021
        %v2033 = vsel %vm543, %v2019, %v2020
        %v2034 = vsel %vm543, %v2026, %v2019
        %v2035 = vmax.f32 %v2011, %v2033
        %v2036 = vmax.f32 %v2012, %v2032
        %v2037 = vmax.f32 %v2013, %v2031
        %v2038 = vmax.f32 %v2014, %v2030
        %v2039 = vmax.f32 %v2015, %v2029
        %v2040 = vmax.f32 %v2016, %v2028
        %v2041 = vmax.f32 %v2017, %v2027
        %v2042 = vmax.f32 %v2018, %v2034
        %v2043 = vlaneseq
        %v2044 = vand.u32 %v2043, 127
        %v2045 = vmul.u32 %v390, 2
        %v2046 = vmul.u32 %v391, 2
        %v2047 = vmul.u32 %v392, 2
        %v2048 = vmul.u32 %v393, 2
        %vm2049 = vcmp.eq.s32.totalorder %v2044, %v2045
        %vm2050 = vcmp.eq.s32.totalorder %v2044, %v2046
        %vm2051 = vcmp.eq.s32.totalorder %v2044, %v2047
        %vm2052 = vcmp.eq.s32.totalorder %v2044, %v2048
        %v2053 = vsel %vm2049, 1, 0
        %v2054 = vsel %vm2050, 1, 0
        %v2055 = vsel %vm2051, 1, 0
        %v2056 = vsel %vm2052, 1, 0
        %v2057 = vcvt.s32.f32 %v2053
        %v2058 = vcvt.s32.f32 %v2054
        %v2059 = vcvt.s32.f32 %v2055
        %v2060 = vcvt.s32.f32 %v2056
        %vm2061 = vcmask 523264
        %v2063 = vsel %vm2061, %v2057, 0
        %v2066 = vsel %vm2061, %v2058, 0
        %v2069 = vsel %vm2061, %v2059, 0
        %v2072 = vsel %vm2061, %v2060, 0
        %2074 = vmatprep.subr.mxu0 0.0
        %2075 = vmatpush1.msra.mxu0 0.0
        %2076 = vmatprep.subr.mxu0 0.0
        %2077 = vmatpush1.msra.mxu0 0.0
        %2078 = vmatprep.subr.mxu0 0.0
        %2079 = vmatpush1.msra.mxu0 0.0
        %2080 = vmatprep.subr.mxu0 0.0
        %2081 = vmatpush1.msra.mxu0 0.0
        %2082 = vmatprep.subr.mxu0 0.0
        %2083 = vmatpush1.msra.mxu0 0.0
        %2084 = vmatprep.subr.mxu0 0.0
        %2085 = vmatpush1.msra.mxu0 0.0
        %2086 = vmatprep.subr.mxu0 0.0
        %2087 = vmatpush1.msra.mxu0 0.0
        %2088 = vmatprep.subr.mxu0 0.0
        %2089 = vmatpush1.msra.mxu0 0.0
        %2090 = vmatprep.subr.mxu0 0.0
        %2091 = vmatpush1.msra.mxu0 %v2042
        %2092 = vmatprep.subr.mxu0 0.0
        %2093 = vmatpush1.msra.mxu0 %v2041
        %2094 = vmatprep.subr.mxu0 0.0
        %2095 = vmatpush1.msra.mxu0 %v2040
        %2096 = vmatprep.subr.mxu0 0.0
        %2097 = vmatpush1.msra.mxu0 %v2039
        %2098 = vmatprep.subr.mxu0 0.0
        %2099 = vmatpush1.msra.mxu0 %v2038
        %2100 = vmatprep.subr.mxu0 0.0
        %2101 = vmatpush1.msra.mxu0 %v2037
        %2102 = vmatprep.subr.mxu0 0.0
        %2103 = vmatpush1.msra.mxu0 %v2036
        %2104 = vmatprep.subr.mxu0 0.0
        %2105 = vmatpush1.msra.mxu0 %v2035
        %2106 = vmatprep.subr.mxu0 0.0
        %2107 = vmatpush2.msra.mxu0 0.0
        %2108 = vmatprep.subr.mxu0 0.0
        %2109 = vmatpush2.msra.mxu0 0.0
        %2110 = vmatprep.subr.mxu0 0.0
        %2111 = vmatpush2.msra.mxu0 0.0
        %2112 = vmatprep.subr.mxu0 0.0
        %2113 = vmatpush2.msra.mxu0 0.0
        %2114 = vmatprep.subr.mxu0 0.0
        %2115 = vmatpush2.msra.mxu0 0.0
        %2116 = vmatprep.subr.mxu0 0.0
        %2117 = vmatpush2.msra.mxu0 0.0
        %2118 = vmatprep.subr.mxu0 0.0
        %2119 = vmatpush2.msra.mxu0 0.0
        %2120 = vmatprep.subr.mxu0 0.0
        %2121 = vmatpush2.msra.mxu0 0.0
        %2122 = vmatprep.subr.mxu0 0.0
        %2123 = vmatpush2.msra.mxu0 0.0
        %2124 = vmatprep.subr.mxu0 0.0
        %2125 = vmatpush2.msra.mxu0 0.0
        %2126 = vmatprep.subr.mxu0 0.0
        %2127 = vmatpush2.msra.mxu0 0.0
        %2128 = vmatprep.subr.mxu0 0.0
        %2129 = vmatpush2.msra.mxu0 0.0
        %2130 = vmatprep.subr.mxu0 0.0
        %2131 = vmatpush2.msra.mxu0 0.0
        %2132 = vmatprep.subr.mxu0 0.0
        %2133 = vmatpush2.msra.mxu0 0.0
        %2134 = vmatprep.subr.mxu0 0.0
        %2135 = vmatpush2.msra.mxu0 0.0
        %2136 = vmatprep.subr.mxu0 0.0
        %2137 = vmatpush2.msra.mxu0 0.0
        %2138 = vmatprep.mubr.f32.mxu0 0.0
        %2139 = vmatmul.mubr.f32.gmra.mxu0 %v2063
        %v2140 = vpop.f32.mrf.mxu0
        %v2141 = vadd.f32 0.0, %v2140
        %v2142 = vpop.f32.mrf.mxu0
        %2143 = vmatprep.mubr.f32.mxu0 0.0
        %2144 = vmatmul.mubr.f32.gmra.mxu0 %v2066
        %v2145 = vpop.f32.mrf.mxu0
        %v2146 = vadd.f32 0.0, %v2145
        %v2147 = vpop.f32.mrf.mxu0
        %2148 = vmatprep.mubr.f32.mxu0 0.0
        %2149 = vmatmul.mubr.f32.gmra.mxu0 %v2069
        %v2150 = vpop.f32.mrf.mxu0
        %v2151 = vadd.f32 0.0, %v2150
        %v2152 = vpop.f32.mrf.mxu0
        %2153 = vmatprep.mubr.f32.mxu0 0.0
        %2154 = vmatmul.mubr.f32.gmra.mxu0 %v2072
        %v2155 = vpop.f32.mrf.mxu0
        %v2156 = vadd.f32 0.0, %v2155
        %v2157 = vpop.f32.mrf.mxu0
        %2158 = vdwg.mxu0
        %s2159 = scalar_lea.vmem %s8, 2
        %v2160 = vld [vmem:[%s2159] ss:$8 sm:$0x3]
        %vm2161 = vcmp.lt.s32.totalorder %v390, 0
        %v2162 = vsub.s32 0, %v390
        %v2163 = vsel %vm2161, %v2162, %v390
        %v2164 = vshrl.u32 %v2163, 4
        %v2165 = vand.u32 %v2163, 15
        %v2166 = vsub.s32 0, %v2165
        %v2167 = vsel %vm2161, %v2166, %v2165
        %vm2168 = vcmp.lt.s32.totalorder %v391, 0
        %v2169 = vsub.s32 0, %v391
        %v2170 = vsel %vm2168, %v2169, %v391
        %v2171 = vshrl.u32 %v2170, 4
        %v2172 = vand.u32 %v2170, 15
        %v2173 = vsub.s32 0, %v2172
        %v2174 = vsel %vm2168, %v2173, %v2172
        %vm2175 = vcmp.lt.s32.totalorder %v392, 0
        %v2176 = vsub.s32 0, %v392
        %v2177 = vsel %vm2175, %v2176, %v392
        %v2178 = vshrl.u32 %v2177, 4
        %v2179 = vand.u32 %v2177, 15
        %v2180 = vsub.s32 0, %v2179
        %v2181 = vsel %vm2175, %v2180, %v2179
        %vm2182 = vcmp.lt.s32.totalorder %v393, 0
        %v2183 = vsub.s32 0, %v393
        %v2184 = vsel %vm2182, %v2183, %v393
        %v2185 = vshrl.u32 %v2184, 4
        %v2186 = vand.u32 %v2184, 15
        %v2187 = vsub.s32 0, %v2186
        %v2188 = vsel %vm2182, %v2187, %v2186
        %vm2189 = vcmp.ne.s32.totalorder %v2167, 0
        %vm2190 = vcmp.ne.s32.totalorder %v2174, 0
        %vm2191 = vcmp.ne.s32.totalorder %v2181, 0
        %vm2192 = vcmp.ne.s32.totalorder %v2188, 0
        %vm2193 = vcmp.lt.s32.totalorder %v2167, 0
        %vm2194 = vcmp.lt.s32.totalorder %v2174, 0
        %vm2195 = vcmp.lt.s32.totalorder %v2181, 0
        %vm2196 = vcmp.lt.s32.totalorder %v2188, 0
        %vm2197 = vmand %vm2193, %vm2189
        %vm2198 = vmand %vm2194, %vm2190
        %vm2199 = vmand %vm2195, %vm2191
        %vm2200 = vmand %vm2196, %vm2192
        %v2201 = vadd.s32 %v2167, 16
        %v2202 = vadd.s32 %v2174, 16
        %v2203 = vadd.s32 %v2181, 16
        %v2204 = vadd.s32 %v2188, 16
        %v2205 = vsel %vm2197, %v2201, %v2167
        %v2206 = vsel %vm2198, %v2202, %v2174
        %v2207 = vsel %vm2199, %v2203, %v2181
        %v2208 = vsel %vm2200, %v2204, %v2188
        %vm2209 = vcmp.eq.s32.totalorder %v2205, 0
        %vm2210 = vcmp.eq.s32.totalorder %v2206, 0
        %vm2211 = vcmp.eq.s32.totalorder %v2207, 0
        %vm2212 = vcmp.eq.s32.totalorder %v2208, 0
        %v2213 = vrot.slane %v2141, 7
        %v2214 = vrot.slane %v2146, 7
        %v2215 = vrot.slane %v2151, 7
        %v2216 = vrot.slane %v2156, 7
        %v2217 = vsel %vm510, %v2215, %v2216
        %v2218 = vsel %vm510, %v2214, %v2215
        %v2219 = vsel %vm510, %v2213, %v2214
        %v2220 = vsel %vm510, %v2216, %v2213
        %v2221 = vsel %vm2209, 0.0, %v2220
        %v2222 = vsel %vm2210, 0.0, %v2219
        %v2223 = vsel %vm2211, 0.0, %v2218
        %v2224 = vsel %vm2212, 0.0, %v2217
        %vm2225 = vcmp.eq.s32.totalorder %v2205, 15
        %vm2226 = vcmp.eq.s32.totalorder %v2206, 15
        %vm2227 = vcmp.eq.s32.totalorder %v2207, 15
        %vm2228 = vcmp.eq.s32.totalorder %v2208, 15
        %v2229 = vrot.slane %v2141, 1
        %v2230 = vrot.slane %v2146, 1
        %v2231 = vrot.slane %v2151, 1
        %v2232 = vrot.slane %v2156, 1
        %v2233 = vsel %vm543, %v2231, %v2232
        %v2234 = vsel %vm543, %v2230, %v2231
        %v2235 = vsel %vm543, %v2229, %v2230
        %v2236 = vsel %vm543, %v2232, %v2229
        %v2237 = vsel %vm2225, 0.0, %v2235
        %v2238 = vsel %vm2226, 0.0, %v2234
        %v2239 = vsel %vm2227, 0.0, %v2233
        %v2240 = vsel %vm2228, 0.0, %v2236
        %v2241 = vpack.c.bf16 %v2222, %v2221
        %v2242 = vpack.c.bf16 %v2146, %v2141
        %v2243 = vpack.c.bf16 %v2238, %v2237
        %v2244 = vpack.c.bf16 %v2224, %v2223
        %v2245 = vpack.c.bf16 %v2156, %v2151
        %v2246 = vpack.c.bf16 %v2240, %v2239
        %v2247 = vld [vmem:[#allocation2] sm:$0xff]
        %v2248 = vld [vmem:[#allocation2 + $0x8] sm:$0xff]
        %v2249 = vld [vmem:[#allocation2 + $0x10] sm:$0xff]
        %v2250 = vld [vmem:[#allocation2 + $0x18] sm:$0xff]
        %v2251 = vld [vmem:[#allocation2 + $0x20] sm:$0xff]
        %v2252 = vld [vmem:[#allocation2 + $0x28] sm:$0xff]
        %v2253 = vld [vmem:[#allocation2 + $0x30] sm:$0xff]
        %v2254 = vld [vmem:[#allocation2 + $0x38] sm:$0xff]
        %v2255 = vld [vmem:[#allocation2 + $0x40] sm:$0xff]
        %v2256 = vld [vmem:[#allocation2 + $0x48] sm:$0xff]
        %v2257 = vld [vmem:[#allocation2 + $0x50] sm:$0xff]
        %v2258 = vld [vmem:[#allocation2 + $0x58] sm:$0xff]
        %v2259 = vld [vmem:[#allocation2 + $0x60] sm:$0xff]
        %v2260 = vld [vmem:[#allocation2 + $0x68] sm:$0xff]
        %v2261 = vld [vmem:[#allocation2 + $0x70] sm:$0xff]
        %v2262 = vld [vmem:[#allocation2 + $0x78] sm:$0xff]
        %v2263 = vld [vmem:[#allocation2 + $0x80] sm:$0xff]
        %v2264 = vld [vmem:[#allocation2 + $0x88] sm:$0xff]
        %v2265 = vld [vmem:[#allocation2 + $0x90] sm:$0xff]
        %v2266 = vld [vmem:[#allocation2 + $0x98] sm:$0xff]
        %v2267 = vld [vmem:[#allocation2 + $0xa0] sm:$0xff]
        %v2268 = vld [vmem:[#allocation2 + $0xa8] sm:$0xff]
        %v2269 = vld [vmem:[#allocation2 + $0xb0] sm:$0xff]
        %v2270 = vld [vmem:[#allocation2 + $0xb8] sm:$0xff]
        %v2271 = vld [vmem:[#allocation2 + $0xc0] sm:$0xff]
        %v2272 = vld [vmem:[#allocation2 + $0xc8] sm:$0xff]
        %v2273 = vld [vmem:[#allocation2 + $0xd0] sm:$0xff]
        %v2274 = vld [vmem:[#allocation2 + $0xd8] sm:$0xff]
        %v2275 = vld [vmem:[#allocation2 + $0xe0] sm:$0xff]
        %v2276 = vld [vmem:[#allocation2 + $0xe8] sm:$0xff]
        %v2277 = vld [vmem:[#allocation2 + $0xf0] sm:$0xff]
        %v2278 = vld [vmem:[#allocation2 + $0xf8] sm:$0xff]
        %v2279 = vld [vmem:[#allocation2 + $0x100] sm:$0xff]
        %v2280 = vld [vmem:[#allocation2 + $0x108] sm:$0xff]
        %v2281 = vld [vmem:[#allocation2 + $0x110] sm:$0xff]
        %v2282 = vld [vmem:[#allocation2 + $0x118] sm:$0xff]
        %v2283 = vld [vmem:[#allocation2 + $0x120] sm:$0xff]
        %v2284 = vld [vmem:[#allocation2 + $0x128] sm:$0xff]
        %v2285 = vld [vmem:[#allocation2 + $0x130] sm:$0xff]
        %v2286 = vld [vmem:[#allocation2 + $0x138] sm:$0xff]
        %v2287 = vld [vmem:[#allocation2 + $0x140] sm:$0xff]
        %v2288 = vld [vmem:[#allocation2 + $0x148] sm:$0xff]
        %v2289 = vld [vmem:[#allocation2 + $0x150] sm:$0xff]
        %v2290 = vld [vmem:[#allocation2 + $0x158] sm:$0xff]
        %v2291 = vld [vmem:[#allocation2 + $0x160] sm:$0xff]
        %v2292 = vld [vmem:[#allocation2 + $0x168] sm:$0xff]
        %v2293 = vld [vmem:[#allocation2 + $0x170] sm:$0xff]
        %v2294 = vld [vmem:[#allocation2 + $0x178] sm:$0xff]
        %v2296 = vlaneseq
        %v2297 = vshrl.u32 %v2296, 7
        %v2298 = vsub.s32 0, %v2297
        %v2299 = vrot.slane %v2160, %v2298
        %v2300 = vlaneseq
        %v2301 = vshrl.u32 %v2300, 7
        %v2302 = vsub.s32 1, %v2301
        %v2303 = vrot.slane %v2160, %v2302
        %v2354 = vunpack.c.l.b16 %v2247
        %v2355 = vunpack.c.h.b16 %v2247
        %v2356 = vunpack.c.l.b16 %v2248
        %v2357 = vunpack.c.h.b16 %v2248
        %v2358 = vunpack.c.l.b16 %v2249
        %v2359 = vunpack.c.h.b16 %v2249
        %v2360 = vunpack.c.l.b16 %v2250
        %v2361 = vunpack.c.h.b16 %v2250
        %v2362 = vunpack.c.l.b16 %v2251
        %v2363 = vunpack.c.h.b16 %v2251
        %v2364 = vunpack.c.l.b16 %v2252
        %v2365 = vunpack.c.h.b16 %v2252
        %v2366 = vunpack.c.l.b16 %v2253
        %v2367 = vunpack.c.h.b16 %v2253
        %v2368 = vunpack.c.l.b16 %v2254
        %v2369 = vunpack.c.h.b16 %v2254
        %v2370 = vunpack.c.l.b16 %v2255
        %v2371 = vunpack.c.h.b16 %v2255
        %v2372 = vunpack.c.l.b16 %v2256
        %v2373 = vunpack.c.h.b16 %v2256
        %v2374 = vunpack.c.l.b16 %v2257
        %v2375 = vunpack.c.h.b16 %v2257
        %v2376 = vunpack.c.l.b16 %v2258
        %v2377 = vunpack.c.h.b16 %v2258
        %v2378 = vunpack.c.l.b16 %v2259
        %v2379 = vunpack.c.h.b16 %v2259
        %v2380 = vunpack.c.l.b16 %v2260
        %v2381 = vunpack.c.h.b16 %v2260
        %v2382 = vunpack.c.l.b16 %v2261
        %v2383 = vunpack.c.h.b16 %v2261
        %v2384 = vunpack.c.l.b16 %v2262
        %v2385 = vunpack.c.h.b16 %v2262
        %v2386 = vunpack.c.l.b16 %v2263
        %v2387 = vunpack.c.h.b16 %v2263
        %v2388 = vunpack.c.l.b16 %v2264
        %v2389 = vunpack.c.h.b16 %v2264
        %v2390 = vunpack.c.l.b16 %v2265
        %v2391 = vunpack.c.h.b16 %v2265
        %v2392 = vunpack.c.l.b16 %v2266
        %v2393 = vunpack.c.h.b16 %v2266
        %v2394 = vunpack.c.l.b16 %v2267
        %v2395 = vunpack.c.h.b16 %v2267
        %v2396 = vunpack.c.l.b16 %v2268
        %v2397 = vunpack.c.h.b16 %v2268
        %v2398 = vunpack.c.l.b16 %v2269
        %v2399 = vunpack.c.h.b16 %v2269
        %v2400 = vunpack.c.l.b16 %v2270
        %v2401 = vunpack.c.h.b16 %v2270
        %v2402 = vunpack.c.l.b16 %v2271
        %v2403 = vunpack.c.h.b16 %v2271
        %v2404 = vunpack.c.l.b16 %v2272
        %v2405 = vunpack.c.h.b16 %v2272
        %v2406 = vunpack.c.l.b16 %v2273
        %v2407 = vunpack.c.h.b16 %v2273
        %v2408 = vunpack.c.l.b16 %v2274
        %v2409 = vunpack.c.h.b16 %v2274
        %v2410 = vunpack.c.l.b16 %v2275
        %v2411 = vunpack.c.h.b16 %v2275
        %v2412 = vunpack.c.l.b16 %v2276
        %v2413 = vunpack.c.h.b16 %v2276
        %v2414 = vunpack.c.l.b16 %v2277
        %v2415 = vunpack.c.h.b16 %v2277
        %v2416 = vunpack.c.l.b16 %v2278
        %v2417 = vunpack.c.h.b16 %v2278
        %v2418 = vunpack.c.l.b16 %v2279
        %v2419 = vunpack.c.h.b16 %v2279
        %v2420 = vunpack.c.l.b16 %v2280
        %v2421 = vunpack.c.h.b16 %v2280
        %v2422 = vunpack.c.l.b16 %v2281
        %v2423 = vunpack.c.h.b16 %v2281
        %v2424 = vunpack.c.l.b16 %v2282
        %v2425 = vunpack.c.h.b16 %v2282
        %v2426 = vunpack.c.l.b16 %v2283
        %v2427 = vunpack.c.h.b16 %v2283
        %v2428 = vunpack.c.l.b16 %v2284
        %v2429 = vunpack.c.h.b16 %v2284
        %v2430 = vunpack.c.l.b16 %v2285
        %v2431 = vunpack.c.h.b16 %v2285
        %v2432 = vunpack.c.l.b16 %v2286
        %v2433 = vunpack.c.h.b16 %v2286
        %v2434 = vunpack.c.l.b16 %v2287
        %v2435 = vunpack.c.h.b16 %v2287
        %v2436 = vunpack.c.l.b16 %v2288
        %v2437 = vunpack.c.h.b16 %v2288
        %v2438 = vunpack.c.l.b16 %v2289
        %v2439 = vunpack.c.h.b16 %v2289
        %v2440 = vunpack.c.l.b16 %v2290
        %v2441 = vunpack.c.h.b16 %v2290
        %v2442 = vunpack.c.l.b16 %v2291
        %v2443 = vunpack.c.h.b16 %v2291
        %v2444 = vunpack.c.l.b16 %v2292
        %v2445 = vunpack.c.h.b16 %v2292
        %v2446 = vunpack.c.l.b16 %v2293
        %v2447 = vunpack.c.h.b16 %v2293
        %v2448 = vunpack.c.l.b16 %v2294
        %v2449 = vunpack.c.h.b16 %v2294
        %v2450 = vpack.c.b16 %v2356, %v2354
        %v2451 = vpack.c.b16 %v2357, %v2355
        %v2452 = vpack.c.b16 %v2360, %v2358
        %v2453 = vpack.c.b16 %v2361, %v2359
        %v2454 = vpack.c.b16 %v2364, %v2362
        %v2455 = vpack.c.b16 %v2365, %v2363
        %v2456 = vpack.c.b16 %v2368, %v2366
        %v2457 = vpack.c.b16 %v2369, %v2367
        %v2458 = vpack.c.b16 %v2372, %v2370
        %v2459 = vpack.c.b16 %v2373, %v2371
        %v2460 = vpack.c.b16 %v2376, %v2374
        %v2461 = vpack.c.b16 %v2377, %v2375
        %v2462 = vpack.c.b16 %v2380, %v2378
        %v2463 = vpack.c.b16 %v2381, %v2379
        %v2464 = vpack.c.b16 %v2384, %v2382
        %v2465 = vpack.c.b16 %v2385, %v2383
        %v2466 = vpack.c.b16 %v2388, %v2386
        %v2467 = vpack.c.b16 %v2389, %v2387
        %v2468 = vpack.c.b16 %v2392, %v2390
        %v2469 = vpack.c.b16 %v2393, %v2391
        %v2470 = vpack.c.b16 %v2396, %v2394
        %v2471 = vpack.c.b16 %v2397, %v2395
        %v2472 = vpack.c.b16 %v2400, %v2398
        %v2473 = vpack.c.b16 %v2401, %v2399
        %v2474 = vpack.c.b16 %v2404, %v2402
        %v2475 = vpack.c.b16 %v2405, %v2403
        %v2476 = vpack.c.b16 %v2408, %v2406
        %v2477 = vpack.c.b16 %v2409, %v2407
        %v2478 = vpack.c.b16 %v2412, %v2410
        %v2479 = vpack.c.b16 %v2413, %v2411
        %v2480 = vpack.c.b16 %v2416, %v2414
        %v2481 = vpack.c.b16 %v2417, %v2415
        %v2482 = vpack.c.b16 %v2420, %v2418
        %v2483 = vpack.c.b16 %v2421, %v2419
        %v2484 = vpack.c.b16 %v2424, %v2422
        %v2485 = vpack.c.b16 %v2425, %v2423
        %v2486 = vpack.c.b16 %v2428, %v2426
        %v2487 = vpack.c.b16 %v2429, %v2427
        %v2488 = vpack.c.b16 %v2432, %v2430
        %v2489 = vpack.c.b16 %v2433, %v2431
        %v2490 = vpack.c.b16 %v2436, %v2434
        %v2491 = vpack.c.b16 %v2437, %v2435
        %v2492 = vpack.c.b16 %v2440, %v2438
        %v2493 = vpack.c.b16 %v2441, %v2439
        %v2494 = vpack.c.b16 %v2444, %v2442
        %v2495 = vpack.c.b16 %v2445, %v2443
        %v2496 = vpack.c.b16 %v2448, %v2446
        %v2497 = vpack.c.b16 %v2449, %v2447
        %2546 = vmatprep.subr.bf16.mxu0 %v2465
        %2547 = vmatpush1.bf16.msra.mxu0 %v2464
        %2548 = vmatprep.subr.bf16.mxu0 %v2463
        %2549 = vmatpush1.bf16.msra.mxu0 %v2462
        %2550 = vmatprep.subr.bf16.mxu0 %v2461
        %2551 = vmatpush1.bf16.msra.mxu0 %v2460
        %2552 = vmatprep.subr.bf16.mxu0 %v2459
        %2553 = vmatpush1.bf16.msra.mxu0 %v2458
        %2554 = vmatprep.subr.bf16.mxu0 %v2457
        %2555 = vmatpush1.bf16.msra.mxu0 %v2456
        %2556 = vmatprep.subr.bf16.mxu0 %v2455
        %2557 = vmatpush1.bf16.msra.mxu0 %v2454
        %2558 = vmatprep.subr.bf16.mxu0 %v2453
        %2559 = vmatpush1.bf16.msra.mxu0 %v2452
        %2560 = vmatprep.subr.bf16.mxu0 %v2451
        %2561 = vmatpush1.bf16.msra.mxu0 %v2450
        %2562 = vmatprep.subr.bf16.mxu0 %v2481
        %2563 = vmatpush2.bf16.msra.mxu0 %v2480
        %2564 = vmatprep.subr.bf16.mxu0 %v2479
        %2565 = vmatpush2.bf16.msra.mxu0 %v2478
        %2566 = vmatprep.subr.bf16.mxu0 %v2477
        %2567 = vmatpush2.bf16.msra.mxu0 %v2476
        %2568 = vmatprep.subr.bf16.mxu0 %v2475
        %2569 = vmatpush2.bf16.msra.mxu0 %v2474
        %2570 = vmatprep.subr.bf16.mxu0 %v2473
        %2571 = vmatpush2.bf16.msra.mxu0 %v2472
        %2572 = vmatprep.subr.bf16.mxu0 %v2471
        %2573 = vmatpush2.bf16.msra.mxu0 %v2470
        %2574 = vmatprep.subr.bf16.mxu0 %v2469
        %2575 = vmatpush2.bf16.msra.mxu0 %v2468
        %2576 = vmatprep.subr.bf16.mxu0 %v2467
        %2577 = vmatpush2.bf16.msra.mxu0 %v2466
        %2578 = vmatprep.mubr.bf16.mxu0 %v2242
        %2579 = vmatmul.mubr.bf16.gmra.mxu0 %v2241
        %v2580 = vpop.f32.mrf.mxu0
        %v2581 = vadd.f32 %v2299, %v2580
        %v2582 = vpop.f32.mrf.mxu0
        %v2583 = vadd.f32 %v2303, %v2582
        %v2584 = vpop.f32.mrf.mxu0
        %v2585 = vadd.f32 %v2299, %v2584
        %v2586 = vpop.f32.mrf.mxu0
        %v2587 = vadd.f32 %v2303, %v2586
        %2588 = vmatprep.mubr.bf16.mxu0 %v2245
        %2589 = vmatmul.mubr.bf16.gmra.mxu0 %v2244
        %v2590 = vpop.f32.mrf.mxu0
        %v2591 = vadd.f32 %v2299, %v2590
        %v2592 = vpop.f32.mrf.mxu0
        %v2593 = vadd.f32 %v2303, %v2592
        %v2594 = vpop.f32.mrf.mxu0
        %v2595 = vadd.f32 %v2299, %v2594
        %v2596 = vpop.f32.mrf.mxu0
        %v2597 = vadd.f32 %v2303, %v2596
        %2598 = vdwg.mxu0
        %2599 = vmatprep.subr.bf16.mxu0 %v2497
        %2600 = vmatpush1.bf16.msra.mxu0 %v2496
        %2601 = vmatprep.subr.bf16.mxu0 %v2495
        %2602 = vmatpush1.bf16.msra.mxu0 %v2494
        %2603 = vmatprep.subr.bf16.mxu0 %v2493
        %2604 = vmatpush1.bf16.msra.mxu0 %v2492
        %2605 = vmatprep.subr.bf16.mxu0 %v2491
        %2606 = vmatpush1.bf16.msra.mxu0 %v2490
        %2607 = vmatprep.subr.bf16.mxu0 %v2489
        %2608 = vmatpush1.bf16.msra.mxu0 %v2488
        %2609 = vmatprep.subr.bf16.mxu0 %v2487
        %2610 = vmatpush1.bf16.msra.mxu0 %v2486
        %2611 = vmatprep.subr.bf16.mxu0 %v2485
        %2612 = vmatpush1.bf16.msra.mxu0 %v2484
        %2613 = vmatprep.subr.bf16.mxu0 %v2483
        %2614 = vmatpush1.bf16.msra.mxu0 %v2482
        %2615 = vmatprep.subr.bf16.mxu0 0
        %2616 = vmatpush2.bf16.msra.mxu0 0
        %2617 = vmatprep.subr.bf16.mxu0 0
        %2618 = vmatpush2.bf16.msra.mxu0 0
        %2619 = vmatprep.subr.bf16.mxu0 0
        %2620 = vmatpush2.bf16.msra.mxu0 0
        %2621 = vmatprep.subr.bf16.mxu0 0
        %2622 = vmatpush2.bf16.msra.mxu0 0
        %2623 = vmatprep.subr.bf16.mxu0 0
        %2624 = vmatpush2.bf16.msra.mxu0 0
        %2625 = vmatprep.subr.bf16.mxu0 0
        %2626 = vmatpush2.bf16.msra.mxu0 0
        %2627 = vmatprep.subr.bf16.mxu0 0
        %2628 = vmatpush2.bf16.msra.mxu0 0
        %2629 = vmatprep.subr.bf16.mxu0 0
        %2630 = vmatpush2.bf16.msra.mxu0 0
        %2631 = vmatprep.mubr.bf16.mxu0 0
        %2632 = vmatmul.mubr.bf16.gmra.mxu0 %v2243
        %v2633 = vpop.f32.mrf.mxu0
        %v2634 = vadd.f32 %v2581, %v2633
        %v2635 = vpop.f32.mrf.mxu0
        %v2636 = vadd.f32 %v2583, %v2635
        %v2637 = vpop.f32.mrf.mxu0
        %v2638 = vadd.f32 %v2585, %v2637
        %v2639 = vpop.f32.mrf.mxu0
        %v2640 = vadd.f32 %v2587, %v2639
        %2641 = vmatprep.mubr.bf16.mxu0 0
        %2642 = vmatmul.mubr.bf16.gmra.mxu0 %v2246
        %v2643 = vpop.f32.mrf.mxu0
        %v2644 = vadd.f32 %v2591, %v2643
        %v2645 = vpop.f32.mrf.mxu0
        %v2646 = vadd.f32 %v2593, %v2645
        %v2647 = vpop.f32.mrf.mxu0
        %v2648 = vadd.f32 %v2595, %v2647
        %v2649 = vpop.f32.mrf.mxu0
        %v2650 = vadd.f32 %v2597, %v2649
        %2651 = vdwg.mxu0
        %v2652 = vmax.f32 %v2634, 0.0
        %v2653 = vmax.f32 %v2636, 0.0
        %v2654 = vmax.f32 %v2638, 0.0
        %v2655 = vmax.f32 %v2640, 0.0
        %v2656 = vmax.f32 %v2644, 0.0
        %v2657 = vmax.f32 %v2646, 0.0
        %v2658 = vmax.f32 %v2648, 0.0
        %v2659 = vmax.f32 %v2650, 0.0
        %s2660 = scalar_lea.vmem %s8, 3
        %v2661 = vld [vmem:[%s2660] ss:$8 sm:$0x3]
        %v2662 = vrot.slane %v2652, 7
        %v2663 = vrot.slane %v2653, 7
        %v2664 = vrot.slane %v2654, 7
        %v2665 = vrot.slane %v2655, 7
        %v2666 = vrot.slane %v2656, 7
        %v2667 = vrot.slane %v2657, 7
        %v2668 = vrot.slane %v2658, 7
        %v2669 = vrot.slane %v2659, 7
        %v2670 = vsel %vm510, %v2666, %v2668
        %v2671 = vsel %vm510, %v2667, %v2669
        %v2672 = vsel %vm510, %v2664, %v2666
        %v2673 = vsel %vm510, %v2665, %v2667
        %v2674 = vsel %vm510, %v2662, %v2664
        %v2675 = vsel %vm510, %v2663, %v2665
        %v2676 = vsel %vm510, %v2668, %v2662
        %v2677 = vsel %vm510, %v2669, %v2663
        %v2678 = vsel %vm2209, 0.0, %v2676
        %v2679 = vsel %vm2209, 0.0, %v2677
        %v2680 = vsel %vm2210, 0.0, %v2674
        %v2681 = vsel %vm2210, 0.0, %v2675
        %v2682 = vsel %vm2211, 0.0, %v2672
        %v2683 = vsel %vm2211, 0.0, %v2673
        %v2684 = vsel %vm2212, 0.0, %v2670
        %v2685 = vsel %vm2212, 0.0, %v2671
        %v2686 = vrot.slane %v2652, 1
        %v2687 = vrot.slane %v2653, 1
        %v2688 = vrot.slane %v2654, 1
        %v2689 = vrot.slane %v2655, 1
        %v2690 = vrot.slane %v2656, 1
        %v2691 = vrot.slane %v2657, 1
        %v2692 = vrot.slane %v2658, 1
        %v2693 = vrot.slane %v2659, 1
        %v2694 = vsel %vm543, %v2690, %v2692
        %v2695 = vsel %vm543, %v2691, %v2693
        %v2696 = vsel %vm543, %v2688, %v2690
        %v2697 = vsel %vm543, %v2689, %v2691
        %v2698 = vsel %vm543, %v2686, %v2688
        %v2699 = vsel %vm543, %v2687, %v2689
        %v2700 = vsel %vm543, %v2692, %v2686
        %v2701 = vsel %vm543, %v2693, %v2687
        %v2702 = vsel %vm2225, 0.0, %v2698
        %v2703 = vsel %vm2225, 0.0, %v2699
        %v2704 = vsel %vm2226, 0.0, %v2696
        %v2705 = vsel %vm2226, 0.0, %v2697
        %v2706 = vsel %vm2227, 0.0, %v2694
        %v2707 = vsel %vm2227, 0.0, %v2695
        %v2708 = vsel %vm2228, 0.0, %v2700
        %v2709 = vsel %vm2228, 0.0, %v2701
        %v2710 = vpack.c.bf16 %v2680, %v2678
        %v2711 = vpack.c.bf16 %v2681, %v2679
        %v2712 = vpack.c.bf16 %v2654, %v2652
        %v2713 = vpack.c.bf16 %v2655, %v2653
        %v2714 = vpack.c.bf16 %v2704, %v2702
        %v2715 = vpack.c.bf16 %v2705, %v2703
        %v2716 = vpack.c.bf16 %v2684, %v2682
        %v2717 = vpack.c.bf16 %v2685, %v2683
        %v2718 = vpack.c.bf16 %v2658, %v2656
        %v2719 = vpack.c.bf16 %v2659, %v2657
        %v2720 = vpack.c.bf16 %v2708, %v2706
        %v2721 = vpack.c.bf16 %v2709, %v2707
        %v2722 = vld [vmem:[%s4] sm:$0xff]
        %v2723 = vld [vmem:[%s4 + $0x8] sm:$0xff]
        %v2724 = vld [vmem:[%s4 + $0x10] sm:$0xff]
        %v2725 = vld [vmem:[%s4 + $0x18] sm:$0xff]
        %v2726 = vld [vmem:[%s4 + $0x20] sm:$0xff]
        %v2727 = vld [vmem:[%s4 + $0x28] sm:$0xff]
        %v2728 = vld [vmem:[%s4 + $0x30] sm:$0xff]
        %v2729 = vld [vmem:[%s4 + $0x38] sm:$0xff]
        %v2730 = vld [vmem:[%s4 + $0x40] sm:$0xff]
        %v2731 = vld [vmem:[%s4 + $0x48] sm:$0xff]
        %v2732 = vld [vmem:[%s4 + $0x50] sm:$0xff]
        %v2733 = vld [vmem:[%s4 + $0x58] sm:$0xff]
        %v2734 = vld [vmem:[%s4 + $0x60] sm:$0xff]
        %v2735 = vld [vmem:[%s4 + $0x68] sm:$0xff]
        %v2736 = vld [vmem:[%s4 + $0x70] sm:$0xff]
        %v2737 = vld [vmem:[%s4 + $0x78] sm:$0xff]
        %v2738 = vld [vmem:[%s4 + $0x80] sm:$0xff]
        %v2739 = vld [vmem:[%s4 + $0x88] sm:$0xff]
        %v2740 = vld [vmem:[%s4 + $0x90] sm:$0xff]
        %v2741 = vld [vmem:[%s4 + $0x98] sm:$0xff]
        %v2742 = vld [vmem:[%s4 + $0xa0] sm:$0xff]
        %v2743 = vld [vmem:[%s4 + $0xa8] sm:$0xff]
        %v2744 = vld [vmem:[%s4 + $0xb0] sm:$0xff]
        %v2745 = vld [vmem:[%s4 + $0xb8] sm:$0xff]
        %v2746 = vld [vmem:[%s4 + $0xc0] sm:$0xff]
        %v2747 = vld [vmem:[%s4 + $0xc8] sm:$0xff]
        %v2748 = vld [vmem:[%s4 + $0xd0] sm:$0xff]
        %v2749 = vld [vmem:[%s4 + $0xd8] sm:$0xff]
        %v2750 = vld [vmem:[%s4 + $0xe0] sm:$0xff]
        %v2751 = vld [vmem:[%s4 + $0xe8] sm:$0xff]
        %v2752 = vld [vmem:[%s4 + $0xf0] sm:$0xff]
        %v2753 = vld [vmem:[%s4 + $0xf8] sm:$0xff]
        %v2754 = vld [vmem:[%s4 + $0x100] sm:$0xff]
        %v2755 = vld [vmem:[%s4 + $0x108] sm:$0xff]
        %v2756 = vld [vmem:[%s4 + $0x110] sm:$0xff]
        %v2757 = vld [vmem:[%s4 + $0x118] sm:$0xff]
        %v2758 = vld [vmem:[%s4 + $0x120] sm:$0xff]
        %v2759 = vld [vmem:[%s4 + $0x128] sm:$0xff]
        %v2760 = vld [vmem:[%s4 + $0x130] sm:$0xff]
        %v2761 = vld [vmem:[%s4 + $0x138] sm:$0xff]
        %v2762 = vld [vmem:[%s4 + $0x140] sm:$0xff]
        %v2763 = vld [vmem:[%s4 + $0x148] sm:$0xff]
        %v2764 = vld [vmem:[%s4 + $0x150] sm:$0xff]
        %v2765 = vld [vmem:[%s4 + $0x158] sm:$0xff]
        %v2766 = vld [vmem:[%s4 + $0x160] sm:$0xff]
        %v2767 = vld [vmem:[%s4 + $0x168] sm:$0xff]
        %v2768 = vld [vmem:[%s4 + $0x170] sm:$0xff]
        %v2769 = vld [vmem:[%s4 + $0x178] sm:$0xff]
        %v2770 = vld [vmem:[%s4 + $0x180] sm:$0xff]
        %v2771 = vld [vmem:[%s4 + $0x188] sm:$0xff]
        %v2772 = vld [vmem:[%s4 + $0x190] sm:$0xff]
        %v2773 = vld [vmem:[%s4 + $0x198] sm:$0xff]
        %v2774 = vld [vmem:[%s4 + $0x1a0] sm:$0xff]
        %v2775 = vld [vmem:[%s4 + $0x1a8] sm:$0xff]
        %v2776 = vld [vmem:[%s4 + $0x1b0] sm:$0xff]
        %v2777 = vld [vmem:[%s4 + $0x1b8] sm:$0xff]
        %v2778 = vld [vmem:[%s4 + $0x1c0] sm:$0xff]
        %v2779 = vld [vmem:[%s4 + $0x1c8] sm:$0xff]
        %v2780 = vld [vmem:[%s4 + $0x1d0] sm:$0xff]
        %v2781 = vld [vmem:[%s4 + $0x1d8] sm:$0xff]
        %v2782 = vld [vmem:[%s4 + $0x1e0] sm:$0xff]
        %v2783 = vld [vmem:[%s4 + $0x1e8] sm:$0xff]
        %v2784 = vld [vmem:[%s4 + $0x1f0] sm:$0xff]
        %v2785 = vld [vmem:[%s4 + $0x1f8] sm:$0xff]
        %v2786 = vld [vmem:[%s4 + $0x200] sm:$0xff]
        %v2787 = vld [vmem:[%s4 + $0x208] sm:$0xff]
        %v2788 = vld [vmem:[%s4 + $0x210] sm:$0xff]
        %v2789 = vld [vmem:[%s4 + $0x218] sm:$0xff]
        %v2790 = vld [vmem:[%s4 + $0x220] sm:$0xff]
        %v2791 = vld [vmem:[%s4 + $0x228] sm:$0xff]
        %v2792 = vld [vmem:[%s4 + $0x230] sm:$0xff]
        %v2793 = vld [vmem:[%s4 + $0x238] sm:$0xff]
        %v2794 = vld [vmem:[%s4 + $0x240] sm:$0xff]
        %v2795 = vld [vmem:[%s4 + $0x248] sm:$0xff]
        %v2796 = vld [vmem:[%s4 + $0x250] sm:$0xff]
        %v2797 = vld [vmem:[%s4 + $0x258] sm:$0xff]
        %v2798 = vld [vmem:[%s4 + $0x260] sm:$0xff]
        %v2799 = vld [vmem:[%s4 + $0x268] sm:$0xff]
        %v2800 = vld [vmem:[%s4 + $0x270] sm:$0xff]
        %v2801 = vld [vmem:[%s4 + $0x278] sm:$0xff]
        %v2802 = vld [vmem:[%s4 + $0x280] sm:$0xff]
        %v2803 = vld [vmem:[%s4 + $0x288] sm:$0xff]
        %v2804 = vld [vmem:[%s4 + $0x290] sm:$0xff]
        %v2805 = vld [vmem:[%s4 + $0x298] sm:$0xff]
        %v2806 = vld [vmem:[%s4 + $0x2a0] sm:$0xff]
        %v2807 = vld [vmem:[%s4 + $0x2a8] sm:$0xff]
        %v2808 = vld [vmem:[%s4 + $0x2b0] sm:$0xff]
        %v2809 = vld [vmem:[%s4 + $0x2b8] sm:$0xff]
        %v2810 = vld [vmem:[%s4 + $0x2c0] sm:$0xff]
        %v2811 = vld [vmem:[%s4 + $0x2c8] sm:$0xff]
        %v2812 = vld [vmem:[%s4 + $0x2d0] sm:$0xff]
        %v2813 = vld [vmem:[%s4 + $0x2d8] sm:$0xff]
        %v2814 = vld [vmem:[%s4 + $0x2e0] sm:$0xff]
        %v2815 = vld [vmem:[%s4 + $0x2e8] sm:$0xff]
        %v2816 = vld [vmem:[%s4 + $0x2f0] sm:$0xff]
        %v2817 = vld [vmem:[%s4 + $0x2f8] sm:$0xff]
        %v2819 = vlaneseq
        %v2820 = vshrl.u32 %v2819, 7
        %v2821 = vsub.s32 0, %v2820
        %v2822 = vrot.slane %v2661, %v2821
        %v2823 = vlaneseq
        %v2824 = vshrl.u32 %v2823, 7
        %v2825 = vsub.s32 1, %v2824
        %v2826 = vrot.slane %v2661, %v2825
        %v2925 = vunpack.c.l.b16 %v2722
        %v2926 = vunpack.c.h.b16 %v2722
        %v2927 = vunpack.c.l.b16 %v2723
        %v2928 = vunpack.c.h.b16 %v2723
        %v2929 = vunpack.c.l.b16 %v2724
        %v2930 = vunpack.c.h.b16 %v2724
        %v2931 = vunpack.c.l.b16 %v2725
        %v2932 = vunpack.c.h.b16 %v2725
        %v2933 = vunpack.c.l.b16 %v2726
        %v2934 = vunpack.c.h.b16 %v2726
        %v2935 = vunpack.c.l.b16 %v2727
        %v2936 = vunpack.c.h.b16 %v2727
        %v2937 = vunpack.c.l.b16 %v2728
        %v2938 = vunpack.c.h.b16 %v2728
        %v2939 = vunpack.c.l.b16 %v2729
        %v2940 = vunpack.c.h.b16 %v2729
        %v2941 = vunpack.c.l.b16 %v2730
        %v2942 = vunpack.c.h.b16 %v2730
        %v2943 = vunpack.c.l.b16 %v2731
        %v2944 = vunpack.c.h.b16 %v2731
        %v2945 = vunpack.c.l.b16 %v2732
        %v2946 = vunpack.c.h.b16 %v2732
        %v2947 = vunpack.c.l.b16 %v2733
        %v2948 = vunpack.c.h.b16 %v2733
        %v2949 = vunpack.c.l.b16 %v2734
        %v2950 = vunpack.c.h.b16 %v2734
        %v2951 = vunpack.c.l.b16 %v2735
        %v2952 = vunpack.c.h.b16 %v2735
        %v2953 = vunpack.c.l.b16 %v2736
        %v2954 = vunpack.c.h.b16 %v2736
        %v2955 = vunpack.c.l.b16 %v2737
        %v2956 = vunpack.c.h.b16 %v2737
        %v2957 = vunpack.c.l.b16 %v2738
        %v2958 = vunpack.c.h.b16 %v2738
        %v2959 = vunpack.c.l.b16 %v2739
        %v2960 = vunpack.c.h.b16 %v2739
        %v2961 = vunpack.c.l.b16 %v2740
        %v2962 = vunpack.c.h.b16 %v2740
        %v2963 = vunpack.c.l.b16 %v2741
        %v2964 = vunpack.c.h.b16 %v2741
        %v2965 = vunpack.c.l.b16 %v2742
        %v2966 = vunpack.c.h.b16 %v2742
        %v2967 = vunpack.c.l.b16 %v2743
        %v2968 = vunpack.c.h.b16 %v2743
        %v2969 = vunpack.c.l.b16 %v2744
        %v2970 = vunpack.c.h.b16 %v2744
        %v2971 = vunpack.c.l.b16 %v2745
        %v2972 = vunpack.c.h.b16 %v2745
        %v2973 = vunpack.c.l.b16 %v2746
        %v2974 = vunpack.c.h.b16 %v2746
        %v2975 = vunpack.c.l.b16 %v2747
        %v2976 = vunpack.c.h.b16 %v2747
        %v2977 = vunpack.c.l.b16 %v2748
        %v2978 = vunpack.c.h.b16 %v2748
        %v2979 = vunpack.c.l.b16 %v2749
        %v2980 = vunpack.c.h.b16 %v2749
        %v2981 = vunpack.c.l.b16 %v2750
        %v2982 = vunpack.c.h.b16 %v2750
        %v2983 = vunpack.c.l.b16 %v2751
        %v2984 = vunpack.c.h.b16 %v2751
        %v2985 = vunpack.c.l.b16 %v2752
        %v2986 = vunpack.c.h.b16 %v2752
        %v2987 = vunpack.c.l.b16 %v2753
        %v2988 = vunpack.c.h.b16 %v2753
        %v2989 = vunpack.c.l.b16 %v2754
        %v2990 = vunpack.c.h.b16 %v2754
        %v2991 = vunpack.c.l.b16 %v2755
        %v2992 = vunpack.c.h.b16 %v2755
        %v2993 = vunpack.c.l.b16 %v2756
        %v2994 = vunpack.c.h.b16 %v2756
        %v2995 = vunpack.c.l.b16 %v2757
        %v2996 = vunpack.c.h.b16 %v2757
        %v2997 = vunpack.c.l.b16 %v2758
        %v2998 = vunpack.c.h.b16 %v2758
        %v2999 = vunpack.c.l.b16 %v2759
        %v3000 = vunpack.c.h.b16 %v2759
        %v3001 = vunpack.c.l.b16 %v2760
        %v3002 = vunpack.c.h.b16 %v2760
        %v3003 = vunpack.c.l.b16 %v2761
        %v3004 = vunpack.c.h.b16 %v2761
        %v3005 = vunpack.c.l.b16 %v2762
        %v3006 = vunpack.c.h.b16 %v2762
        %v3007 = vunpack.c.l.b16 %v2763
        %v3008 = vunpack.c.h.b16 %v2763
        %v3009 = vunpack.c.l.b16 %v2764
        %v3010 = vunpack.c.h.b16 %v2764
        %v3011 = vunpack.c.l.b16 %v2765
        %v3012 = vunpack.c.h.b16 %v2765
        %v3013 = vunpack.c.l.b16 %v2766
        %v3014 = vunpack.c.h.b16 %v2766
        %v3015 = vunpack.c.l.b16 %v2767
        %v3016 = vunpack.c.h.b16 %v2767
        %v3017 = vunpack.c.l.b16 %v2768
        %v3018 = vunpack.c.h.b16 %v2768
        %v3019 = vunpack.c.l.b16 %v2769
        %v3020 = vunpack.c.h.b16 %v2769
        %v3021 = vunpack.c.l.b16 %v2770
        %v3022 = vunpack.c.h.b16 %v2770
        %v3023 = vunpack.c.l.b16 %v2771
        %v3024 = vunpack.c.h.b16 %v2771
        %v3025 = vunpack.c.l.b16 %v2772
        %v3026 = vunpack.c.h.b16 %v2772
        %v3027 = vunpack.c.l.b16 %v2773
        %v3028 = vunpack.c.h.b16 %v2773
        %v3029 = vunpack.c.l.b16 %v2774
        %v3030 = vunpack.c.h.b16 %v2774
        %v3031 = vunpack.c.l.b16 %v2775
        %v3032 = vunpack.c.h.b16 %v2775
        %v3033 = vunpack.c.l.b16 %v2776
        %v3034 = vunpack.c.h.b16 %v2776
        %v3035 = vunpack.c.l.b16 %v2777
        %v3036 = vunpack.c.h.b16 %v2777
        %v3037 = vunpack.c.l.b16 %v2778
        %v3038 = vunpack.c.h.b16 %v2778
        %v3039 = vunpack.c.l.b16 %v2779
        %v3040 = vunpack.c.h.b16 %v2779
        %v3041 = vunpack.c.l.b16 %v2780
        %v3042 = vunpack.c.h.b16 %v2780
        %v3043 = vunpack.c.l.b16 %v2781
        %v3044 = vunpack.c.h.b16 %v2781
        %v3045 = vunpack.c.l.b16 %v2782
        %v3046 = vunpack.c.h.b16 %v2782
        %v3047 = vunpack.c.l.b16 %v2783
        %v3048 = vunpack.c.h.b16 %v2783
        %v3049 = vunpack.c.l.b16 %v2784
        %v3050 = vunpack.c.h.b16 %v2784
        %v3051 = vunpack.c.l.b16 %v2785
        %v3052 = vunpack.c.h.b16 %v2785
        %v3053 = vunpack.c.l.b16 %v2786
        %v3054 = vunpack.c.h.b16 %v2786
        %v3055 = vunpack.c.l.b16 %v2787
        %v3056 = vunpack.c.h.b16 %v2787
        %v3057 = vunpack.c.l.b16 %v2788
        %v3058 = vunpack.c.h.b16 %v2788
        %v3059 = vunpack.c.l.b16 %v2789
        %v3060 = vunpack.c.h.b16 %v2789
        %v3061 = vunpack.c.l.b16 %v2790
        %v3062 = vunpack.c.h.b16 %v2790
        %v3063 = vunpack.c.l.b16 %v2791
        %v3064 = vunpack.c.h.b16 %v2791
        %v3065 = vunpack.c.l.b16 %v2792
        %v3066 = vunpack.c.h.b16 %v2792
        %v3067 = vunpack.c.l.b16 %v2793
        %v3068 = vunpack.c.h.b16 %v2793
        %v3069 = vunpack.c.l.b16 %v2794
        %v3070 = vunpack.c.h.b16 %v2794
        %v3071 = vunpack.c.l.b16 %v2795
        %v3072 = vunpack.c.h.b16 %v2795
        %v3073 = vunpack.c.l.b16 %v2796
        %v3074 = vunpack.c.h.b16 %v2796
        %v3075 = vunpack.c.l.b16 %v2797
        %v3076 = vunpack.c.h.b16 %v2797
        %v3077 = vunpack.c.l.b16 %v2798
        %v3078 = vunpack.c.h.b16 %v2798
        %v3079 = vunpack.c.l.b16 %v2799
        %v3080 = vunpack.c.h.b16 %v2799
        %v3081 = vunpack.c.l.b16 %v2800
        %v3082 = vunpack.c.h.b16 %v2800
        %v3083 = vunpack.c.l.b16 %v2801
        %v3084 = vunpack.c.h.b16 %v2801
        %v3085 = vunpack.c.l.b16 %v2802
        %v3086 = vunpack.c.h.b16 %v2802
        %v3087 = vunpack.c.l.b16 %v2803
        %v3088 = vunpack.c.h.b16 %v2803
        %v3089 = vunpack.c.l.b16 %v2804
        %v3090 = vunpack.c.h.b16 %v2804
        %v3091 = vunpack.c.l.b16 %v2805
        %v3092 = vunpack.c.h.b16 %v2805
        %v3093 = vunpack.c.l.b16 %v2806
        %v3094 = vunpack.c.h.b16 %v2806
        %v3095 = vunpack.c.l.b16 %v2807
        %v3096 = vunpack.c.h.b16 %v2807
        %v3097 = vunpack.c.l.b16 %v2808
        %v3098 = vunpack.c.h.b16 %v2808
        %v3099 = vunpack.c.l.b16 %v2809
        %v3100 = vunpack.c.h.b16 %v2809
        %v3101 = vunpack.c.l.b16 %v2810
        %v3102 = vunpack.c.h.b16 %v2810
        %v3103 = vunpack.c.l.b16 %v2811
        %v3104 = vunpack.c.h.b16 %v2811
        %v3105 = vunpack.c.l.b16 %v2812
        %v3106 = vunpack.c.h.b16 %v2812
        %v3107 = vunpack.c.l.b16 %v2813
        %v3108 = vunpack.c.h.b16 %v2813
        %v3109 = vunpack.c.l.b16 %v2814
        %v3110 = vunpack.c.h.b16 %v2814
        %v3111 = vunpack.c.l.b16 %v2815
        %v3112 = vunpack.c.h.b16 %v2815
        %v3113 = vunpack.c.l.b16 %v2816
        %v3114 = vunpack.c.h.b16 %v2816
        %v3115 = vunpack.c.l.b16 %v2817
        %v3116 = vunpack.c.h.b16 %v2817
        %v3117 = vpack.c.b16 %v2927, %v2925
        %v3118 = vpack.c.b16 %v2928, %v2926
        %v3119 = vpack.c.b16 %v2931, %v2929
        %v3120 = vpack.c.b16 %v2932, %v2930
        %v3121 = vpack.c.b16 %v2935, %v2933
        %v3122 = vpack.c.b16 %v2936, %v2934
        %v3123 = vpack.c.b16 %v2939, %v2937
        %v3124 = vpack.c.b16 %v2940, %v2938
        %v3125 = vpack.c.b16 %v2943, %v2941
        %v3126 = vpack.c.b16 %v2944, %v2942
        %v3127 = vpack.c.b16 %v2947, %v2945
        %v3128 = vpack.c.b16 %v2948, %v2946
        %v3129 = vpack.c.b16 %v2951, %v2949
        %v3130 = vpack.c.b16 %v2952, %v2950
        %v3131 = vpack.c.b16 %v2955, %v2953
        %v3132 = vpack.c.b16 %v2956, %v2954
        %v3133 = vpack.c.b16 %v2959, %v2957
        %v3134 = vpack.c.b16 %v2960, %v2958
        %v3135 = vpack.c.b16 %v2963, %v2961
        %v3136 = vpack.c.b16 %v2964, %v2962
        %v3137 = vpack.c.b16 %v2967, %v2965
        %v3138 = vpack.c.b16 %v2968, %v2966
        %v3139 = vpack.c.b16 %v2971, %v2969
        %v3140 = vpack.c.b16 %v2972, %v2970
        %v3141 = vpack.c.b16 %v2975, %v2973
        %v3142 = vpack.c.b16 %v2976, %v2974
        %v3143 = vpack.c.b16 %v2979, %v2977
        %v3144 = vpack.c.b16 %v2980, %v2978
        %v3145 = vpack.c.b16 %v2983, %v2981
        %v3146 = vpack.c.b16 %v2984, %v2982
        %v3147 = vpack.c.b16 %v2987, %v2985
        %v3148 = vpack.c.b16 %v2988, %v2986
        %v3149 = vpack.c.b16 %v2991, %v2989
        %v3150 = vpack.c.b16 %v2992, %v2990
        %v3151 = vpack.c.b16 %v2995, %v2993
        %v3152 = vpack.c.b16 %v2996, %v2994
        %v3153 = vpack.c.b16 %v2999, %v2997
        %v3154 = vpack.c.b16 %v3000, %v2998
        %v3155 = vpack.c.b16 %v3003, %v3001
        %v3156 = vpack.c.b16 %v3004, %v3002
        %v3157 = vpack.c.b16 %v3007, %v3005
        %v3158 = vpack.c.b16 %v3008, %v3006
        %v3159 = vpack.c.b16 %v3011, %v3009
        %v3160 = vpack.c.b16 %v3012, %v3010
        %v3161 = vpack.c.b16 %v3015, %v3013
        %v3162 = vpack.c.b16 %v3016, %v3014
        %v3163 = vpack.c.b16 %v3019, %v3017
        %v3164 = vpack.c.b16 %v3020, %v3018
        %v3165 = vpack.c.b16 %v3023, %v3021
        %v3166 = vpack.c.b16 %v3024, %v3022
        %v3167 = vpack.c.b16 %v3027, %v3025
        %v3168 = vpack.c.b16 %v3028, %v3026
        %v3169 = vpack.c.b16 %v3031, %v3029
        %v3170 = vpack.c.b16 %v3032, %v3030
        %v3171 = vpack.c.b16 %v3035, %v3033
        %v3172 = vpack.c.b16 %v3036, %v3034
        %v3173 = vpack.c.b16 %v3039, %v3037
        %v3174 = vpack.c.b16 %v3040, %v3038
        %v3175 = vpack.c.b16 %v3043, %v3041
        %v3176 = vpack.c.b16 %v3044, %v3042
        %v3177 = vpack.c.b16 %v3047, %v3045
        %v3178 = vpack.c.b16 %v3048, %v3046
        %v3179 = vpack.c.b16 %v3051, %v3049
        %v3180 = vpack.c.b16 %v3052, %v3050
        %v3181 = vpack.c.b16 %v3055, %v3053
        %v3182 = vpack.c.b16 %v3056, %v3054
        %v3183 = vpack.c.b16 %v3059, %v3057
        %v3184 = vpack.c.b16 %v3060, %v3058
        %v3185 = vpack.c.b16 %v3063, %v3061
        %v3186 = vpack.c.b16 %v3064, %v3062
        %v3187 = vpack.c.b16 %v3067, %v3065
        %v3188 = vpack.c.b16 %v3068, %v3066
        %v3189 = vpack.c.b16 %v3071, %v3069
        %v3190 = vpack.c.b16 %v3072, %v3070
        %v3191 = vpack.c.b16 %v3075, %v3073
        %v3192 = vpack.c.b16 %v3076, %v3074
        %v3193 = vpack.c.b16 %v3079, %v3077
        %v3194 = vpack.c.b16 %v3080, %v3078
        %v3195 = vpack.c.b16 %v3083, %v3081
        %v3196 = vpack.c.b16 %v3084, %v3082
        %v3197 = vpack.c.b16 %v3087, %v3085
        %v3198 = vpack.c.b16 %v3088, %v3086
        %v3199 = vpack.c.b16 %v3091, %v3089
        %v3200 = vpack.c.b16 %v3092, %v3090
        %v3201 = vpack.c.b16 %v3095, %v3093
        %v3202 = vpack.c.b16 %v3096, %v3094
        %v3203 = vpack.c.b16 %v3099, %v3097
        %v3204 = vpack.c.b16 %v3100, %v3098
        %v3205 = vpack.c.b16 %v3103, %v3101
        %v3206 = vpack.c.b16 %v3104, %v3102
        %v3207 = vpack.c.b16 %v3107, %v3105
        %v3208 = vpack.c.b16 %v3108, %v3106
        %v3209 = vpack.c.b16 %v3111, %v3109
        %v3210 = vpack.c.b16 %v3112, %v3110
        %v3211 = vpack.c.b16 %v3115, %v3113
        %v3212 = vpack.c.b16 %v3116, %v3114
        %3309 = vmatprep.subr.bf16.mxu0 %v3132
        %3310 = vmatpush1.bf16.msra.mxu0 %v3131
        %3311 = vmatprep.subr.bf16.mxu0 %v3130
        %3312 = vmatpush1.bf16.msra.mxu0 %v3129
        %3313 = vmatprep.subr.bf16.mxu0 %v3128
        %3314 = vmatpush1.bf16.msra.mxu0 %v3127
        %3315 = vmatprep.subr.bf16.mxu0 %v3126
        %3316 = vmatpush1.bf16.msra.mxu0 %v3125
        %3317 = vmatprep.subr.bf16.mxu0 %v3124
        %3318 = vmatpush1.bf16.msra.mxu0 %v3123
        %3319 = vmatprep.subr.bf16.mxu0 %v3122
        %3320 = vmatpush1.bf16.msra.mxu0 %v3121
        %3321 = vmatprep.subr.bf16.mxu0 %v3120
        %3322 = vmatpush1.bf16.msra.mxu0 %v3119
        %3323 = vmatprep.subr.bf16.mxu0 %v3118
        %3324 = vmatpush1.bf16.msra.mxu0 %v3117
        %3325 = vmatprep.subr.bf16.mxu0 %v3148
        %3326 = vmatpush2.bf16.msra.mxu0 %v3147
        %3327 = vmatprep.subr.bf16.mxu0 %v3146
        %3328 = vmatpush2.bf16.msra.mxu0 %v3145
        %3329 = vmatprep.subr.bf16.mxu0 %v3144
        %3330 = vmatpush2.bf16.msra.mxu0 %v3143
        %3331 = vmatprep.subr.bf16.mxu0 %v3142
        %3332 = vmatpush2.bf16.msra.mxu0 %v3141
        %3333 = vmatprep.subr.bf16.mxu0 %v3140
        %3334 = vmatpush2.bf16.msra.mxu0 %v3139
        %3335 = vmatprep.subr.bf16.mxu0 %v3138
        %3336 = vmatpush2.bf16.msra.mxu0 %v3137
        %3337 = vmatprep.subr.bf16.mxu0 %v3136
        %3338 = vmatpush2.bf16.msra.mxu0 %v3135
        %3339 = vmatprep.subr.bf16.mxu0 %v3134
        %3340 = vmatpush2.bf16.msra.mxu0 %v3133
        %3341 = vmatprep.mubr.bf16.mxu0 %v2711
        %3342 = vmatmul.mubr.bf16.gmra.mxu0 %v2710
        %v3343 = vpop.f32.mrf.mxu0
        %v3344 = vadd.f32 %v2822, %v3343
        %v3345 = vpop.f32.mrf.mxu0
        %v3346 = vadd.f32 %v2826, %v3345
        %v3347 = vpop.f32.mrf.mxu0
        %v3348 = vadd.f32 %v2822, %v3347
        %v3349 = vpop.f32.mrf.mxu0
        %v3350 = vadd.f32 %v2826, %v3349
        %3351 = vmatprep.mubr.bf16.mxu0 %v2717
        %3352 = vmatmul.mubr.bf16.gmra.mxu0 %v2716
        %v3353 = vpop.f32.mrf.mxu0
        %v3354 = vadd.f32 %v2822, %v3353
        %v3355 = vpop.f32.mrf.mxu0
        %v3356 = vadd.f32 %v2826, %v3355
        %v3357 = vpop.f32.mrf.mxu0
        %v3358 = vadd.f32 %v2822, %v3357
        %v3359 = vpop.f32.mrf.mxu0
        %v3360 = vadd.f32 %v2826, %v3359
        %3361 = vdwg.mxu0
        %3362 = vmatprep.subr.bf16.mxu0 %v3164
        %3363 = vmatpush1.bf16.msra.mxu0 %v3163
        %3364 = vmatprep.subr.bf16.mxu0 %v3162
        %3365 = vmatpush1.bf16.msra.mxu0 %v3161
        %3366 = vmatprep.subr.bf16.mxu0 %v3160
        %3367 = vmatpush1.bf16.msra.mxu0 %v3159
        %3368 = vmatprep.subr.bf16.mxu0 %v3158
        %3369 = vmatpush1.bf16.msra.mxu0 %v3157
        %3370 = vmatprep.subr.bf16.mxu0 %v3156
        %3371 = vmatpush1.bf16.msra.mxu0 %v3155
        %3372 = vmatprep.subr.bf16.mxu0 %v3154
        %3373 = vmatpush1.bf16.msra.mxu0 %v3153
        %3374 = vmatprep.subr.bf16.mxu0 %v3152
        %3375 = vmatpush1.bf16.msra.mxu0 %v3151
        %3376 = vmatprep.subr.bf16.mxu0 %v3150
        %3377 = vmatpush1.bf16.msra.mxu0 %v3149
        %3378 = vmatprep.subr.bf16.mxu0 %v3180
        %3379 = vmatpush2.bf16.msra.mxu0 %v3179
        %3380 = vmatprep.subr.bf16.mxu0 %v3178
        %3381 = vmatpush2.bf16.msra.mxu0 %v3177
        %3382 = vmatprep.subr.bf16.mxu0 %v3176
        %3383 = vmatpush2.bf16.msra.mxu0 %v3175
        %3384 = vmatprep.subr.bf16.mxu0 %v3174
        %3385 = vmatpush2.bf16.msra.mxu0 %v3173
        %3386 = vmatprep.subr.bf16.mxu0 %v3172
        %3387 = vmatpush2.bf16.msra.mxu0 %v3171
        %3388 = vmatprep.subr.bf16.mxu0 %v3170
        %3389 = vmatpush2.bf16.msra.mxu0 %v3169
        %3390 = vmatprep.subr.bf16.mxu0 %v3168
        %3391 = vmatpush2.bf16.msra.mxu0 %v3167
        %3392 = vmatprep.subr.bf16.mxu0 %v3166
        %3393 = vmatpush2.bf16.msra.mxu0 %v3165
        %3394 = vmatprep.mubr.bf16.mxu0 %v2713
        %3395 = vmatmul.mubr.bf16.gmra.mxu0 %v2712
        %v3396 = vpop.f32.mrf.mxu0
        %v3397 = vadd.f32 %v3344, %v3396
        %v3398 = vpop.f32.mrf.mxu0
        %v3399 = vadd.f32 %v3346, %v3398
        %v3400 = vpop.f32.mrf.mxu0
        %v3401 = vadd.f32 %v3348, %v3400
        %v3402 = vpop.f32.mrf.mxu0
        %v3403 = vadd.f32 %v3350, %v3402
        %3404 = vmatprep.mubr.bf16.mxu0 %v2719
        %3405 = vmatmul.mubr.bf16.gmra.mxu0 %v2718
        %v3406 = vpop.f32.mrf.mxu0
        %v3407 = vadd.f32 %v3354, %v3406
        %v3408 = vpop.f32.mrf.mxu0
        %v3409 = vadd.f32 %v3356, %v3408
        %v3410 = vpop.f32.mrf.mxu0
        %v3411 = vadd.f32 %v3358, %v3410
        %v3412 = vpop.f32.mrf.mxu0
        %v3413 = vadd.f32 %v3360, %v3412
        %3414 = vdwg.mxu0
        %3415 = vmatprep.subr.bf16.mxu0 %v3196
        %3416 = vmatpush1.bf16.msra.mxu0 %v3195
        %3417 = vmatprep.subr.bf16.mxu0 %v3194
        %3418 = vmatpush1.bf16.msra.mxu0 %v3193
        %3419 = vmatprep.subr.bf16.mxu0 %v3192
        %3420 = vmatpush1.bf16.msra.mxu0 %v3191
        %3421 = vmatprep.subr.bf16.mxu0 %v3190
        %3422 = vmatpush1.bf16.msra.mxu0 %v3189
        %3423 = vmatprep.subr.bf16.mxu0 %v3188
        %3424 = vmatpush1.bf16.msra.mxu0 %v3187
        %3425 = vmatprep.subr.bf16.mxu0 %v3186
        %3426 = vmatpush1.bf16.msra.mxu0 %v3185
        %3427 = vmatprep.subr.bf16.mxu0 %v3184
        %3428 = vmatpush1.bf16.msra.mxu0 %v3183
        %3429 = vmatprep.subr.bf16.mxu0 %v3182
        %3430 = vmatpush1.bf16.msra.mxu0 %v3181
        %3431 = vmatprep.subr.bf16.mxu0 %v3212
        %3432 = vmatpush2.bf16.msra.mxu0 %v3211
        %3433 = vmatprep.subr.bf16.mxu0 %v3210
        %3434 = vmatpush2.bf16.msra.mxu0 %v3209
        %3435 = vmatprep.subr.bf16.mxu0 %v3208
        %3436 = vmatpush2.bf16.msra.mxu0 %v3207
        %3437 = vmatprep.subr.bf16.mxu0 %v3206
        %3438 = vmatpush2.bf16.msra.mxu0 %v3205
        %3439 = vmatprep.subr.bf16.mxu0 %v3204
        %3440 = vmatpush2.bf16.msra.mxu0 %v3203
        %3441 = vmatprep.subr.bf16.mxu0 %v3202
        %3442 = vmatpush2.bf16.msra.mxu0 %v3201
        %3443 = vmatprep.subr.bf16.mxu0 %v3200
        %3444 = vmatpush2.bf16.msra.mxu0 %v3199
        %3445 = vmatprep.subr.bf16.mxu0 %v3198
        %3446 = vmatpush2.bf16.msra.mxu0 %v3197
        %3447 = vmatprep.mubr.bf16.mxu0 %v2715
        %3448 = vmatmul.mubr.bf16.gmra.mxu0 %v2714
        %v3449 = vpop.f32.mrf.mxu0
        %v3450 = vadd.f32 %v3397, %v3449
        %v3451 = vpop.f32.mrf.mxu0
        %v3452 = vadd.f32 %v3399, %v3451
        %v3453 = vpop.f32.mrf.mxu0
        %v3454 = vadd.f32 %v3401, %v3453
        %v3455 = vpop.f32.mrf.mxu0
        %v3456 = vadd.f32 %v3403, %v3455
        %3457 = vmatprep.mubr.bf16.mxu0 %v2721
        %3458 = vmatmul.mubr.bf16.gmra.mxu0 %v2720
        %v3459 = vpop.f32.mrf.mxu0
        %v3460 = vadd.f32 %v3407, %v3459
        %v3461 = vpop.f32.mrf.mxu0
        %v3462 = vadd.f32 %v3409, %v3461
        %v3463 = vpop.f32.mrf.mxu0
        %v3464 = vadd.f32 %v3411, %v3463
        %v3465 = vpop.f32.mrf.mxu0
        %v3466 = vadd.f32 %v3413, %v3465
        %3467 = vdwg.mxu0
        %v3468 = vmax.f32 %v3450, 0.0
        %v3469 = vmax.f32 %v3452, 0.0
        %v3470 = vmax.f32 %v3454, 0.0
        %v3471 = vmax.f32 %v3456, 0.0
        %v3472 = vmax.f32 %v3460, 0.0
        %v3473 = vmax.f32 %v3462, 0.0
        %v3474 = vmax.f32 %v3464, 0.0
        %v3475 = vmax.f32 %v3466, 0.0
        %v3476 = vsub.f32 %v3468, %v3472
        %v3477 = vsub.f32 %v3469, %v3473
        %v3478 = vsub.f32 %v3470, %v3474
        %v3479 = vsub.f32 %v3471, %v3475
        %v3480 = vmul.f32 %v3476, %v3476
        %v3481 = vmul.f32 %v3477, %v3477
        %v3482 = vmul.f32 %v3478, %v3478
        %v3483 = vmul.f32 %v3479, %v3479
        %v3484 = vadd.f32 %v3480, %v3482
        %v3485 = vrot.slane %v3484, 4
        %v3486 = vadd.f32 %v3484, %v3485
        %v3487 = vrot.slane %v3486, 2
        %v3488 = vadd.f32 %v3486, %v3487
        %v3489 = vrot.slane %v3488, 1
        %v3490 = vadd.f32 %v3488, %v3489
        %v3491 = vadd.f32 %v3481, %v3483
        %v3492 = vrot.slane %v3491, 4
        %v3493 = vadd.f32 %v3491, %v3492
        %v3494 = vrot.slane %v3493, 2
        %v3495 = vadd.f32 %v3493, %v3494
        %v3496 = vrot.slane %v3495, 1
        %v3497 = vadd.f32 %v3495, %v3496
        %v3498 = vmax.f32 %v3468, %v3469
        %v3499 = vmax.f32 %v3470, %v3471
        %v3500 = vmax.f32 %v3472, %v3473
        %v3501 = vmax.f32 %v3474, %v3475
        %v3502 = vrot.slane %v3498, 1
        %v3503 = vrot.slane %v3499, 1
        %v3504 = vrot.slane %v3500, 1
        %v3505 = vrot.slane %v3501, 1
        %v3506 = vsel %vm543, %v3504, %v3505
        %v3507 = vsel %vm543, %v3503, %v3504
        %v3508 = vsel %vm543, %v3502, %v3503
        %v3509 = vsel %vm543, %v3505, %v3502
        %v3510 = vmax.f32 %v3498, %v3508
        %v3511 = vmax.f32 %v3499, %v3507
        %v3512 = vmax.f32 %v3500, %v3506
        %v3513 = vmax.f32 %v3501, %v3509
        %vm3514 = vcmask 261120
        %v3515 = vsel %vm3514, %v2057, 0
        %v3517 = vsel %vm3514, %v2058, 0
        %3519 = vmatprep.subr.mxu0 0.0
        %3520 = vmatpush1.msra.mxu0 0.0
        %3521 = vmatprep.subr.mxu0 0.0
        %3522 = vmatpush1.msra.mxu0 0.0
        %3523 = vmatprep.subr.mxu0 0.0
        %3524 = vmatpush1.msra.mxu0 0.0
        %3525 = vmatprep.subr.mxu0 0.0
        %3526 = vmatpush1.msra.mxu0 0.0
        %3527 = vmatprep.subr.mxu0 0.0
        %3528 = vmatpush1.msra.mxu0 0.0
        %3529 = vmatprep.subr.mxu0 0.0
        %3530 = vmatpush1.msra.mxu0 0.0
        %3531 = vmatprep.subr.mxu0 0.0
        %3532 = vmatpush1.msra.mxu0 0.0
        %3533 = vmatprep.subr.mxu0 0.0
        %3534 = vmatpush1.msra.mxu0 0.0
        %3535 = vmatprep.subr.mxu0 0.0
        %3536 = vmatpush1.msra.mxu0 0.0
        %3537 = vmatprep.subr.mxu0 0.0
        %3538 = vmatpush1.msra.mxu0 0.0
        %3539 = vmatprep.subr.mxu0 0.0
        %3540 = vmatpush1.msra.mxu0 0.0
        %3541 = vmatprep.subr.mxu0 0.0
        %3542 = vmatpush1.msra.mxu0 0.0
        %3543 = vmatprep.subr.mxu0 0.0
        %3544 = vmatpush1.msra.mxu0 %v3513
        %3545 = vmatprep.subr.mxu0 0.0
        %3546 = vmatpush1.msra.mxu0 %v3512
        %3547 = vmatprep.subr.mxu0 0.0
        %3548 = vmatpush1.msra.mxu0 %v3511
        %3549 = vmatprep.subr.mxu0 0.0
        %3550 = vmatpush1.msra.mxu0 %v3510
        %3551 = vmatprep.subr.mxu0 0.0
        %3552 = vmatpush2.msra.mxu0 0.0
        %3553 = vmatprep.subr.mxu0 0.0
        %3554 = vmatpush2.msra.mxu0 0.0
        %3555 = vmatprep.subr.mxu0 0.0
        %3556 = vmatpush2.msra.mxu0 0.0
        %3557 = vmatprep.subr.mxu0 0.0
        %3558 = vmatpush2.msra.mxu0 0.0
        %3559 = vmatprep.subr.mxu0 0.0
        %3560 = vmatpush2.msra.mxu0 0.0
        %3561 = vmatprep.subr.mxu0 0.0
        %3562 = vmatpush2.msra.mxu0 0.0
        %3563 = vmatprep.subr.mxu0 0.0
        %3564 = vmatpush2.msra.mxu0 0.0
        %3565 = vmatprep.subr.mxu0 0.0
        %3566 = vmatpush2.msra.mxu0 0.0
        %3567 = vmatprep.subr.mxu0 0.0
        %3568 = vmatpush2.msra.mxu0 0.0
        %3569 = vmatprep.subr.mxu0 0.0
        %3570 = vmatpush2.msra.mxu0 0.0
        %3571 = vmatprep.subr.mxu0 0.0
        %3572 = vmatpush2.msra.mxu0 0.0
        %3573 = vmatprep.subr.mxu0 0.0
        %3574 = vmatpush2.msra.mxu0 0.0
        %3575 = vmatprep.subr.mxu0 0.0
        %3576 = vmatpush2.msra.mxu0 0.0
        %3577 = vmatprep.subr.mxu0 0.0
        %3578 = vmatpush2.msra.mxu0 0.0
        %3579 = vmatprep.subr.mxu0 0.0
        %3580 = vmatpush2.msra.mxu0 0.0
        %3581 = vmatprep.subr.mxu0 0.0
        %3582 = vmatpush2.msra.mxu0 0.0
        %3583 = vmatprep.mubr.f32.mxu0 0.0
        %3584 = vmatmul.mubr.f32.gmra.mxu0 %v3515
        %v3585 = vpop.f32.mrf.mxu0
        %v3586 = vadd.f32 0.0, %v3585
        %v3587 = vpop.f32.mrf.mxu0
        %3588 = vmatprep.mubr.f32.mxu0 0.0
        %3589 = vmatmul.mubr.f32.gmra.mxu0 %v3517
        %v3590 = vpop.f32.mrf.mxu0
        %v3591 = vadd.f32 0.0, %v3590
        %v3592 = vpop.f32.mrf.mxu0
        %3593 = vdwg.mxu0
        %s3594 = scalar_lea.vmem %s8, 4
        %v3595 = vld [vmem:[%s3594] ss:$8 sm:$0x3]
        %vm3596 = vcmp.lt.s32.totalorder %v390, 0
        %v3597 = vsub.s32 0, %v390
        %v3598 = vsel %vm3596, %v3597, %v390
        %v3599 = vshrl.u32 %v3598, 3
        %v3600 = vand.u32 %v3598, 7
        %v3601 = vsub.s32 0, %v3600
        %v3602 = vsel %vm3596, %v3601, %v3600
        %vm3603 = vcmp.lt.s32.totalorder %v391, 0
        %v3604 = vsub.s32 0, %v391
        %v3605 = vsel %vm3603, %v3604, %v391
        %v3606 = vshrl.u32 %v3605, 3
        %v3607 = vand.u32 %v3605, 7
        %v3608 = vsub.s32 0, %v3607
        %v3609 = vsel %vm3603, %v3608, %v3607
        %vm3610 = vcmp.ne.s32.totalorder %v3602, 0
        %vm3611 = vcmp.ne.s32.totalorder %v3609, 0
        %vm3612 = vcmp.lt.s32.totalorder %v3602, 0
        %vm3613 = vcmp.lt.s32.totalorder %v3609, 0
        %vm3614 = vmand %vm3612, %vm3610
        %vm3615 = vmand %vm3613, %vm3611
        %v3616 = vadd.s32 %v3602, 8
        %v3617 = vadd.s32 %v3609, 8
        %v3618 = vsel %vm3614, %v3616, %v3602
        %v3619 = vsel %vm3615, %v3617, %v3609
        %vm3620 = vcmp.eq.s32.totalorder %v3618, 0
        %vm3621 = vcmp.eq.s32.totalorder %v3619, 0
        %v3622 = vrot.slane %v3586, 7
        %v3623 = vrot.slane %v3591, 7
        %v3624 = vsel %vm510, %v3622, %v3623
        %v3625 = vsel %vm510, %v3623, %v3622
        %v3626 = vsel %vm3620, 0.0, %v3625
        %v3627 = vsel %vm3621, 0.0, %v3624
        %vm3628 = vcmp.eq.s32.totalorder %v3618, 7
        %vm3629 = vcmp.eq.s32.totalorder %v3619, 7
        %v3630 = vrot.slane %v3586, 1
        %v3631 = vrot.slane %v3591, 1
        %v3632 = vsel %vm543, %v3630, %v3631
        %v3633 = vsel %vm543, %v3631, %v3630
        %v3634 = vsel %vm3628, 0.0, %v3632
        %v3635 = vsel %vm3629, 0.0, %v3633
        %v3636 = vpack.c.bf16 %v3627, %v3626
        %v3637 = vpack.c.bf16 %v3591, %v3586
        %v3638 = vpack.c.bf16 %v3635, %v3634
        %v3639 = vld [vmem:[#allocation4] sm:$0xff]
        %v3640 = vld [vmem:[#allocation4 + $0x8] sm:$0xff]
        %v3641 = vld [vmem:[#allocation4 + $0x10] sm:$0xff]
        %v3642 = vld [vmem:[#allocation4 + $0x18] sm:$0xff]
        %v3643 = vld [vmem:[#allocation4 + $0x20] sm:$0xff]
        %v3644 = vld [vmem:[#allocation4 + $0x28] sm:$0xff]
        %v3645 = vld [vmem:[#allocation4 + $0x30] sm:$0xff]
        %v3646 = vld [vmem:[#allocation4 + $0x38] sm:$0xff]
        %v3647 = vld [vmem:[#allocation4 + $0x40] sm:$0xff]
        %v3648 = vld [vmem:[#allocation4 + $0x48] sm:$0xff]
        %v3649 = vld [vmem:[#allocation4 + $0x50] sm:$0xff]
        %v3650 = vld [vmem:[#allocation4 + $0x58] sm:$0xff]
        %v3651 = vld [vmem:[#allocation4 + $0x60] sm:$0xff]
        %v3652 = vld [vmem:[#allocation4 + $0x68] sm:$0xff]
        %v3653 = vld [vmem:[#allocation4 + $0x70] sm:$0xff]
        %v3654 = vld [vmem:[#allocation4 + $0x78] sm:$0xff]
        %v3655 = vld [vmem:[#allocation4 + $0x80] sm:$0xff]
        %v3656 = vld [vmem:[#allocation4 + $0x88] sm:$0xff]
        %v3657 = vld [vmem:[#allocation4 + $0x90] sm:$0xff]
        %v3658 = vld [vmem:[#allocation4 + $0x98] sm:$0xff]
        %v3659 = vld [vmem:[#allocation4 + $0xa0] sm:$0xff]
        %v3660 = vld [vmem:[#allocation4 + $0xa8] sm:$0xff]
        %v3661 = vld [vmem:[#allocation4 + $0xb0] sm:$0xff]
        %v3662 = vld [vmem:[#allocation4 + $0xb8] sm:$0xff]
        %v3663 = vld [vmem:[#allocation4 + $0xc0] sm:$0xff]
        %v3664 = vld [vmem:[#allocation4 + $0xc8] sm:$0xff]
        %v3665 = vld [vmem:[#allocation4 + $0xd0] sm:$0xff]
        %v3666 = vld [vmem:[#allocation4 + $0xd8] sm:$0xff]
        %v3667 = vld [vmem:[#allocation4 + $0xe0] sm:$0xff]
        %v3668 = vld [vmem:[#allocation4 + $0xe8] sm:$0xff]
        %v3669 = vld [vmem:[#allocation4 + $0xf0] sm:$0xff]
        %v3670 = vld [vmem:[#allocation4 + $0xf8] sm:$0xff]
        %v3671 = vld [vmem:[#allocation4 + $0x100] sm:$0xff]
        %v3672 = vld [vmem:[#allocation4 + $0x108] sm:$0xff]
        %v3673 = vld [vmem:[#allocation4 + $0x110] sm:$0xff]
        %v3674 = vld [vmem:[#allocation4 + $0x118] sm:$0xff]
        %v3675 = vld [vmem:[#allocation4 + $0x120] sm:$0xff]
        %v3676 = vld [vmem:[#allocation4 + $0x128] sm:$0xff]
        %v3677 = vld [vmem:[#allocation4 + $0x130] sm:$0xff]
        %v3678 = vld [vmem:[#allocation4 + $0x138] sm:$0xff]
        %v3679 = vld [vmem:[#allocation4 + $0x140] sm:$0xff]
        %v3680 = vld [vmem:[#allocation4 + $0x148] sm:$0xff]
        %v3681 = vld [vmem:[#allocation4 + $0x150] sm:$0xff]
        %v3682 = vld [vmem:[#allocation4 + $0x158] sm:$0xff]
        %v3683 = vld [vmem:[#allocation4 + $0x160] sm:$0xff]
        %v3684 = vld [vmem:[#allocation4 + $0x168] sm:$0xff]
        %v3685 = vld [vmem:[#allocation4 + $0x170] sm:$0xff]
        %v3686 = vld [vmem:[#allocation4 + $0x178] sm:$0xff]
        %v3688 = vlaneseq
        %v3689 = vshrl.u32 %v3688, 7
        %v3690 = vsub.s32 0, %v3689
        %v3691 = vrot.slane %v3595, %v3690
        %v3692 = vlaneseq
        %v3693 = vshrl.u32 %v3692, 7
        %v3694 = vsub.s32 1, %v3693
        %v3695 = vrot.slane %v3595, %v3694
        %v3746 = vunpack.c.l.b16 %v3639
        %v3747 = vunpack.c.h.b16 %v3639
        %v3748 = vunpack.c.l.b16 %v3640
        %v3749 = vunpack.c.h.b16 %v3640
        %v3750 = vunpack.c.l.b16 %v3641
        %v3751 = vunpack.c.h.b16 %v3641
        %v3752 = vunpack.c.l.b16 %v3642
        %v3753 = vunpack.c.h.b16 %v3642
        %v3754 = vunpack.c.l.b16 %v3643
        %v3755 = vunpack.c.h.b16 %v3643
        %v3756 = vunpack.c.l.b16 %v3644
        %v3757 = vunpack.c.h.b16 %v3644
        %v3758 = vunpack.c.l.b16 %v3645
        %v3759 = vunpack.c.h.b16 %v3645
        %v3760 = vunpack.c.l.b16 %v3646
        %v3761 = vunpack.c.h.b16 %v3646
        %v3762 = vunpack.c.l.b16 %v3647
        %v3763 = vunpack.c.h.b16 %v3647
        %v3764 = vunpack.c.l.b16 %v3648
        %v3765 = vunpack.c.h.b16 %v3648
        %v3766 = vunpack.c.l.b16 %v3649
        %v3767 = vunpack.c.h.b16 %v3649
        %v3768 = vunpack.c.l.b16 %v3650
        %v3769 = vunpack.c.h.b16 %v3650
        %v3770 = vunpack.c.l.b16 %v3651
        %v3771 = vunpack.c.h.b16 %v3651
        %v3772 = vunpack.c.l.b16 %v3652
        %v3773 = vunpack.c.h.b16 %v3652
        %v3774 = vunpack.c.l.b16 %v3653
        %v3775 = vunpack.c.h.b16 %v3653
        %v3776 = vunpack.c.l.b16 %v3654
        %v3777 = vunpack.c.h.b16 %v3654
        %v3778 = vunpack.c.l.b16 %v3655
        %v3779 = vunpack.c.h.b16 %v3655
        %v3780 = vunpack.c.l.b16 %v3656
        %v3781 = vunpack.c.h.b16 %v3656
        %v3782 = vunpack.c.l.b16 %v3657
        %v3783 = vunpack.c.h.b16 %v3657
        %v3784 = vunpack.c.l.b16 %v3658
        %v3785 = vunpack.c.h.b16 %v3658
        %v3786 = vunpack.c.l.b16 %v3659
        %v3787 = vunpack.c.h.b16 %v3659
        %v3788 = vunpack.c.l.b16 %v3660
        %v3789 = vunpack.c.h.b16 %v3660
        %v3790 = vunpack.c.l.b16 %v3661
        %v3791 = vunpack.c.h.b16 %v3661
        %v3792 = vunpack.c.l.b16 %v3662
        %v3793 = vunpack.c.h.b16 %v3662
        %v3794 = vunpack.c.l.b16 %v3663
        %v3795 = vunpack.c.h.b16 %v3663
        %v3796 = vunpack.c.l.b16 %v3664
        %v3797 = vunpack.c.h.b16 %v3664
        %v3798 = vunpack.c.l.b16 %v3665
        %v3799 = vunpack.c.h.b16 %v3665
        %v3800 = vunpack.c.l.b16 %v3666
        %v3801 = vunpack.c.h.b16 %v3666
        %v3802 = vunpack.c.l.b16 %v3667
        %v3803 = vunpack.c.h.b16 %v3667
        %v3804 = vunpack.c.l.b16 %v3668
        %v3805 = vunpack.c.h.b16 %v3668
        %v3806 = vunpack.c.l.b16 %v3669
        %v3807 = vunpack.c.h.b16 %v3669
        %v3808 = vunpack.c.l.b16 %v3670
        %v3809 = vunpack.c.h.b16 %v3670
        %v3810 = vunpack.c.l.b16 %v3671
        %v3811 = vunpack.c.h.b16 %v3671
        %v3812 = vunpack.c.l.b16 %v3672
        %v3813 = vunpack.c.h.b16 %v3672
        %v3814 = vunpack.c.l.b16 %v3673
        %v3815 = vunpack.c.h.b16 %v3673
        %v3816 = vunpack.c.l.b16 %v3674
        %v3817 = vunpack.c.h.b16 %v3674
        %v3818 = vunpack.c.l.b16 %v3675
        %v3819 = vunpack.c.h.b16 %v3675
        %v3820 = vunpack.c.l.b16 %v3676
        %v3821 = vunpack.c.h.b16 %v3676
        %v3822 = vunpack.c.l.b16 %v3677
        %v3823 = vunpack.c.h.b16 %v3677
        %v3824 = vunpack.c.l.b16 %v3678
        %v3825 = vunpack.c.h.b16 %v3678
        %v3826 = vunpack.c.l.b16 %v3679
        %v3827 = vunpack.c.h.b16 %v3679
        %v3828 = vunpack.c.l.b16 %v3680
        %v3829 = vunpack.c.h.b16 %v3680
        %v3830 = vunpack.c.l.b16 %v3681
        %v3831 = vunpack.c.h.b16 %v3681
        %v3832 = vunpack.c.l.b16 %v3682
        %v3833 = vunpack.c.h.b16 %v3682
        %v3834 = vunpack.c.l.b16 %v3683
        %v3835 = vunpack.c.h.b16 %v3683
        %v3836 = vunpack.c.l.b16 %v3684
        %v3837 = vunpack.c.h.b16 %v3684
        %v3838 = vunpack.c.l.b16 %v3685
        %v3839 = vunpack.c.h.b16 %v3685
        %v3840 = vunpack.c.l.b16 %v3686
        %v3841 = vunpack.c.h.b16 %v3686
        %v3842 = vpack.c.b16 %v3748, %v3746
        %v3843 = vpack.c.b16 %v3749, %v3747
        %v3844 = vpack.c.b16 %v3752, %v3750
        %v3845 = vpack.c.b16 %v3753, %v3751
        %v3846 = vpack.c.b16 %v3756, %v3754
        %v3847 = vpack.c.b16 %v3757, %v3755
        %v3848 = vpack.c.b16 %v3760, %v3758
        %v3849 = vpack.c.b16 %v3761, %v3759
        %v3850 = vpack.c.b16 %v3764, %v3762
        %v3851 = vpack.c.b16 %v3765, %v3763
        %v3852 = vpack.c.b16 %v3768, %v3766
        %v3853 = vpack.c.b16 %v3769, %v3767
        %v3854 = vpack.c.b16 %v3772, %v3770
        %v3855 = vpack.c.b16 %v3773, %v3771
        %v3856 = vpack.c.b16 %v3776, %v3774
        %v3857 = vpack.c.b16 %v3777, %v3775
        %v3858 = vpack.c.b16 %v3780, %v3778
        %v3859 = vpack.c.b16 %v3781, %v3779
        %v3860 = vpack.c.b16 %v3784, %v3782
        %v3861 = vpack.c.b16 %v3785, %v3783
        %v3862 = vpack.c.b16 %v3788, %v3786
        %v3863 = vpack.c.b16 %v3789, %v3787
        %v3864 = vpack.c.b16 %v3792, %v3790
        %v3865 = vpack.c.b16 %v3793, %v3791
        %v3866 = vpack.c.b16 %v3796, %v3794
        %v3867 = vpack.c.b16 %v3797, %v3795
        %v3868 = vpack.c.b16 %v3800, %v3798
        %v3869 = vpack.c.b16 %v3801, %v3799
        %v3870 = vpack.c.b16 %v3804, %v3802
        %v3871 = vpack.c.b16 %v3805, %v3803
        %v3872 = vpack.c.b16 %v3808, %v3806
        %v3873 = vpack.c.b16 %v3809, %v3807
        %v3874 = vpack.c.b16 %v3812, %v3810
        %v3875 = vpack.c.b16 %v3813, %v3811
        %v3876 = vpack.c.b16 %v3816, %v3814
        %v3877 = vpack.c.b16 %v3817, %v3815
        %v3878 = vpack.c.b16 %v3820, %v3818
        %v3879 = vpack.c.b16 %v3821, %v3819
        %v3880 = vpack.c.b16 %v3824, %v3822
        %v3881 = vpack.c.b16 %v3825, %v3823
        %v3882 = vpack.c.b16 %v3828, %v3826
        %v3883 = vpack.c.b16 %v3829, %v3827
        %v3884 = vpack.c.b16 %v3832, %v3830
        %v3885 = vpack.c.b16 %v3833, %v3831
        %v3886 = vpack.c.b16 %v3836, %v3834
        %v3887 = vpack.c.b16 %v3837, %v3835
        %v3888 = vpack.c.b16 %v3840, %v3838
        %v3889 = vpack.c.b16 %v3841, %v3839
        %3938 = vmatprep.subr.bf16.mxu0 %v3857
        %3939 = vmatpush1.bf16.msra.mxu0 %v3856
        %3940 = vmatprep.subr.bf16.mxu0 %v3855
        %3941 = vmatpush1.bf16.msra.mxu0 %v3854
        %3942 = vmatprep.subr.bf16.mxu0 %v3853
        %3943 = vmatpush1.bf16.msra.mxu0 %v3852
        %3944 = vmatprep.subr.bf16.mxu0 %v3851
        %3945 = vmatpush1.bf16.msra.mxu0 %v3850
        %3946 = vmatprep.subr.bf16.mxu0 %v3849
        %3947 = vmatpush1.bf16.msra.mxu0 %v3848
        %3948 = vmatprep.subr.bf16.mxu0 %v3847
        %3949 = vmatpush1.bf16.msra.mxu0 %v3846
        %3950 = vmatprep.subr.bf16.mxu0 %v3845
        %3951 = vmatpush1.bf16.msra.mxu0 %v3844
        %3952 = vmatprep.subr.bf16.mxu0 %v3843
        %3953 = vmatpush1.bf16.msra.mxu0 %v3842
        %3954 = vmatprep.subr.bf16.mxu0 %v3873
        %3955 = vmatpush2.bf16.msra.mxu0 %v3872
        %3956 = vmatprep.subr.bf16.mxu0 %v3871
        %3957 = vmatpush2.bf16.msra.mxu0 %v3870
        %3958 = vmatprep.subr.bf16.mxu0 %v3869
        %3959 = vmatpush2.bf16.msra.mxu0 %v3868
        %3960 = vmatprep.subr.bf16.mxu0 %v3867
        %3961 = vmatpush2.bf16.msra.mxu0 %v3866
        %3962 = vmatprep.subr.bf16.mxu0 %v3865
        %3963 = vmatpush2.bf16.msra.mxu0 %v3864
        %3964 = vmatprep.subr.bf16.mxu0 %v3863
        %3965 = vmatpush2.bf16.msra.mxu0 %v3862
        %3966 = vmatprep.subr.bf16.mxu0 %v3861
        %3967 = vmatpush2.bf16.msra.mxu0 %v3860
        %3968 = vmatprep.subr.bf16.mxu0 %v3859
        %3969 = vmatpush2.bf16.msra.mxu0 %v3858
        %3970 = vmatprep.mubr.bf16.mxu0 %v3637
        %3971 = vmatmul.mubr.bf16.gmra.mxu0 %v3636
        %v3972 = vpop.f32.mrf.mxu0
        %v3973 = vadd.f32 %v3691, %v3972
        %v3974 = vpop.f32.mrf.mxu0
        %v3975 = vadd.f32 %v3695, %v3974
        %v3976 = vpop.f32.mrf.mxu0
        %v3977 = vadd.f32 %v3691, %v3976
        %v3978 = vpop.f32.mrf.mxu0
        %v3979 = vadd.f32 %v3695, %v3978
        %3980 = vdwg.mxu0
        %3981 = vmatprep.subr.bf16.mxu0 %v3889
        %3982 = vmatpush1.bf16.msra.mxu0 %v3888
        %3983 = vmatprep.subr.bf16.mxu0 %v3887
        %3984 = vmatpush1.bf16.msra.mxu0 %v3886
        %3985 = vmatprep.subr.bf16.mxu0 %v3885
        %3986 = vmatpush1.bf16.msra.mxu0 %v3884
        %3987 = vmatprep.subr.bf16.mxu0 %v3883
        %3988 = vmatpush1.bf16.msra.mxu0 %v3882
        %3989 = vmatprep.subr.bf16.mxu0 %v3881
        %3990 = vmatpush1.bf16.msra.mxu0 %v3880
        %3991 = vmatprep.subr.bf16.mxu0 %v3879
        %3992 = vmatpush1.bf16.msra.mxu0 %v3878
        %3993 = vmatprep.subr.bf16.mxu0 %v3877
        %3994 = vmatpush1.bf16.msra.mxu0 %v3876
        %3995 = vmatprep.subr.bf16.mxu0 %v3875
        %3996 = vmatpush1.bf16.msra.mxu0 %v3874
        %3997 = vmatprep.subr.bf16.mxu0 0
        %3998 = vmatpush2.bf16.msra.mxu0 0
        %3999 = vmatprep.subr.bf16.mxu0 0
        %4000 = vmatpush2.bf16.msra.mxu0 0
        %4001 = vmatprep.subr.bf16.mxu0 0
        %4002 = vmatpush2.bf16.msra.mxu0 0
        %4003 = vmatprep.subr.bf16.mxu0 0
        %4004 = vmatpush2.bf16.msra.mxu0 0
        %4005 = vmatprep.subr.bf16.mxu0 0
        %4006 = vmatpush2.bf16.msra.mxu0 0
        %4007 = vmatprep.subr.bf16.mxu0 0
        %4008 = vmatpush2.bf16.msra.mxu0 0
        %4009 = vmatprep.subr.bf16.mxu0 0
        %4010 = vmatpush2.bf16.msra.mxu0 0
        %4011 = vmatprep.subr.bf16.mxu0 0
        %4012 = vmatpush2.bf16.msra.mxu0 0
        %4013 = vmatprep.mubr.bf16.mxu0 0
        %4014 = vmatmul.mubr.bf16.gmra.mxu0 %v3638
        %v4015 = vpop.f32.mrf.mxu0
        %v4016 = vadd.f32 %v3973, %v4015
        %v4017 = vpop.f32.mrf.mxu0
        %v4018 = vadd.f32 %v3975, %v4017
        %v4019 = vpop.f32.mrf.mxu0
        %v4020 = vadd.f32 %v3977, %v4019
        %v4021 = vpop.f32.mrf.mxu0
        %v4022 = vadd.f32 %v3979, %v4021
        %4023 = vdwg.mxu0
        %v4024 = vmax.f32 %v4016, 0.0
        %v4025 = vmax.f32 %v4018, 0.0
        %v4026 = vmax.f32 %v4020, 0.0
        %v4027 = vmax.f32 %v4022, 0.0
        %s4028 = scalar_lea.vmem %s8, 5
        %v4029 = vld [vmem:[%s4028] ss:$8 sm:$0x3]
        %v4030 = vrot.slane %v4024, 7
        %v4031 = vrot.slane %v4025, 7
        %v4032 = vrot.slane %v4026, 7
        %v4033 = vrot.slane %v4027, 7
        %v4034 = vsel %vm510, %v4030, %v4032
        %v4035 = vsel %vm510, %v4031, %v4033
        %v4036 = vsel %vm510, %v4032, %v4030
        %v4037 = vsel %vm510, %v4033, %v4031
        %v4038 = vsel %vm3620, 0.0, %v4036
        %v4039 = vsel %vm3620, 0.0, %v4037
        %v4040 = vsel %vm3621, 0.0, %v4034
        %v4041 = vsel %vm3621, 0.0, %v4035
        %v4042 = vrot.slane %v4024, 1
        %v4043 = vrot.slane %v4025, 1
        %v4044 = vrot.slane %v4026, 1
        %v4045 = vrot.slane %v4027, 1
        %v4046 = vsel %vm543, %v4042, %v4044
        %v4047 = vsel %vm543, %v4043, %v4045
        %v4048 = vsel %vm543, %v4044, %v4042
        %v4049 = vsel %vm543, %v4045, %v4043
        %v4050 = vsel %vm3628, 0.0, %v4046
        %v4051 = vsel %vm3628, 0.0, %v4047
        %v4052 = vsel %vm3629, 0.0, %v4048
        %v4053 = vsel %vm3629, 0.0, %v4049
        %v4054 = vpack.c.bf16 %v4040, %v4038
        %v4055 = vpack.c.bf16 %v4041, %v4039
        %v4056 = vpack.c.bf16 %v4026, %v4024
        %v4057 = vpack.c.bf16 %v4027, %v4025
        %v4058 = vpack.c.bf16 %v4052, %v4050
        %v4059 = vpack.c.bf16 %v4053, %v4051
        %v4060 = vld [vmem:[%s6] sm:$0xff]
        %v4061 = vld [vmem:[%s6 + $0x8] sm:$0xff]
        %v4062 = vld [vmem:[%s6 + $0x10] sm:$0xff]
        %v4063 = vld [vmem:[%s6 + $0x18] sm:$0xff]
        %v4064 = vld [vmem:[%s6 + $0x20] sm:$0xff]
        %v4065 = vld [vmem:[%s6 + $0x28] sm:$0xff]
        %v4066 = vld [vmem:[%s6 + $0x30] sm:$0xff]
        %v4067 = vld [vmem:[%s6 + $0x38] sm:$0xff]
        %v4068 = vld [vmem:[%s6 + $0x40] sm:$0xff]
        %v4069 = vld [vmem:[%s6 + $0x48] sm:$0xff]
        %v4070 = vld [vmem:[%s6 + $0x50] sm:$0xff]
        %v4071 = vld [vmem:[%s6 + $0x58] sm:$0xff]
        %v4072 = vld [vmem:[%s6 + $0x60] sm:$0xff]
        %v4073 = vld [vmem:[%s6 + $0x68] sm:$0xff]
        %v4074 = vld [vmem:[%s6 + $0x70] sm:$0xff]
        %v4075 = vld [vmem:[%s6 + $0x78] sm:$0xff]
        %v4076 = vld [vmem:[%s6 + $0x80] sm:$0xff]
        %v4077 = vld [vmem:[%s6 + $0x88] sm:$0xff]
        %v4078 = vld [vmem:[%s6 + $0x90] sm:$0xff]
        %v4079 = vld [vmem:[%s6 + $0x98] sm:$0xff]
        %v4080 = vld [vmem:[%s6 + $0xa0] sm:$0xff]
        %v4081 = vld [vmem:[%s6 + $0xa8] sm:$0xff]
        %v4082 = vld [vmem:[%s6 + $0xb0] sm:$0xff]
        %v4083 = vld [vmem:[%s6 + $0xb8] sm:$0xff]
        %v4084 = vld [vmem:[%s6 + $0xc0] sm:$0xff]
        %v4085 = vld [vmem:[%s6 + $0xc8] sm:$0xff]
        %v4086 = vld [vmem:[%s6 + $0xd0] sm:$0xff]
        %v4087 = vld [vmem:[%s6 + $0xd8] sm:$0xff]
        %v4088 = vld [vmem:[%s6 + $0xe0] sm:$0xff]
        %v4089 = vld [vmem:[%s6 + $0xe8] sm:$0xff]
        %v4090 = vld [vmem:[%s6 + $0xf0] sm:$0xff]
        %v4091 = vld [vmem:[%s6 + $0xf8] sm:$0xff]
        %v4092 = vld [vmem:[%s6 + $0x100] sm:$0xff]
        %v4093 = vld [vmem:[%s6 + $0x108] sm:$0xff]
        %v4094 = vld [vmem:[%s6 + $0x110] sm:$0xff]
        %v4095 = vld [vmem:[%s6 + $0x118] sm:$0xff]
        %v4096 = vld [vmem:[%s6 + $0x120] sm:$0xff]
        %v4097 = vld [vmem:[%s6 + $0x128] sm:$0xff]
        %v4098 = vld [vmem:[%s6 + $0x130] sm:$0xff]
        %v4099 = vld [vmem:[%s6 + $0x138] sm:$0xff]
        %v4100 = vld [vmem:[%s6 + $0x140] sm:$0xff]
        %v4101 = vld [vmem:[%s6 + $0x148] sm:$0xff]
        %v4102 = vld [vmem:[%s6 + $0x150] sm:$0xff]
        %v4103 = vld [vmem:[%s6 + $0x158] sm:$0xff]
        %v4104 = vld [vmem:[%s6 + $0x160] sm:$0xff]
        %v4105 = vld [vmem:[%s6 + $0x168] sm:$0xff]
        %v4106 = vld [vmem:[%s6 + $0x170] sm:$0xff]
        %v4107 = vld [vmem:[%s6 + $0x178] sm:$0xff]
        %v4108 = vld [vmem:[%s6 + $0x180] sm:$0xff]
        %v4109 = vld [vmem:[%s6 + $0x188] sm:$0xff]
        %v4110 = vld [vmem:[%s6 + $0x190] sm:$0xff]
        %v4111 = vld [vmem:[%s6 + $0x198] sm:$0xff]
        %v4112 = vld [vmem:[%s6 + $0x1a0] sm:$0xff]
        %v4113 = vld [vmem:[%s6 + $0x1a8] sm:$0xff]
        %v4114 = vld [vmem:[%s6 + $0x1b0] sm:$0xff]
        %v4115 = vld [vmem:[%s6 + $0x1b8] sm:$0xff]
        %v4116 = vld [vmem:[%s6 + $0x1c0] sm:$0xff]
        %v4117 = vld [vmem:[%s6 + $0x1c8] sm:$0xff]
        %v4118 = vld [vmem:[%s6 + $0x1d0] sm:$0xff]
        %v4119 = vld [vmem:[%s6 + $0x1d8] sm:$0xff]
        %v4120 = vld [vmem:[%s6 + $0x1e0] sm:$0xff]
        %v4121 = vld [vmem:[%s6 + $0x1e8] sm:$0xff]
        %v4122 = vld [vmem:[%s6 + $0x1f0] sm:$0xff]
        %v4123 = vld [vmem:[%s6 + $0x1f8] sm:$0xff]
        %v4124 = vld [vmem:[%s6 + $0x200] sm:$0xff]
        %v4125 = vld [vmem:[%s6 + $0x208] sm:$0xff]
        %v4126 = vld [vmem:[%s6 + $0x210] sm:$0xff]
        %v4127 = vld [vmem:[%s6 + $0x218] sm:$0xff]
        %v4128 = vld [vmem:[%s6 + $0x220] sm:$0xff]
        %v4129 = vld [vmem:[%s6 + $0x228] sm:$0xff]
        %v4130 = vld [vmem:[%s6 + $0x230] sm:$0xff]
        %v4131 = vld [vmem:[%s6 + $0x238] sm:$0xff]
        %v4132 = vld [vmem:[%s6 + $0x240] sm:$0xff]
        %v4133 = vld [vmem:[%s6 + $0x248] sm:$0xff]
        %v4134 = vld [vmem:[%s6 + $0x250] sm:$0xff]
        %v4135 = vld [vmem:[%s6 + $0x258] sm:$0xff]
        %v4136 = vld [vmem:[%s6 + $0x260] sm:$0xff]
        %v4137 = vld [vmem:[%s6 + $0x268] sm:$0xff]
        %v4138 = vld [vmem:[%s6 + $0x270] sm:$0xff]
        %v4139 = vld [vmem:[%s6 + $0x278] sm:$0xff]
        %v4140 = vld [vmem:[%s6 + $0x280] sm:$0xff]
        %v4141 = vld [vmem:[%s6 + $0x288] sm:$0xff]
        %v4142 = vld [vmem:[%s6 + $0x290] sm:$0xff]
        %v4143 = vld [vmem:[%s6 + $0x298] sm:$0xff]
        %v4144 = vld [vmem:[%s6 + $0x2a0] sm:$0xff]
        %v4145 = vld [vmem:[%s6 + $0x2a8] sm:$0xff]
        %v4146 = vld [vmem:[%s6 + $0x2b0] sm:$0xff]
        %v4147 = vld [vmem:[%s6 + $0x2b8] sm:$0xff]
        %v4148 = vld [vmem:[%s6 + $0x2c0] sm:$0xff]
        %v4149 = vld [vmem:[%s6 + $0x2c8] sm:$0xff]
        %v4150 = vld [vmem:[%s6 + $0x2d0] sm:$0xff]
        %v4151 = vld [vmem:[%s6 + $0x2d8] sm:$0xff]
        %v4152 = vld [vmem:[%s6 + $0x2e0] sm:$0xff]
        %v4153 = vld [vmem:[%s6 + $0x2e8] sm:$0xff]
        %v4154 = vld [vmem:[%s6 + $0x2f0] sm:$0xff]
        %v4155 = vld [vmem:[%s6 + $0x2f8] sm:$0xff]
        %v4157 = vlaneseq
        %v4158 = vshrl.u32 %v4157, 7
        %v4159 = vsub.s32 0, %v4158
        %v4160 = vrot.slane %v4029, %v4159
        %v4161 = vlaneseq
        %v4162 = vshrl.u32 %v4161, 7
        %v4163 = vsub.s32 1, %v4162
        %v4164 = vrot.slane %v4029, %v4163
        %v4263 = vunpack.c.l.b16 %v4060
        %v4264 = vunpack.c.h.b16 %v4060
        %v4265 = vunpack.c.l.b16 %v4061
        %v4266 = vunpack.c.h.b16 %v4061
        %v4267 = vunpack.c.l.b16 %v4062
        %v4268 = vunpack.c.h.b16 %v4062
        %v4269 = vunpack.c.l.b16 %v4063
        %v4270 = vunpack.c.h.b16 %v4063
        %v4271 = vunpack.c.l.b16 %v4064
        %v4272 = vunpack.c.h.b16 %v4064
        %v4273 = vunpack.c.l.b16 %v4065
        %v4274 = vunpack.c.h.b16 %v4065
        %v4275 = vunpack.c.l.b16 %v4066
        %v4276 = vunpack.c.h.b16 %v4066
        %v4277 = vunpack.c.l.b16 %v4067
        %v4278 = vunpack.c.h.b16 %v4067
        %v4279 = vunpack.c.l.b16 %v4068
        %v4280 = vunpack.c.h.b16 %v4068
        %v4281 = vunpack.c.l.b16 %v4069
        %v4282 = vunpack.c.h.b16 %v4069
        %v4283 = vunpack.c.l.b16 %v4070
        %v4284 = vunpack.c.h.b16 %v4070
        %v4285 = vunpack.c.l.b16 %v4071
        %v4286 = vunpack.c.h.b16 %v4071
        %v4287 = vunpack.c.l.b16 %v4072
        %v4288 = vunpack.c.h.b16 %v4072
        %v4289 = vunpack.c.l.b16 %v4073
        %v4290 = vunpack.c.h.b16 %v4073
        %v4291 = vunpack.c.l.b16 %v4074
        %v4292 = vunpack.c.h.b16 %v4074
        %v4293 = vunpack.c.l.b16 %v4075
        %v4294 = vunpack.c.h.b16 %v4075
        %v4295 = vunpack.c.l.b16 %v4076
        %v4296 = vunpack.c.h.b16 %v4076
        %v4297 = vunpack.c.l.b16 %v4077
        %v4298 = vunpack.c.h.b16 %v4077
        %v4299 = vunpack.c.l.b16 %v4078
        %v4300 = vunpack.c.h.b16 %v4078
        %v4301 = vunpack.c.l.b16 %v4079
        %v4302 = vunpack.c.h.b16 %v4079
        %v4303 = vunpack.c.l.b16 %v4080
        %v4304 = vunpack.c.h.b16 %v4080
        %v4305 = vunpack.c.l.b16 %v4081
        %v4306 = vunpack.c.h.b16 %v4081
        %v4307 = vunpack.c.l.b16 %v4082
        %v4308 = vunpack.c.h.b16 %v4082
        %v4309 = vunpack.c.l.b16 %v4083
        %v4310 = vunpack.c.h.b16 %v4083
        %v4311 = vunpack.c.l.b16 %v4084
        %v4312 = vunpack.c.h.b16 %v4084
        %v4313 = vunpack.c.l.b16 %v4085
        %v4314 = vunpack.c.h.b16 %v4085
        %v4315 = vunpack.c.l.b16 %v4086
        %v4316 = vunpack.c.h.b16 %v4086
        %v4317 = vunpack.c.l.b16 %v4087
        %v4318 = vunpack.c.h.b16 %v4087
        %v4319 = vunpack.c.l.b16 %v4088
        %v4320 = vunpack.c.h.b16 %v4088
        %v4321 = vunpack.c.l.b16 %v4089
        %v4322 = vunpack.c.h.b16 %v4089
        %v4323 = vunpack.c.l.b16 %v4090
        %v4324 = vunpack.c.h.b16 %v4090
        %v4325 = vunpack.c.l.b16 %v4091
        %v4326 = vunpack.c.h.b16 %v4091
        %v4327 = vunpack.c.l.b16 %v4092
        %v4328 = vunpack.c.h.b16 %v4092
        %v4329 = vunpack.c.l.b16 %v4093
        %v4330 = vunpack.c.h.b16 %v4093
        %v4331 = vunpack.c.l.b16 %v4094
        %v4332 = vunpack.c.h.b16 %v4094
        %v4333 = vunpack.c.l.b16 %v4095
        %v4334 = vunpack.c.h.b16 %v4095
        %v4335 = vunpack.c.l.b16 %v4096
        %v4336 = vunpack.c.h.b16 %v4096
        %v4337 = vunpack.c.l.b16 %v4097
        %v4338 = vunpack.c.h.b16 %v4097
        %v4339 = vunpack.c.l.b16 %v4098
        %v4340 = vunpack.c.h.b16 %v4098
        %v4341 = vunpack.c.l.b16 %v4099
        %v4342 = vunpack.c.h.b16 %v4099
        %v4343 = vunpack.c.l.b16 %v4100
        %v4344 = vunpack.c.h.b16 %v4100
        %v4345 = vunpack.c.l.b16 %v4101
        %v4346 = vunpack.c.h.b16 %v4101
        %v4347 = vunpack.c.l.b16 %v4102
        %v4348 = vunpack.c.h.b16 %v4102
        %v4349 = vunpack.c.l.b16 %v4103
        %v4350 = vunpack.c.h.b16 %v4103
        %v4351 = vunpack.c.l.b16 %v4104
        %v4352 = vunpack.c.h.b16 %v4104
        %v4353 = vunpack.c.l.b16 %v4105
        %v4354 = vunpack.c.h.b16 %v4105
        %v4355 = vunpack.c.l.b16 %v4106
        %v4356 = vunpack.c.h.b16 %v4106
        %v4357 = vunpack.c.l.b16 %v4107
        %v4358 = vunpack.c.h.b16 %v4107
        %v4359 = vunpack.c.l.b16 %v4108
        %v4360 = vunpack.c.h.b16 %v4108
        %v4361 = vunpack.c.l.b16 %v4109
        %v4362 = vunpack.c.h.b16 %v4109
        %v4363 = vunpack.c.l.b16 %v4110
        %v4364 = vunpack.c.h.b16 %v4110
        %v4365 = vunpack.c.l.b16 %v4111
        %v4366 = vunpack.c.h.b16 %v4111
        %v4367 = vunpack.c.l.b16 %v4112
        %v4368 = vunpack.c.h.b16 %v4112
        %v4369 = vunpack.c.l.b16 %v4113
        %v4370 = vunpack.c.h.b16 %v4113
        %v4371 = vunpack.c.l.b16 %v4114
        %v4372 = vunpack.c.h.b16 %v4114
        %v4373 = vunpack.c.l.b16 %v4115
        %v4374 = vunpack.c.h.b16 %v4115
        %v4375 = vunpack.c.l.b16 %v4116
        %v4376 = vunpack.c.h.b16 %v4116
        %v4377 = vunpack.c.l.b16 %v4117
        %v4378 = vunpack.c.h.b16 %v4117
        %v4379 = vunpack.c.l.b16 %v4118
        %v4380 = vunpack.c.h.b16 %v4118
        %v4381 = vunpack.c.l.b16 %v4119
        %v4382 = vunpack.c.h.b16 %v4119
        %v4383 = vunpack.c.l.b16 %v4120
        %v4384 = vunpack.c.h.b16 %v4120
        %v4385 = vunpack.c.l.b16 %v4121
        %v4386 = vunpack.c.h.b16 %v4121
        %v4387 = vunpack.c.l.b16 %v4122
        %v4388 = vunpack.c.h.b16 %v4122
        %v4389 = vunpack.c.l.b16 %v4123
        %v4390 = vunpack.c.h.b16 %v4123
        %v4391 = vunpack.c.l.b16 %v4124
        %v4392 = vunpack.c.h.b16 %v4124
        %v4393 = vunpack.c.l.b16 %v4125
        %v4394 = vunpack.c.h.b16 %v4125
        %v4395 = vunpack.c.l.b16 %v4126
        %v4396 = vunpack.c.h.b16 %v4126
        %v4397 = vunpack.c.l.b16 %v4127
        %v4398 = vunpack.c.h.b16 %v4127
        %v4399 = vunpack.c.l.b16 %v4128
        %v4400 = vunpack.c.h.b16 %v4128
        %v4401 = vunpack.c.l.b16 %v4129
        %v4402 = vunpack.c.h.b16 %v4129
        %v4403 = vunpack.c.l.b16 %v4130
        %v4404 = vunpack.c.h.b16 %v4130
        %v4405 = vunpack.c.l.b16 %v4131
        %v4406 = vunpack.c.h.b16 %v4131
        %v4407 = vunpack.c.l.b16 %v4132
        %v4408 = vunpack.c.h.b16 %v4132
        %v4409 = vunpack.c.l.b16 %v4133
        %v4410 = vunpack.c.h.b16 %v4133
        %v4411 = vunpack.c.l.b16 %v4134
        %v4412 = vunpack.c.h.b16 %v4134
        %v4413 = vunpack.c.l.b16 %v4135
        %v4414 = vunpack.c.h.b16 %v4135
        %v4415 = vunpack.c.l.b16 %v4136
        %v4416 = vunpack.c.h.b16 %v4136
        %v4417 = vunpack.c.l.b16 %v4137
        %v4418 = vunpack.c.h.b16 %v4137
        %v4419 = vunpack.c.l.b16 %v4138
        %v4420 = vunpack.c.h.b16 %v4138
        %v4421 = vunpack.c.l.b16 %v4139
        %v4422 = vunpack.c.h.b16 %v4139
        %v4423 = vunpack.c.l.b16 %v4140
        %v4424 = vunpack.c.h.b16 %v4140
        %v4425 = vunpack.c.l.b16 %v4141
        %v4426 = vunpack.c.h.b16 %v4141
        %v4427 = vunpack.c.l.b16 %v4142
        %v4428 = vunpack.c.h.b16 %v4142
        %v4429 = vunpack.c.l.b16 %v4143
        %v4430 = vunpack.c.h.b16 %v4143
        %v4431 = vunpack.c.l.b16 %v4144
        %v4432 = vunpack.c.h.b16 %v4144
        %v4433 = vunpack.c.l.b16 %v4145
        %v4434 = vunpack.c.h.b16 %v4145
        %v4435 = vunpack.c.l.b16 %v4146
        %v4436 = vunpack.c.h.b16 %v4146
        %v4437 = vunpack.c.l.b16 %v4147
        %v4438 = vunpack.c.h.b16 %v4147
        %v4439 = vunpack.c.l.b16 %v4148
        %v4440 = vunpack.c.h.b16 %v4148
        %v4441 = vunpack.c.l.b16 %v4149
        %v4442 = vunpack.c.h.b16 %v4149
        %v4443 = vunpack.c.l.b16 %v4150
        %v4444 = vunpack.c.h.b16 %v4150
        %v4445 = vunpack.c.l.b16 %v4151
        %v4446 = vunpack.c.h.b16 %v4151
        %v4447 = vunpack.c.l.b16 %v4152
        %v4448 = vunpack.c.h.b16 %v4152
        %v4449 = vunpack.c.l.b16 %v4153
        %v4450 = vunpack.c.h.b16 %v4153
        %v4451 = vunpack.c.l.b16 %v4154
        %v4452 = vunpack.c.h.b16 %v4154
        %v4453 = vunpack.c.l.b16 %v4155
        %v4454 = vunpack.c.h.b16 %v4155
        %v4455 = vpack.c.b16 %v4265, %v4263
        %v4456 = vpack.c.b16 %v4266, %v4264
        %v4457 = vpack.c.b16 %v4269, %v4267
        %v4458 = vpack.c.b16 %v4270, %v4268
        %v4459 = vpack.c.b16 %v4273, %v4271
        %v4460 = vpack.c.b16 %v4274, %v4272
        %v4461 = vpack.c.b16 %v4277, %v4275
        %v4462 = vpack.c.b16 %v4278, %v4276
        %v4463 = vpack.c.b16 %v4281, %v4279
        %v4464 = vpack.c.b16 %v4282, %v4280
        %v4465 = vpack.c.b16 %v4285, %v4283
        %v4466 = vpack.c.b16 %v4286, %v4284
        %v4467 = vpack.c.b16 %v4289, %v4287
        %v4468 = vpack.c.b16 %v4290, %v4288
        %v4469 = vpack.c.b16 %v4293, %v4291
        %v4470 = vpack.c.b16 %v4294, %v4292
        %v4471 = vpack.c.b16 %v4297, %v4295
        %v4472 = vpack.c.b16 %v4298, %v4296
        %v4473 = vpack.c.b16 %v4301, %v4299
        %v4474 = vpack.c.b16 %v4302, %v4300
        %v4475 = vpack.c.b16 %v4305, %v4303
        %v4476 = vpack.c.b16 %v4306, %v4304
        %v4477 = vpack.c.b16 %v4309, %v4307
        %v4478 = vpack.c.b16 %v4310, %v4308
        %v4479 = vpack.c.b16 %v4313, %v4311
        %v4480 = vpack.c.b16 %v4314, %v4312
        %v4481 = vpack.c.b16 %v4317, %v4315
        %v4482 = vpack.c.b16 %v4318, %v4316
        %v4483 = vpack.c.b16 %v4321, %v4319
        %v4484 = vpack.c.b16 %v4322, %v4320
        %v4485 = vpack.c.b16 %v4325, %v4323
        %v4486 = vpack.c.b16 %v4326, %v4324
        %v4487 = vpack.c.b16 %v4329, %v4327
        %v4488 = vpack.c.b16 %v4330, %v4328
        %v4489 = vpack.c.b16 %v4333, %v4331
        %v4490 = vpack.c.b16 %v4334, %v4332
        %v4491 = vpack.c.b16 %v4337, %v4335
        %v4492 = vpack.c.b16 %v4338, %v4336
        %v4493 = vpack.c.b16 %v4341, %v4339
        %v4494 = vpack.c.b16 %v4342, %v4340
        %v4495 = vpack.c.b16 %v4345, %v4343
        %v4496 = vpack.c.b16 %v4346, %v4344
        %v4497 = vpack.c.b16 %v4349, %v4347
        %v4498 = vpack.c.b16 %v4350, %v4348
        %v4499 = vpack.c.b16 %v4353, %v4351
        %v4500 = vpack.c.b16 %v4354, %v4352
        %v4501 = vpack.c.b16 %v4357, %v4355
        %v4502 = vpack.c.b16 %v4358, %v4356
        %v4503 = vpack.c.b16 %v4361, %v4359
        %v4504 = vpack.c.b16 %v4362, %v4360
        %v4505 = vpack.c.b16 %v4365, %v4363
        %v4506 = vpack.c.b16 %v4366, %v4364
        %v4507 = vpack.c.b16 %v4369, %v4367
        %v4508 = vpack.c.b16 %v4370, %v4368
        %v4509 = vpack.c.b16 %v4373, %v4371
        %v4510 = vpack.c.b16 %v4374, %v4372
        %v4511 = vpack.c.b16 %v4377, %v4375
        %v4512 = vpack.c.b16 %v4378, %v4376
        %v4513 = vpack.c.b16 %v4381, %v4379
        %v4514 = vpack.c.b16 %v4382, %v4380
        %v4515 = vpack.c.b16 %v4385, %v4383
        %v4516 = vpack.c.b16 %v4386, %v4384
        %v4517 = vpack.c.b16 %v4389, %v4387
        %v4518 = vpack.c.b16 %v4390, %v4388
        %v4519 = vpack.c.b16 %v4393, %v4391
        %v4520 = vpack.c.b16 %v4394, %v4392
        %v4521 = vpack.c.b16 %v4397, %v4395
        %v4522 = vpack.c.b16 %v4398, %v4396
        %v4523 = vpack.c.b16 %v4401, %v4399
        %v4524 = vpack.c.b16 %v4402, %v4400
        %v4525 = vpack.c.b16 %v4405, %v4403
        %v4526 = vpack.c.b16 %v4406, %v4404
        %v4527 = vpack.c.b16 %v4409, %v4407
        %v4528 = vpack.c.b16 %v4410, %v4408
        %v4529 = vpack.c.b16 %v4413, %v4411
        %v4530 = vpack.c.b16 %v4414, %v4412
        %v4531 = vpack.c.b16 %v4417, %v4415
        %v4532 = vpack.c.b16 %v4418, %v4416
        %v4533 = vpack.c.b16 %v4421, %v4419
        %v4534 = vpack.c.b16 %v4422, %v4420
        %v4535 = vpack.c.b16 %v4425, %v4423
        %v4536 = vpack.c.b16 %v4426, %v4424
        %v4537 = vpack.c.b16 %v4429, %v4427
        %v4538 = vpack.c.b16 %v4430, %v4428
        %v4539 = vpack.c.b16 %v4433, %v4431
        %v4540 = vpack.c.b16 %v4434, %v4432
        %v4541 = vpack.c.b16 %v4437, %v4435
        %v4542 = vpack.c.b16 %v4438, %v4436
        %v4543 = vpack.c.b16 %v4441, %v4439
        %v4544 = vpack.c.b16 %v4442, %v4440
        %v4545 = vpack.c.b16 %v4445, %v4443
        %v4546 = vpack.c.b16 %v4446, %v4444
        %v4547 = vpack.c.b16 %v4449, %v4447
        %v4548 = vpack.c.b16 %v4450, %v4448
        %v4549 = vpack.c.b16 %v4453, %v4451
        %v4550 = vpack.c.b16 %v4454, %v4452
        %4647 = vmatprep.subr.bf16.mxu0 %v4470
        %4648 = vmatpush1.bf16.msra.mxu0 %v4469
        %4649 = vmatprep.subr.bf16.mxu0 %v4468
        %4650 = vmatpush1.bf16.msra.mxu0 %v4467
        %4651 = vmatprep.subr.bf16.mxu0 %v4466
        %4652 = vmatpush1.bf16.msra.mxu0 %v4465
        %4653 = vmatprep.subr.bf16.mxu0 %v4464
        %4654 = vmatpush1.bf16.msra.mxu0 %v4463
        %4655 = vmatprep.subr.bf16.mxu0 %v4462
        %4656 = vmatpush1.bf16.msra.mxu0 %v4461
        %4657 = vmatprep.subr.bf16.mxu0 %v4460
        %4658 = vmatpush1.bf16.msra.mxu0 %v4459
        %4659 = vmatprep.subr.bf16.mxu0 %v4458
        %4660 = vmatpush1.bf16.msra.mxu0 %v4457
        %4661 = vmatprep.subr.bf16.mxu0 %v4456
        %4662 = vmatpush1.bf16.msra.mxu0 %v4455
        %4663 = vmatprep.subr.bf16.mxu0 %v4486
        %4664 = vmatpush2.bf16.msra.mxu0 %v4485
        %4665 = vmatprep.subr.bf16.mxu0 %v4484
        %4666 = vmatpush2.bf16.msra.mxu0 %v4483
        %4667 = vmatprep.subr.bf16.mxu0 %v4482
        %4668 = vmatpush2.bf16.msra.mxu0 %v4481
        %4669 = vmatprep.subr.bf16.mxu0 %v4480
        %4670 = vmatpush2.bf16.msra.mxu0 %v4479
        %4671 = vmatprep.subr.bf16.mxu0 %v4478
        %4672 = vmatpush2.bf16.msra.mxu0 %v4477
        %4673 = vmatprep.subr.bf16.mxu0 %v4476
        %4674 = vmatpush2.bf16.msra.mxu0 %v4475
        %4675 = vmatprep.subr.bf16.mxu0 %v4474
        %4676 = vmatpush2.bf16.msra.mxu0 %v4473
        %4677 = vmatprep.subr.bf16.mxu0 %v4472
        %4678 = vmatpush2.bf16.msra.mxu0 %v4471
        %4679 = vmatprep.mubr.bf16.mxu0 %v4055
        %4680 = vmatmul.mubr.bf16.gmra.mxu0 %v4054
        %v4681 = vpop.f32.mrf.mxu0
        %v4682 = vadd.f32 %v4160, %v4681
        %v4683 = vpop.f32.mrf.mxu0
        %v4684 = vadd.f32 %v4164, %v4683
        %v4685 = vpop.f32.mrf.mxu0
        %v4686 = vadd.f32 %v4160, %v4685
        %v4687 = vpop.f32.mrf.mxu0
        %v4688 = vadd.f32 %v4164, %v4687
        %4689 = vdwg.mxu0
        %4690 = vmatprep.subr.bf16.mxu0 %v4502
        %4691 = vmatpush1.bf16.msra.mxu0 %v4501
        %4692 = vmatprep.subr.bf16.mxu0 %v4500
        %4693 = vmatpush1.bf16.msra.mxu0 %v4499
        %4694 = vmatprep.subr.bf16.mxu0 %v4498
        %4695 = vmatpush1.bf16.msra.mxu0 %v4497
        %4696 = vmatprep.subr.bf16.mxu0 %v4496
        %4697 = vmatpush1.bf16.msra.mxu0 %v4495
        %4698 = vmatprep.subr.bf16.mxu0 %v4494
        %4699 = vmatpush1.bf16.msra.mxu0 %v4493
        %4700 = vmatprep.subr.bf16.mxu0 %v4492
        %4701 = vmatpush1.bf16.msra.mxu0 %v4491
        %4702 = vmatprep.subr.bf16.mxu0 %v4490
        %4703 = vmatpush1.bf16.msra.mxu0 %v4489
        %4704 = vmatprep.subr.bf16.mxu0 %v4488
        %4705 = vmatpush1.bf16.msra.mxu0 %v4487
        %4706 = vmatprep.subr.bf16.mxu0 %v4518
        %4707 = vmatpush2.bf16.msra.mxu0 %v4517
        %4708 = vmatprep.subr.bf16.mxu0 %v4516
        %4709 = vmatpush2.bf16.msra.mxu0 %v4515
        %4710 = vmatprep.subr.bf16.mxu0 %v4514
        %4711 = vmatpush2.bf16.msra.mxu0 %v4513
        %4712 = vmatprep.subr.bf16.mxu0 %v4512
        %4713 = vmatpush2.bf16.msra.mxu0 %v4511
        %4714 = vmatprep.subr.bf16.mxu0 %v4510
        %4715 = vmatpush2.bf16.msra.mxu0 %v4509
        %4716 = vmatprep.subr.bf16.mxu0 %v4508
        %4717 = vmatpush2.bf16.msra.mxu0 %v4507
        %4718 = vmatprep.subr.bf16.mxu0 %v4506
        %4719 = vmatpush2.bf16.msra.mxu0 %v4505
        %4720 = vmatprep.subr.bf16.mxu0 %v4504
        %4721 = vmatpush2.bf16.msra.mxu0 %v4503
        %4722 = vmatprep.mubr.bf16.mxu0 %v4057
        %4723 = vmatmul.mubr.bf16.gmra.mxu0 %v4056
        %v4724 = vpop.f32.mrf.mxu0
        %v4725 = vadd.f32 %v4682, %v4724
        %v4726 = vpop.f32.mrf.mxu0
        %v4727 = vadd.f32 %v4684, %v4726
        %v4728 = vpop.f32.mrf.mxu0
        %v4729 = vadd.f32 %v4686, %v4728
        %v4730 = vpop.f32.mrf.mxu0
        %v4731 = vadd.f32 %v4688, %v4730
        %4732 = vdwg.mxu0
        %4733 = vmatprep.subr.bf16.mxu0 %v4534
        %4734 = vmatpush1.bf16.msra.mxu0 %v4533
        %4735 = vmatprep.subr.bf16.mxu0 %v4532
        %4736 = vmatpush1.bf16.msra.mxu0 %v4531
        %4737 = vmatprep.subr.bf16.mxu0 %v4530
        %4738 = vmatpush1.bf16.msra.mxu0 %v4529
        %4739 = vmatprep.subr.bf16.mxu0 %v4528
        %4740 = vmatpush1.bf16.msra.mxu0 %v4527
        %4741 = vmatprep.subr.bf16.mxu0 %v4526
        %4742 = vmatpush1.bf16.msra.mxu0 %v4525
        %4743 = vmatprep.subr.bf16.mxu0 %v4524
        %4744 = vmatpush1.bf16.msra.mxu0 %v4523
        %4745 = vmatprep.subr.bf16.mxu0 %v4522
        %4746 = vmatpush1.bf16.msra.mxu0 %v4521
        %4747 = vmatprep.subr.bf16.mxu0 %v4520
        %4748 = vmatpush1.bf16.msra.mxu0 %v4519
        %4749 = vmatprep.subr.bf16.mxu0 %v4550
        %4750 = vmatpush2.bf16.msra.mxu0 %v4549
        %4751 = vmatprep.subr.bf16.mxu0 %v4548
        %4752 = vmatpush2.bf16.msra.mxu0 %v4547
        %4753 = vmatprep.subr.bf16.mxu0 %v4546
        %4754 = vmatpush2.bf16.msra.mxu0 %v4545
        %4755 = vmatprep.subr.bf16.mxu0 %v4544
        %4756 = vmatpush2.bf16.msra.mxu0 %v4543
        %4757 = vmatprep.subr.bf16.mxu0 %v4542
        %4758 = vmatpush2.bf16.msra.mxu0 %v4541
        %4759 = vmatprep.subr.bf16.mxu0 %v4540
        %4760 = vmatpush2.bf16.msra.mxu0 %v4539
        %4761 = vmatprep.subr.bf16.mxu0 %v4538
        %4762 = vmatpush2.bf16.msra.mxu0 %v4537
        %4763 = vmatprep.subr.bf16.mxu0 %v4536
        %4764 = vmatpush2.bf16.msra.mxu0 %v4535
        %4765 = vmatprep.mubr.bf16.mxu0 %v4059
        %4766 = vmatmul.mubr.bf16.gmra.mxu0 %v4058
        %v4767 = vpop.f32.mrf.mxu0
        %v4768 = vadd.f32 %v4725, %v4767
        %v4769 = vpop.f32.mrf.mxu0
        %v4770 = vadd.f32 %v4727, %v4769
        %v4771 = vpop.f32.mrf.mxu0
        %v4772 = vadd.f32 %v4729, %v4771
        %v4773 = vpop.f32.mrf.mxu0
        %v4774 = vadd.f32 %v4731, %v4773
        %4775 = vdwg.mxu0
        %v4776 = vmax.f32 %v4768, 0.0
        %v4777 = vmax.f32 %v4770, 0.0
        %v4778 = vmax.f32 %v4772, 0.0
        %v4779 = vmax.f32 %v4774, 0.0
        %s4780 = scalar_lea.vmem %s8, 6
        %v4781 = vld [vmem:[%s4780] ss:$8 sm:$0x3]
        %v4782 = vrot.slane %v4776, 7
        %v4783 = vrot.slane %v4777, 7
        %v4784 = vrot.slane %v4778, 7
        %v4785 = vrot.slane %v4779, 7
        %v4786 = vsel %vm510, %v4782, %v4784
        %v4787 = vsel %vm510, %v4783, %v4785
        %v4788 = vsel %vm510, %v4784, %v4782
        %v4789 = vsel %vm510, %v4785, %v4783
        %v4790 = vsel %vm3620, 0.0, %v4788
        %v4791 = vsel %vm3620, 0.0, %v4789
        %v4792 = vsel %vm3621, 0.0, %v4786
        %v4793 = vsel %vm3621, 0.0, %v4787
        %v4794 = vrot.slane %v4776, 1
        %v4795 = vrot.slane %v4777, 1
        %v4796 = vrot.slane %v4778, 1
        %v4797 = vrot.slane %v4779, 1
        %v4798 = vsel %vm543, %v4794, %v4796
        %v4799 = vsel %vm543, %v4795, %v4797
        %v4800 = vsel %vm543, %v4796, %v4794
        %v4801 = vsel %vm543, %v4797, %v4795
        %v4802 = vsel %vm3628, 0.0, %v4798
        %v4803 = vsel %vm3628, 0.0, %v4799
        %v4804 = vsel %vm3629, 0.0, %v4800
        %v4805 = vsel %vm3629, 0.0, %v4801
        %v4806 = vpack.c.bf16 %v4792, %v4790
        %v4807 = vpack.c.bf16 %v4793, %v4791
        %v4808 = vpack.c.bf16 %v4778, %v4776
        %v4809 = vpack.c.bf16 %v4779, %v4777
        %v4810 = vpack.c.bf16 %v4804, %v4802
        %v4811 = vpack.c.bf16 %v4805, %v4803
        %v4812 = vld [vmem:[#allocation6] sm:$0xff]
        %v4813 = vld [vmem:[#allocation6 + $0x8] sm:$0xff]
        %v4814 = vld [vmem:[#allocation6 + $0x10] sm:$0xff]
        %v4815 = vld [vmem:[#allocation6 + $0x18] sm:$0xff]
        %v4816 = vld [vmem:[#allocation6 + $0x20] sm:$0xff]
        %v4817 = vld [vmem:[#allocation6 + $0x28] sm:$0xff]
        %v4818 = vld [vmem:[#allocation6 + $0x30] sm:$0xff]
        %v4819 = vld [vmem:[#allocation6 + $0x38] sm:$0xff]
        %v4820 = vld [vmem:[#allocation6 + $0x40] sm:$0xff]
        %v4821 = vld [vmem:[#allocation6 + $0x48] sm:$0xff]
        %v4822 = vld [vmem:[#allocation6 + $0x50] sm:$0xff]
        %v4823 = vld [vmem:[#allocation6 + $0x58] sm:$0xff]
        %v4824 = vld [vmem:[#allocation6 + $0x60] sm:$0xff]
        %v4825 = vld [vmem:[#allocation6 + $0x68] sm:$0xff]
        %v4826 = vld [vmem:[#allocation6 + $0x70] sm:$0xff]
        %v4827 = vld [vmem:[#allocation6 + $0x78] sm:$0xff]
        %v4828 = vld [vmem:[#allocation6 + $0x80] sm:$0xff]
        %v4829 = vld [vmem:[#allocation6 + $0x88] sm:$0xff]
        %v4830 = vld [vmem:[#allocation6 + $0x90] sm:$0xff]
        %v4831 = vld [vmem:[#allocation6 + $0x98] sm:$0xff]
        %v4832 = vld [vmem:[#allocation6 + $0xa0] sm:$0xff]
        %v4833 = vld [vmem:[#allocation6 + $0xa8] sm:$0xff]
        %v4834 = vld [vmem:[#allocation6 + $0xb0] sm:$0xff]
        %v4835 = vld [vmem:[#allocation6 + $0xb8] sm:$0xff]
        %v4836 = vld [vmem:[#allocation6 + $0xc0] sm:$0xff]
        %v4837 = vld [vmem:[#allocation6 + $0xc8] sm:$0xff]
        %v4838 = vld [vmem:[#allocation6 + $0xd0] sm:$0xff]
        %v4839 = vld [vmem:[#allocation6 + $0xd8] sm:$0xff]
        %v4840 = vld [vmem:[#allocation6 + $0xe0] sm:$0xff]
        %v4841 = vld [vmem:[#allocation6 + $0xe8] sm:$0xff]
        %v4842 = vld [vmem:[#allocation6 + $0xf0] sm:$0xff]
        %v4843 = vld [vmem:[#allocation6 + $0xf8] sm:$0xff]
        %v4844 = vld [vmem:[#allocation6 + $0x100] sm:$0xff]
        %v4845 = vld [vmem:[#allocation6 + $0x108] sm:$0xff]
        %v4846 = vld [vmem:[#allocation6 + $0x110] sm:$0xff]
        %v4847 = vld [vmem:[#allocation6 + $0x118] sm:$0xff]
        %v4848 = vld [vmem:[#allocation6 + $0x120] sm:$0xff]
        %v4849 = vld [vmem:[#allocation6 + $0x128] sm:$0xff]
        %v4850 = vld [vmem:[#allocation6 + $0x130] sm:$0xff]
        %v4851 = vld [vmem:[#allocation6 + $0x138] sm:$0xff]
        %v4852 = vld [vmem:[#allocation6 + $0x140] sm:$0xff]
        %v4853 = vld [vmem:[#allocation6 + $0x148] sm:$0xff]
        %v4854 = vld [vmem:[#allocation6 + $0x150] sm:$0xff]
        %v4855 = vld [vmem:[#allocation6 + $0x158] sm:$0xff]
        %v4856 = vld [vmem:[#allocation6 + $0x160] sm:$0xff]
        %v4857 = vld [vmem:[#allocation6 + $0x168] sm:$0xff]
        %v4858 = vld [vmem:[#allocation6 + $0x170] sm:$0xff]
        %v4859 = vld [vmem:[#allocation6 + $0x178] sm:$0xff]
        %v4860 = vld [vmem:[#allocation6 + $0x180] sm:$0xff]
        %v4861 = vld [vmem:[#allocation6 + $0x188] sm:$0xff]
        %v4862 = vld [vmem:[#allocation6 + $0x190] sm:$0xff]
        %v4863 = vld [vmem:[#allocation6 + $0x198] sm:$0xff]
        %v4864 = vld [vmem:[#allocation6 + $0x1a0] sm:$0xff]
        %v4865 = vld [vmem:[#allocation6 + $0x1a8] sm:$0xff]
        %v4866 = vld [vmem:[#allocation6 + $0x1b0] sm:$0xff]
        %v4867 = vld [vmem:[#allocation6 + $0x1b8] sm:$0xff]
        %v4868 = vld [vmem:[#allocation6 + $0x1c0] sm:$0xff]
        %v4869 = vld [vmem:[#allocation6 + $0x1c8] sm:$0xff]
        %v4870 = vld [vmem:[#allocation6 + $0x1d0] sm:$0xff]
        %v4871 = vld [vmem:[#allocation6 + $0x1d8] sm:$0xff]
        %v4872 = vld [vmem:[#allocation6 + $0x1e0] sm:$0xff]
        %v4873 = vld [vmem:[#allocation6 + $0x1e8] sm:$0xff]
        %v4874 = vld [vmem:[#allocation6 + $0x1f0] sm:$0xff]
        %v4875 = vld [vmem:[#allocation6 + $0x1f8] sm:$0xff]
        %v4876 = vld [vmem:[#allocation6 + $0x200] sm:$0xff]
        %v4877 = vld [vmem:[#allocation6 + $0x208] sm:$0xff]
        %v4878 = vld [vmem:[#allocation6 + $0x210] sm:$0xff]
        %v4879 = vld [vmem:[#allocation6 + $0x218] sm:$0xff]
        %v4880 = vld [vmem:[#allocation6 + $0x220] sm:$0xff]
        %v4881 = vld [vmem:[#allocation6 + $0x228] sm:$0xff]
        %v4882 = vld [vmem:[#allocation6 + $0x230] sm:$0xff]
        %v4883 = vld [vmem:[#allocation6 + $0x238] sm:$0xff]
        %v4884 = vld [vmem:[#allocation6 + $0x240] sm:$0xff]
        %v4885 = vld [vmem:[#allocation6 + $0x248] sm:$0xff]
        %v4886 = vld [vmem:[#allocation6 + $0x250] sm:$0xff]
        %v4887 = vld [vmem:[#allocation6 + $0x258] sm:$0xff]
        %v4888 = vld [vmem:[#allocation6 + $0x260] sm:$0xff]
        %v4889 = vld [vmem:[#allocation6 + $0x268] sm:$0xff]
        %v4890 = vld [vmem:[#allocation6 + $0x270] sm:$0xff]
        %v4891 = vld [vmem:[#allocation6 + $0x278] sm:$0xff]
        %v4892 = vld [vmem:[#allocation6 + $0x280] sm:$0xff]
        %v4893 = vld [vmem:[#allocation6 + $0x288] sm:$0xff]
        %v4894 = vld [vmem:[#allocation6 + $0x290] sm:$0xff]
        %v4895 = vld [vmem:[#allocation6 + $0x298] sm:$0xff]
        %v4896 = vld [vmem:[#allocation6 + $0x2a0] sm:$0xff]
        %v4897 = vld [vmem:[#allocation6 + $0x2a8] sm:$0xff]
        %v4898 = vld [vmem:[#allocation6 + $0x2b0] sm:$0xff]
        %v4899 = vld [vmem:[#allocation6 + $0x2b8] sm:$0xff]
        %v4900 = vld [vmem:[#allocation6 + $0x2c0] sm:$0xff]
        %v4901 = vld [vmem:[#allocation6 + $0x2c8] sm:$0xff]
        %v4902 = vld [vmem:[#allocation6 + $0x2d0] sm:$0xff]
        %v4903 = vld [vmem:[#allocation6 + $0x2d8] sm:$0xff]
        %v4904 = vld [vmem:[#allocation6 + $0x2e0] sm:$0xff]
        %v4905 = vld [vmem:[#allocation6 + $0x2e8] sm:$0xff]
        %v4906 = vld [vmem:[#allocation6 + $0x2f0] sm:$0xff]
        %v4907 = vld [vmem:[#allocation6 + $0x2f8] sm:$0xff]
        %v4909 = vlaneseq
        %v4910 = vshrl.u32 %v4909, 7
        %v4911 = vsub.s32 0, %v4910
        %v4912 = vrot.slane %v4781, %v4911
        %v4913 = vlaneseq
        %v4914 = vshrl.u32 %v4913, 7
        %v4915 = vsub.s32 1, %v4914
        %v4916 = vrot.slane %v4781, %v4915
        %v5015 = vunpack.c.l.b16 %v4812
        %v5016 = vunpack.c.h.b16 %v4812
        %v5017 = vunpack.c.l.b16 %v4813
        %v5018 = vunpack.c.h.b16 %v4813
        %v5019 = vunpack.c.l.b16 %v4814
        %v5020 = vunpack.c.h.b16 %v4814
        %v5021 = vunpack.c.l.b16 %v4815
        %v5022 = vunpack.c.h.b16 %v4815
        %v5023 = vunpack.c.l.b16 %v4816
        %v5024 = vunpack.c.h.b16 %v4816
        %v5025 = vunpack.c.l.b16 %v4817
        %v5026 = vunpack.c.h.b16 %v4817
        %v5027 = vunpack.c.l.b16 %v4818
        %v5028 = vunpack.c.h.b16 %v4818
        %v5029 = vunpack.c.l.b16 %v4819
        %v5030 = vunpack.c.h.b16 %v4819
        %v5031 = vunpack.c.l.b16 %v4820
        %v5032 = vunpack.c.h.b16 %v4820
        %v5033 = vunpack.c.l.b16 %v4821
        %v5034 = vunpack.c.h.b16 %v4821
        %v5035 = vunpack.c.l.b16 %v4822
        %v5036 = vunpack.c.h.b16 %v4822
        %v5037 = vunpack.c.l.b16 %v4823
        %v5038 = vunpack.c.h.b16 %v4823
        %v5039 = vunpack.c.l.b16 %v4824
        %v5040 = vunpack.c.h.b16 %v4824
        %v5041 = vunpack.c.l.b16 %v4825
        %v5042 = vunpack.c.h.b16 %v4825
        %v5043 = vunpack.c.l.b16 %v4826
        %v5044 = vunpack.c.h.b16 %v4826
        %v5045 = vunpack.c.l.b16 %v4827
        %v5046 = vunpack.c.h.b16 %v4827
        %v5047 = vunpack.c.l.b16 %v4828
        %v5048 = vunpack.c.h.b16 %v4828
        %v5049 = vunpack.c.l.b16 %v4829
        %v5050 = vunpack.c.h.b16 %v4829
        %v5051 = vunpack.c.l.b16 %v4830
        %v5052 = vunpack.c.h.b16 %v4830
        %v5053 = vunpack.c.l.b16 %v4831
        %v5054 = vunpack.c.h.b16 %v4831
        %v5055 = vunpack.c.l.b16 %v4832
        %v5056 = vunpack.c.h.b16 %v4832
        %v5057 = vunpack.c.l.b16 %v4833
        %v5058 = vunpack.c.h.b16 %v4833
        %v5059 = vunpack.c.l.b16 %v4834
        %v5060 = vunpack.c.h.b16 %v4834
        %v5061 = vunpack.c.l.b16 %v4835
        %v5062 = vunpack.c.h.b16 %v4835
        %v5063 = vunpack.c.l.b16 %v4836
        %v5064 = vunpack.c.h.b16 %v4836
        %v5065 = vunpack.c.l.b16 %v4837
        %v5066 = vunpack.c.h.b16 %v4837
        %v5067 = vunpack.c.l.b16 %v4838
        %v5068 = vunpack.c.h.b16 %v4838
        %v5069 = vunpack.c.l.b16 %v4839
        %v5070 = vunpack.c.h.b16 %v4839
        %v5071 = vunpack.c.l.b16 %v4840
        %v5072 = vunpack.c.h.b16 %v4840
        %v5073 = vunpack.c.l.b16 %v4841
        %v5074 = vunpack.c.h.b16 %v4841
        %v5075 = vunpack.c.l.b16 %v4842
        %v5076 = vunpack.c.h.b16 %v4842
        %v5077 = vunpack.c.l.b16 %v4843
        %v5078 = vunpack.c.h.b16 %v4843
        %v5079 = vunpack.c.l.b16 %v4844
        %v5080 = vunpack.c.h.b16 %v4844
        %v5081 = vunpack.c.l.b16 %v4845
        %v5082 = vunpack.c.h.b16 %v4845
        %v5083 = vunpack.c.l.b16 %v4846
        %v5084 = vunpack.c.h.b16 %v4846
        %v5085 = vunpack.c.l.b16 %v4847
        %v5086 = vunpack.c.h.b16 %v4847
        %v5087 = vunpack.c.l.b16 %v4848
        %v5088 = vunpack.c.h.b16 %v4848
        %v5089 = vunpack.c.l.b16 %v4849
        %v5090 = vunpack.c.h.b16 %v4849
        %v5091 = vunpack.c.l.b16 %v4850
        %v5092 = vunpack.c.h.b16 %v4850
        %v5093 = vunpack.c.l.b16 %v4851
        %v5094 = vunpack.c.h.b16 %v4851
        %v5095 = vunpack.c.l.b16 %v4852
        %v5096 = vunpack.c.h.b16 %v4852
        %v5097 = vunpack.c.l.b16 %v4853
        %v5098 = vunpack.c.h.b16 %v4853
        %v5099 = vunpack.c.l.b16 %v4854
        %v5100 = vunpack.c.h.b16 %v4854
        %v5101 = vunpack.c.l.b16 %v4855
        %v5102 = vunpack.c.h.b16 %v4855
        %v5103 = vunpack.c.l.b16 %v4856
        %v5104 = vunpack.c.h.b16 %v4856
        %v5105 = vunpack.c.l.b16 %v4857
        %v5106 = vunpack.c.h.b16 %v4857
        %v5107 = vunpack.c.l.b16 %v4858
        %v5108 = vunpack.c.h.b16 %v4858
        %v5109 = vunpack.c.l.b16 %v4859
        %v5110 = vunpack.c.h.b16 %v4859
        %v5111 = vunpack.c.l.b16 %v4860
        %v5112 = vunpack.c.h.b16 %v4860
        %v5113 = vunpack.c.l.b16 %v4861
        %v5114 = vunpack.c.h.b16 %v4861
        %v5115 = vunpack.c.l.b16 %v4862
        %v5116 = vunpack.c.h.b16 %v4862
        %v5117 = vunpack.c.l.b16 %v4863
        %v5118 = vunpack.c.h.b16 %v4863
        %v5119 = vunpack.c.l.b16 %v4864
        %v5120 = vunpack.c.h.b16 %v4864
        %v5121 = vunpack.c.l.b16 %v4865
        %v5122 = vunpack.c.h.b16 %v4865
        %v5123 = vunpack.c.l.b16 %v4866
        %v5124 = vunpack.c.h.b16 %v4866
        %v5125 = vunpack.c.l.b16 %v4867
        %v5126 = vunpack.c.h.b16 %v4867
        %v5127 = vunpack.c.l.b16 %v4868
        %v5128 = vunpack.c.h.b16 %v4868
        %v5129 = vunpack.c.l.b16 %v4869
        %v5130 = vunpack.c.h.b16 %v4869
        %v5131 = vunpack.c.l.b16 %v4870
        %v5132 = vunpack.c.h.b16 %v4870
        %v5133 = vunpack.c.l.b16 %v4871
        %v5134 = vunpack.c.h.b16 %v4871
        %v5135 = vunpack.c.l.b16 %v4872
        %v5136 = vunpack.c.h.b16 %v4872
        %v5137 = vunpack.c.l.b16 %v4873
        %v5138 = vunpack.c.h.b16 %v4873
        %v5139 = vunpack.c.l.b16 %v4874
        %v5140 = vunpack.c.h.b16 %v4874
        %v5141 = vunpack.c.l.b16 %v4875
        %v5142 = vunpack.c.h.b16 %v4875
        %v5143 = vunpack.c.l.b16 %v4876
        %v5144 = vunpack.c.h.b16 %v4876
        %v5145 = vunpack.c.l.b16 %v4877
        %v5146 = vunpack.c.h.b16 %v4877
        %v5147 = vunpack.c.l.b16 %v4878
        %v5148 = vunpack.c.h.b16 %v4878
        %v5149 = vunpack.c.l.b16 %v4879
        %v5150 = vunpack.c.h.b16 %v4879
        %v5151 = vunpack.c.l.b16 %v4880
        %v5152 = vunpack.c.h.b16 %v4880
        %v5153 = vunpack.c.l.b16 %v4881
        %v5154 = vunpack.c.h.b16 %v4881
        %v5155 = vunpack.c.l.b16 %v4882
        %v5156 = vunpack.c.h.b16 %v4882
        %v5157 = vunpack.c.l.b16 %v4883
        %v5158 = vunpack.c.h.b16 %v4883
        %v5159 = vunpack.c.l.b16 %v4884
        %v5160 = vunpack.c.h.b16 %v4884
        %v5161 = vunpack.c.l.b16 %v4885
        %v5162 = vunpack.c.h.b16 %v4885
        %v5163 = vunpack.c.l.b16 %v4886
        %v5164 = vunpack.c.h.b16 %v4886
        %v5165 = vunpack.c.l.b16 %v4887
        %v5166 = vunpack.c.h.b16 %v4887
        %v5167 = vunpack.c.l.b16 %v4888
        %v5168 = vunpack.c.h.b16 %v4888
        %v5169 = vunpack.c.l.b16 %v4889
        %v5170 = vunpack.c.h.b16 %v4889
        %v5171 = vunpack.c.l.b16 %v4890
        %v5172 = vunpack.c.h.b16 %v4890
        %v5173 = vunpack.c.l.b16 %v4891
        %v5174 = vunpack.c.h.b16 %v4891
        %v5175 = vunpack.c.l.b16 %v4892
        %v5176 = vunpack.c.h.b16 %v4892
        %v5177 = vunpack.c.l.b16 %v4893
        %v5178 = vunpack.c.h.b16 %v4893
        %v5179 = vunpack.c.l.b16 %v4894
        %v5180 = vunpack.c.h.b16 %v4894
        %v5181 = vunpack.c.l.b16 %v4895
        %v5182 = vunpack.c.h.b16 %v4895
        %v5183 = vunpack.c.l.b16 %v4896
        %v5184 = vunpack.c.h.b16 %v4896
        %v5185 = vunpack.c.l.b16 %v4897
        %v5186 = vunpack.c.h.b16 %v4897
        %v5187 = vunpack.c.l.b16 %v4898
        %v5188 = vunpack.c.h.b16 %v4898
        %v5189 = vunpack.c.l.b16 %v4899
        %v5190 = vunpack.c.h.b16 %v4899
        %v5191 = vunpack.c.l.b16 %v4900
        %v5192 = vunpack.c.h.b16 %v4900
        %v5193 = vunpack.c.l.b16 %v4901
        %v5194 = vunpack.c.h.b16 %v4901
        %v5195 = vunpack.c.l.b16 %v4902
        %v5196 = vunpack.c.h.b16 %v4902
        %v5197 = vunpack.c.l.b16 %v4903
        %v5198 = vunpack.c.h.b16 %v4903
        %v5199 = vunpack.c.l.b16 %v4904
        %v5200 = vunpack.c.h.b16 %v4904
        %v5201 = vunpack.c.l.b16 %v4905
        %v5202 = vunpack.c.h.b16 %v4905
        %v5203 = vunpack.c.l.b16 %v4906
        %v5204 = vunpack.c.h.b16 %v4906
        %v5205 = vunpack.c.l.b16 %v4907
        %v5206 = vunpack.c.h.b16 %v4907
        %v5207 = vpack.c.b16 %v5017, %v5015
        %v5208 = vpack.c.b16 %v5018, %v5016
        %v5209 = vpack.c.b16 %v5021, %v5019
        %v5210 = vpack.c.b16 %v5022, %v5020
        %v5211 = vpack.c.b16 %v5025, %v5023
        %v5212 = vpack.c.b16 %v5026, %v5024
        %v5213 = vpack.c.b16 %v5029, %v5027
        %v5214 = vpack.c.b16 %v5030, %v5028
        %v5215 = vpack.c.b16 %v5033, %v5031
        %v5216 = vpack.c.b16 %v5034, %v5032
        %v5217 = vpack.c.b16 %v5037, %v5035
        %v5218 = vpack.c.b16 %v5038, %v5036
        %v5219 = vpack.c.b16 %v5041, %v5039
        %v5220 = vpack.c.b16 %v5042, %v5040
        %v5221 = vpack.c.b16 %v5045, %v5043
        %v5222 = vpack.c.b16 %v5046, %v5044
        %v5223 = vpack.c.b16 %v5049, %v5047
        %v5224 = vpack.c.b16 %v5050, %v5048
        %v5225 = vpack.c.b16 %v5053, %v5051
        %v5226 = vpack.c.b16 %v5054, %v5052
        %v5227 = vpack.c.b16 %v5057, %v5055
        %v5228 = vpack.c.b16 %v5058, %v5056
        %v5229 = vpack.c.b16 %v5061, %v5059
        %v5230 = vpack.c.b16 %v5062, %v5060
        %v5231 = vpack.c.b16 %v5065, %v5063
        %v5232 = vpack.c.b16 %v5066, %v5064
        %v5233 = vpack.c.b16 %v5069, %v5067
        %v5234 = vpack.c.b16 %v5070, %v5068
        %v5235 = vpack.c.b16 %v5073, %v5071
        %v5236 = vpack.c.b16 %v5074, %v5072
        %v5237 = vpack.c.b16 %v5077, %v5075
        %v5238 = vpack.c.b16 %v5078, %v5076
        %v5239 = vpack.c.b16 %v5081, %v5079
        %v5240 = vpack.c.b16 %v5082, %v5080
        %v5241 = vpack.c.b16 %v5085, %v5083
        %v5242 = vpack.c.b16 %v5086, %v5084
        %v5243 = vpack.c.b16 %v5089, %v5087
        %v5244 = vpack.c.b16 %v5090, %v5088
        %v5245 = vpack.c.b16 %v5093, %v5091
        %v5246 = vpack.c.b16 %v5094, %v5092
        %v5247 = vpack.c.b16 %v5097, %v5095
        %v5248 = vpack.c.b16 %v5098, %v5096
        %v5249 = vpack.c.b16 %v5101, %v5099
        %v5250 = vpack.c.b16 %v5102, %v5100
        %v5251 = vpack.c.b16 %v5105, %v5103
        %v5252 = vpack.c.b16 %v5106, %v5104
        %v5253 = vpack.c.b16 %v5109, %v5107
        %v5254 = vpack.c.b16 %v5110, %v5108
        %v5255 = vpack.c.b16 %v5113, %v5111
        %v5256 = vpack.c.b16 %v5114, %v5112
        %v5257 = vpack.c.b16 %v5117, %v5115
        %v5258 = vpack.c.b16 %v5118, %v5116
        %v5259 = vpack.c.b16 %v5121, %v5119
        %v5260 = vpack.c.b16 %v5122, %v5120
        %v5261 = vpack.c.b16 %v5125, %v5123
        %v5262 = vpack.c.b16 %v5126, %v5124
        %v5263 = vpack.c.b16 %v5129, %v5127
        %v5264 = vpack.c.b16 %v5130, %v5128
        %v5265 = vpack.c.b16 %v5133, %v5131
        %v5266 = vpack.c.b16 %v5134, %v5132
        %v5267 = vpack.c.b16 %v5137, %v5135
        %v5268 = vpack.c.b16 %v5138, %v5136
        %v5269 = vpack.c.b16 %v5141, %v5139
        %v5270 = vpack.c.b16 %v5142, %v5140
        %v5271 = vpack.c.b16 %v5145, %v5143
        %v5272 = vpack.c.b16 %v5146, %v5144
        %v5273 = vpack.c.b16 %v5149, %v5147
        %v5274 = vpack.c.b16 %v5150, %v5148
        %v5275 = vpack.c.b16 %v5153, %v5151
        %v5276 = vpack.c.b16 %v5154, %v5152
        %v5277 = vpack.c.b16 %v5157, %v5155
        %v5278 = vpack.c.b16 %v5158, %v5156
        %v5279 = vpack.c.b16 %v5161, %v5159
        %v5280 = vpack.c.b16 %v5162, %v5160
        %v5281 = vpack.c.b16 %v5165, %v5163
        %v5282 = vpack.c.b16 %v5166, %v5164
        %v5283 = vpack.c.b16 %v5169, %v5167
        %v5284 = vpack.c.b16 %v5170, %v5168
        %v5285 = vpack.c.b16 %v5173, %v5171
        %v5286 = vpack.c.b16 %v5174, %v5172
        %v5287 = vpack.c.b16 %v5177, %v5175
        %v5288 = vpack.c.b16 %v5178, %v5176
        %v5289 = vpack.c.b16 %v5181, %v5179
        %v5290 = vpack.c.b16 %v5182, %v5180
        %v5291 = vpack.c.b16 %v5185, %v5183
        %v5292 = vpack.c.b16 %v5186, %v5184
        %v5293 = vpack.c.b16 %v5189, %v5187
        %v5294 = vpack.c.b16 %v5190, %v5188
        %v5295 = vpack.c.b16 %v5193, %v5191
        %v5296 = vpack.c.b16 %v5194, %v5192
        %v5297 = vpack.c.b16 %v5197, %v5195
        %v5298 = vpack.c.b16 %v5198, %v5196
        %v5299 = vpack.c.b16 %v5201, %v5199
        %v5300 = vpack.c.b16 %v5202, %v5200
        %v5301 = vpack.c.b16 %v5205, %v5203
        %v5302 = vpack.c.b16 %v5206, %v5204
        %5399 = vmatprep.subr.bf16.mxu0 %v5222
        %5400 = vmatpush1.bf16.msra.mxu0 %v5221
        %5401 = vmatprep.subr.bf16.mxu0 %v5220
        %5402 = vmatpush1.bf16.msra.mxu0 %v5219
        %5403 = vmatprep.subr.bf16.mxu0 %v5218
        %5404 = vmatpush1.bf16.msra.mxu0 %v5217
        %5405 = vmatprep.subr.bf16.mxu0 %v5216
        %5406 = vmatpush1.bf16.msra.mxu0 %v5215
        %5407 = vmatprep.subr.bf16.mxu0 %v5214
        %5408 = vmatpush1.bf16.msra.mxu0 %v5213
        %5409 = vmatprep.subr.bf16.mxu0 %v5212
        %5410 = vmatpush1.bf16.msra.mxu0 %v5211
        %5411 = vmatprep.subr.bf16.mxu0 %v5210
        %5412 = vmatpush1.bf16.msra.mxu0 %v5209
        %5413 = vmatprep.subr.bf16.mxu0 %v5208
        %5414 = vmatpush1.bf16.msra.mxu0 %v5207
        %5415 = vmatprep.subr.bf16.mxu0 %v5238
        %5416 = vmatpush2.bf16.msra.mxu0 %v5237
        %5417 = vmatprep.subr.bf16.mxu0 %v5236
        %5418 = vmatpush2.bf16.msra.mxu0 %v5235
        %5419 = vmatprep.subr.bf16.mxu0 %v5234
        %5420 = vmatpush2.bf16.msra.mxu0 %v5233
        %5421 = vmatprep.subr.bf16.mxu0 %v5232
        %5422 = vmatpush2.bf16.msra.mxu0 %v5231
        %5423 = vmatprep.subr.bf16.mxu0 %v5230
        %5424 = vmatpush2.bf16.msra.mxu0 %v5229
        %5425 = vmatprep.subr.bf16.mxu0 %v5228
        %5426 = vmatpush2.bf16.msra.mxu0 %v5227
        %5427 = vmatprep.subr.bf16.mxu0 %v5226
        %5428 = vmatpush2.bf16.msra.mxu0 %v5225
        %5429 = vmatprep.subr.bf16.mxu0 %v5224
        %5430 = vmatpush2.bf16.msra.mxu0 %v5223
        %5431 = vmatprep.mubr.bf16.mxu0 %v4807
        %5432 = vmatmul.mubr.bf16.gmra.mxu0 %v4806
        %v5433 = vpop.f32.mrf.mxu0
        %v5434 = vadd.f32 %v4912, %v5433
        %v5435 = vpop.f32.mrf.mxu0
        %v5436 = vadd.f32 %v4916, %v5435
        %v5437 = vpop.f32.mrf.mxu0
        %v5438 = vadd.f32 %v4912, %v5437
        %v5439 = vpop.f32.mrf.mxu0
        %v5440 = vadd.f32 %v4916, %v5439
        %5441 = vdwg.mxu0
        %5442 = vmatprep.subr.bf16.mxu0 %v5254
        %5443 = vmatpush1.bf16.msra.mxu0 %v5253
        %5444 = vmatprep.subr.bf16.mxu0 %v5252
        %5445 = vmatpush1.bf16.msra.mxu0 %v5251
        %5446 = vmatprep.subr.bf16.mxu0 %v5250
        %5447 = vmatpush1.bf16.msra.mxu0 %v5249
        %5448 = vmatprep.subr.bf16.mxu0 %v5248
        %5449 = vmatpush1.bf16.msra.mxu0 %v5247
        %5450 = vmatprep.subr.bf16.mxu0 %v5246
        %5451 = vmatpush1.bf16.msra.mxu0 %v5245
        %5452 = vmatprep.subr.bf16.mxu0 %v5244
        %5453 = vmatpush1.bf16.msra.mxu0 %v5243
        %5454 = vmatprep.subr.bf16.mxu0 %v5242
        %5455 = vmatpush1.bf16.msra.mxu0 %v5241
        %5456 = vmatprep.subr.bf16.mxu0 %v5240
        %5457 = vmatpush1.bf16.msra.mxu0 %v5239
        %5458 = vmatprep.subr.bf16.mxu0 %v5270
        %5459 = vmatpush2.bf16.msra.mxu0 %v5269
        %5460 = vmatprep.subr.bf16.mxu0 %v5268
        %5461 = vmatpush2.bf16.msra.mxu0 %v5267
        %5462 = vmatprep.subr.bf16.mxu0 %v5266
        %5463 = vmatpush2.bf16.msra.mxu0 %v5265
        %5464 = vmatprep.subr.bf16.mxu0 %v5264
        %5465 = vmatpush2.bf16.msra.mxu0 %v5263
        %5466 = vmatprep.subr.bf16.mxu0 %v5262
        %5467 = vmatpush2.bf16.msra.mxu0 %v5261
        %5468 = vmatprep.subr.bf16.mxu0 %v5260
        %5469 = vmatpush2.bf16.msra.mxu0 %v5259
        %5470 = vmatprep.subr.bf16.mxu0 %v5258
        %5471 = vmatpush2.bf16.msra.mxu0 %v5257
        %5472 = vmatprep.subr.bf16.mxu0 %v5256
        %5473 = vmatpush2.bf16.msra.mxu0 %v5255
        %5474 = vmatprep.mubr.bf16.mxu0 %v4809
        %5475 = vmatmul.mubr.bf16.gmra.mxu0 %v4808
        %v5476 = vpop.f32.mrf.mxu0
        %v5477 = vadd.f32 %v5434, %v5476
        %v5478 = vpop.f32.mrf.mxu0
        %v5479 = vadd.f32 %v5436, %v5478
        %v5480 = vpop.f32.mrf.mxu0
        %v5481 = vadd.f32 %v5438, %v5480
        %v5482 = vpop.f32.mrf.mxu0
        %v5483 = vadd.f32 %v5440, %v5482
        %5484 = vdwg.mxu0
        %5485 = vmatprep.subr.bf16.mxu0 %v5286
        %5486 = vmatpush1.bf16.msra.mxu0 %v5285
        %5487 = vmatprep.subr.bf16.mxu0 %v5284
        %5488 = vmatpush1.bf16.msra.mxu0 %v5283
        %5489 = vmatprep.subr.bf16.mxu0 %v5282
        %5490 = vmatpush1.bf16.msra.mxu0 %v5281
        %5491 = vmatprep.subr.bf16.mxu0 %v5280
        %5492 = vmatpush1.bf16.msra.mxu0 %v5279
        %5493 = vmatprep.subr.bf16.mxu0 %v5278
        %5494 = vmatpush1.bf16.msra.mxu0 %v5277
        %5495 = vmatprep.subr.bf16.mxu0 %v5276
        %5496 = vmatpush1.bf16.msra.mxu0 %v5275
        %5497 = vmatprep.subr.bf16.mxu0 %v5274
        %5498 = vmatpush1.bf16.msra.mxu0 %v5273
        %5499 = vmatprep.subr.bf16.mxu0 %v5272
        %5500 = vmatpush1.bf16.msra.mxu0 %v5271
        %5501 = vmatprep.subr.bf16.mxu0 %v5302
        %5502 = vmatpush2.bf16.msra.mxu0 %v5301
        %5503 = vmatprep.subr.bf16.mxu0 %v5300
        %5504 = vmatpush2.bf16.msra.mxu0 %v5299
        %5505 = vmatprep.subr.bf16.mxu0 %v5298
        %5506 = vmatpush2.bf16.msra.mxu0 %v5297
        %5507 = vmatprep.subr.bf16.mxu0 %v5296
        %5508 = vmatpush2.bf16.msra.mxu0 %v5295
        %5509 = vmatprep.subr.bf16.mxu0 %v5294
        %5510 = vmatpush2.bf16.msra.mxu0 %v5293
        %5511 = vmatprep.subr.bf16.mxu0 %v5292
        %5512 = vmatpush2.bf16.msra.mxu0 %v5291
        %5513 = vmatprep.subr.bf16.mxu0 %v5290
        %5514 = vmatpush2.bf16.msra.mxu0 %v5289
        %5515 = vmatprep.subr.bf16.mxu0 %v5288
        %5516 = vmatpush2.bf16.msra.mxu0 %v5287
        %5517 = vmatprep.mubr.bf16.mxu0 %v4811
        %5518 = vmatmul.mubr.bf16.gmra.mxu0 %v4810
        %v5519 = vpop.f32.mrf.mxu0
        %v5520 = vadd.f32 %v5477, %v5519
        %v5521 = vpop.f32.mrf.mxu0
        %v5522 = vadd.f32 %v5479, %v5521
        %v5523 = vpop.f32.mrf.mxu0
        %v5524 = vadd.f32 %v5481, %v5523
        %v5525 = vpop.f32.mrf.mxu0
        %v5526 = vadd.f32 %v5483, %v5525
        %5527 = vdwg.mxu0
        %v5528 = vmax.f32 %v5520, 0.0
        %v5529 = vmax.f32 %v5522, 0.0
        %v5530 = vmax.f32 %v5524, 0.0
        %v5531 = vmax.f32 %v5526, 0.0
        %v5532 = vsub.f32 %v5528, %v5530
        %v5533 = vsub.f32 %v5529, %v5531
        %v5534 = vmul.f32 %v5532, %v5532
        %v5535 = vmul.f32 %v5533, %v5533
        %v5536 = vrot.slane %v5534, 4
        %v5537 = vadd.f32 %v5534, %v5536
        %v5538 = vrot.slane %v5537, 2
        %v5539 = vadd.f32 %v5537, %v5538
        %v5540 = vrot.slane %v5539, 1
        %v5541 = vadd.f32 %v5539, %v5540
        %v5542 = vrot.slane %v5535, 4
        %v5543 = vadd.f32 %v5535, %v5542
        %v5544 = vrot.slane %v5543, 2
        %v5545 = vadd.f32 %v5543, %v5544
        %v5546 = vrot.slane %v5545, 1
        %v5547 = vadd.f32 %v5545, %v5546
        %vm5548 = vcmask 1040384
        %v5549 = vsel %vm5548, %v2001, %v3490
        %v5550 = vsel %vm5548, %v2010, %v3497
        %vm5551 = vcmask 1041408
        %v5552 = vsel %vm5551, %v5549, %v5541
        %v5553 = vsel %vm5551, %v5550, %v5547
        %v5556 = vcombine.low %v5552, %v5553
        %5558 = vst [vmem:[%s378] sm:$0x77] %v5556
        %p5559 = scmp.lt.s32.totalorder %s22, 1
        %s5560 = scalar_select %p5559, %s22, 1
        %s5561 = smul.addr %s5560, 2
        %s5562 = smul.addr %s5561, 4
        %s5563 = scalar_lea.vmem %s9, %s5562
        // Predicated region
        $region69: #{vgg_loss.1} parent=55 // pred_check
          %p5564 = pneg %p234
        $region70: #{vgg_loss.1} parent=55 // pred_check_branch
          %5566 = sbr.rel (%p5564) target = $region72
        $region71: #{vgg_loss.1} parent=55 // pred_region
          _
        $region72: #{vgg_loss.1} parent=55 // pred_fallthru
          _
      $region56: #{vgg_loss.1} parent=5 // pred_fallthru
        _
      %p5567 = scmp.le.s32.totalorder 2, %s17
      // Predicated region
      $region73: #{vgg_loss.1} parent=5 // pred_check
        %p5568 = pneg %p5567
      $region74: #{vgg_loss.1} parent=5 // pred_check_branch
        %5570 = sbr.rel (%p5568) target = $region76
      $region75: #{vgg_loss.1} parent=5 // pred_region
        %s5571 = ssub.s32 %s17, 2
        // Predicated region
        $region77: #{vgg_loss.1} parent=75 // pred_check
          %p5572 = pneg %p240
        $region78: #{vgg_loss.1} parent=75 // pred_check_branch
          %5574 = sbr.rel (%p5572) target = $region80
        $region79: #{vgg_loss.1} parent=75 // pred_region
          %p5575 = scmp.lt.s32.totalorder %s23, 1
          %s5576 = scalar_select %p5575, %s23, 1
          %s5577 = smul.addr %s5576, 2
          %s5578 = smul.addr %s5577, 4
          %s5579 = scalar_lea.vmem %s9, %s5578
        $region80: #{vgg_loss.1} parent=75 // pred_fallthru
          _
      $region76: #{vgg_loss.1} parent=5 // pred_fallthru
        _
    $region6: #{vgg_loss.1} parent=1 // loop_footer
      %s21 = sadd.s32 1, %s17
    $region7: #{vgg_loss.1} parent=1 // loop_footer_branch
      %16 = sbr.rel target = $region3
    $region8: #{vgg_loss.1} parent=1 // loop_exit
      _
    %5580 = vsyncpa [#allocation3], 1
    %s5581 = scalar_lea.sflag [#allocation3], 1
    %5582 = vsyncpa %s5581, 1
    %5583 = vsyncpa [#allocation5], 1

</llo_original>
